<compile_context>
chip_gen: v7x
topology: tpu7x:2x2x1
jax: 0.10.0
libtpu: 0.0.40
codegen_flags: <defaults>
</compile_context>

<pallas_src>
import math

import jax
import jax.numpy as jnp
from jax import lax
from jax.experimental import pallas as pl
from jax.experimental.pallas import tpu as pltpu

# ----------------------------- config ---------------------------------------
VOCAB = 32
MAX_LEN = 8
NUM_TASK = 1          # -> one property token is prepended, then sliced off the logits
NUM_LAYER = 2
NUM_HEAD = 4
HIDDEN = 32
HEAD_DIM = HIDDEN // NUM_HEAD
LN_EPS = 1e-5
PROP_PAD = 8          # pad num_task contraction dim so the fused embed matmul is aligned
MASK_NEG = -1e30      # finite "minus infinity" for the additive attention mask

assert VOCAB == HIDDEN  # required by the emb/head packing below (true for this config)

_INV_SQRT2 = 0.7071067811865476


def _erf_approx(x):
    # Abramowitz & Stegun 7.1.26 rational approximation of erf (|err| ~ 1.5e-7),
    # reproduces exact (erf-based) nn.GELU semantics without an erf lowering.
    a1, a2, a3, a4, a5 = 0.254829592, -0.284496736, 1.421413741, -1.453152027, 1.061405429
    p = 0.3275911
    sgn = jnp.where(x >= 0, 1.0, -1.0).astype(x.dtype)
    ax = jnp.abs(x)
    t = 1.0 / (1.0 + p * ax)
    poly = ((((a5 * t + a4) * t + a3) * t + a2) * t + a1) * t
    y = 1.0 - poly * jnp.exp(-ax * ax)
    return sgn * y


def _gelu(x):
    return 0.5 * x * (1.0 + _erf_approx(x * _INV_SQRT2))


def _layernorm(x, w, b):
    mu = jnp.mean(x, axis=-1, keepdims=True)
    var = jnp.mean((x - mu) ** 2, axis=-1, keepdims=True)
    return (x - mu) * lax.rsqrt(var + LN_EPS) * w + b


# ------------------------------ fused forward --------------------------------
@jax.jit
def gpt_forward(params, idx, prop):
    """Pallas-backed forward: returns (logits [B, t, vocab], list of attn maps)."""
    B, t = idx.shape
    assert t <= MAX_LEN
    T = t + 1                              # +1 prepended property token
    T_pad = ((T + 7) // 8) * 8             # sublane-aligned per-batch block (16 for T=9)
    BT = B * T_pad
    HBT = NUM_HEAD * BT
    C = HIDDEN
    scale = 1.0 / math.sqrt(HEAD_DIM)

    # ---- wrapper-side constant / parameter packing (plain XLA glue) ----------
    # Fused-embedding input: one-hot token rows + prop values, padded rows zero.
    onehot = jax.nn.one_hot(idx, VOCAB, dtype=jnp.float32)                     # (B, t, VOCAB)
    IN = jnp.zeros((B, T_pad, VOCAB + PROP_PAD), jnp.float32)
    IN = IN.at[:, 1:1 + t, :VOCAB].set(onehot)
    IN = IN.at[:, 0, VOCAB:VOCAB + NUM_TASK].set(prop.astype(jnp.float32))
    IN = IN.reshape(BT, VOCAB + PROP_PAD)

    # Additive table: row 0 = type_emb[0] + prop bias, rows 1..t = pos + type_emb[1].
    add = jnp.zeros((B, T_pad, C), jnp.float32)
    add = add.at[:, 0, :].set(params['type_emb'][0] + params['prop_b'].reshape(-1))
    add = add.at[:, 1:1 + t, :].set(params['pos_emb'][0, :t, :]
                                    + params['type_emb'][1][None, :])
    ADD = add.reshape(BT, C)

    prop_w_pad = jnp.zeros((PROP_PAD, C), jnp.float32).at[:NUM_TASK, :].set(params['prop_w'])
    EMB = jnp.concatenate([params['tok_emb'], prop_w_pad], axis=0)             # (VOCAB+PROP_PAD, C)

    misc = jnp.concatenate([params['head_w'],
                            params['lnf_w'].reshape(1, C),
                            params['lnf_b'].reshape(1, C)], axis=0)            # (C+2, C)

    # Causal + per-batch block-diagonal additive mask, tiled per head.
    rows = jnp.arange(BT)
    allow = (rows[None, :] <= rows[:, None]) & ((rows[:, None] // T_pad) == (rows[None, :] // T_pad))
    mask_bias = jnp.where(allow, 0.0, MASK_NEG).astype(jnp.float32)            # (BT, BT)
    mask_tiled = jnp.tile(mask_bias, (1, NUM_HEAD))                            # (BT, HBT)

    # Head-block-diagonal selection mask and per-head segment-sum matrix.
    row_h = jnp.arange(HBT) // BT                                              # head of each k/v row
    ch_h = jnp.arange(C) // HEAD_DIM                                           # head of each channel
    vsel = (row_h[:, None] == ch_h[None, :]).astype(jnp.float32)               # (HBT, C)
    segsum = (row_h[:, None] == row_h[None, :]).astype(jnp.float32)            # (HBT, HBT)

    def pad_row(v, width):
        v = jnp.asarray(v, jnp.float32).reshape(-1)
        return jnp.pad(v, (0, width - v.shape[0]))[None, :]

    wmat = jnp.stack([jnp.concatenate([blk['wq'], blk['wk'], blk['wv'], blk['wp'], blk['w1']],
                                      axis=1)
                      for blk in params['blocks']], axis=0)                    # (L, C, 8C)
    w2 = jnp.stack([blk['w2'] for blk in params['blocks']], axis=0)            # (L, 4C, C)
    vec = jnp.stack([jnp.concatenate([
        pad_row(blk['ln1_w'], 4 * C), pad_row(blk['ln1_b'], 4 * C),
        pad_row(blk['ln2_w'], 4 * C), pad_row(blk['ln2_b'], 4 * C),
        pad_row(blk['bp'], 4 * C), pad_row(blk['b2'], 4 * C),
        pad_row(jnp.concatenate([blk['bq'].reshape(-1), blk['bk'].reshape(-1),
                                 blk['bv'].reshape(-1)]), 4 * C),
        blk['b1'].reshape(1, 4 * C)], axis=0)
        for blk in params['blocks']], axis=0)                                  # (L, 8, 4C)

    # ------------------------------- kernel ----------------------------------
    def kernel(in_ref, add_ref, emb_ref, misc_ref, maskt_ref, vsel_ref, seg_ref,
               wmat_ref, w2_ref, vec_ref, logits_ref, attn_ref):
        # --- fused embedding: one matmul + one add ---
        x = jnp.dot(in_ref[...], emb_ref[...],
                    preferred_element_type=jnp.float32) + add_ref[...]         # (BT, C)

        maskt = maskt_ref[...]                                                 # (BT, HBT)
        vsel = vsel_ref[...]                                                   # (HBT, C)
        seg = seg_ref[...]                                                     # (HBT, HBT)

        # --- transformer blocks, fully unrolled, all weights resident in VMEM ---
        for l in range(NUM_LAYER):
            wm = wmat_ref[l]               # (C, 8C) = [wq|wk|wv|wp|w1]
            w2l = w2_ref[l]                # (4C, C)
            vc = vec_ref[l]                # (8, 4C)
            ln1w, ln1b = vc[0:1, 0:C], vc[1:2, 0:C]
            ln2w, ln2b = vc[2:3, 0:C], vc[3:4, 0:C]
            bp, b2 = vc[4:5, 0:C], vc[5:6, 0:C]
            bqkv = vc[6:7, 0:3 * C]
            b1 = vc[7:8, :]

            # causal self-attention (all heads fused)
            xn = _layernorm(x, ln1w, ln1b)
            qkv = jnp.dot(xn, wm[:, 0:3 * C],
                          preferred_element_type=jnp.float32) + bqkv           # (BT, 3C)
            q = qkv[:, 0:C]
            k = qkv[:, C:2 * C]
            v = qkv[:, 2 * C:3 * C]

            # head-block-diagonal K / V slabs: vertical tile * 0/1 head mask
            k_rep = jnp.concatenate([k] * NUM_HEAD, axis=0) * vsel             # (HBT, C)
            v_rep = jnp.concatenate([v] * NUM_HEAD, axis=0) * vsel             # (HBT, C)

            # scores for all heads: one NT matmul (contract channel dim)
            s = lax.dot_general(q, k_rep, (((1,), (1,)), ((), ())),
                                preferred_element_type=jnp.float32)            # (BT, HBT)
            s = s * scale + maskt

            # per-head softmax: global row max is a valid shift for every segment
            m = jnp.max(s, axis=-1, keepdims=True)
            e = jnp.exp(s - m)
            denom = jnp.dot(e, seg, preferred_element_type=jnp.float32)        # segment sums, broadcast
            a = e * pl.reciprocal(denom, approx=True)                          # (BT, HBT)

            attn_ref[l] = a                                                    # one aligned store / layer

            y = jnp.dot(a, v_rep, preferred_element_type=jnp.float32)          # (BT, C), heads in place
            x = x + jnp.dot(y, wm[:, 3 * C:4 * C],
                            preferred_element_type=jnp.float32) + bp

            # MLP
            xn2 = _layernorm(x, ln2w, ln2b)
            hmid = _gelu(jnp.dot(xn2, wm[:, 4 * C:8 * C],
                                 preferred_element_type=jnp.float32) + b1)
            x = x + jnp.dot(hmid, w2l, preferred_element_type=jnp.float32) + b2

        # --- final LN + LM head: one aligned full-tile store ---
        ms = misc_ref[...]
        head_w = ms[0:C, :]
        lnf_w = ms[C:C + 1, :]
        lnf_b = ms[C + 1:C + 2, :]
        xn = _layernorm(x, lnf_w, lnf_b)
        logits_ref[...] = jnp.dot(xn, head_w, preferred_element_type=jnp.float32)

    # ----------------------------- pallas_call --------------------------------
    def full_spec(shape):
        zeros = (0,) * len(shape)
        return pl.BlockSpec(shape, lambda i, _z=zeros: _z)

    ins = (IN, ADD, EMB, misc, mask_tiled, vsel, segsum, wmat, w2, vec)
    logits_flat, attn_out = pl.pallas_call(
        kernel,
        out_shape=(jax.ShapeDtypeStruct((BT, VOCAB), jnp.float32),
                   jax.ShapeDtypeStruct((NUM_LAYER, BT, HBT), jnp.float32)),
        grid=(1,),
        in_specs=[full_spec(a.shape) for a in ins],
        out_specs=(full_spec((BT, VOCAB)),
                   full_spec((NUM_LAYER, BT, HBT))),
        compiler_params=pltpu.CompilerParams(dimension_semantics=("arbitrary",)),
    )(*ins)

    # --- wrapper-side extraction (plain XLA slices) ---
    logits = logits_flat.reshape(B, T_pad, VOCAB)[:, 1:T, :]                   # strip prop token + pad
    a4 = attn_out.reshape(NUM_LAYER, BT, NUM_HEAD, BT).transpose(0, 2, 1, 3)   # (L, H, BT, BT)
    attn_maps = []
    for l in range(NUM_LAYER):
        per_b = [a4[l, :, bb * T_pad:bb * T_pad + T, bb * T_pad:bb * T_pad + T]
                 for bb in range(B)]
        attn_maps.append(jnp.stack(per_b, axis=0))                             # (B, H, T, T)
    return logits, attn_maps


# ------------------------------ parameter init --------------------------------
def init_params(key):
    keys = iter(jax.random.split(key, 64))

    def nrm(shape, std=0.02):
        return (std * jax.random.normal(next(keys), shape)).astype(jnp.float32)

    params = {
        'tok_emb': nrm((VOCAB, HIDDEN)),
        'type_emb': nrm((2, HIDDEN)),
        'prop_w': nrm((NUM_TASK, HIDDEN)),          # (in, out) layout
        'prop_b': jnp.zeros((HIDDEN,), jnp.float32),
        'pos_emb': nrm((1, MAX_LEN, HIDDEN)),
        'lnf_w': jnp.ones((1, HIDDEN), jnp.float32),
        'lnf_b': jnp.zeros((1, HIDDEN), jnp.float32),
        'head_w': nrm((HIDDEN, VOCAB)),             # no bias, (in, out) layout
        'blocks': [],
    }
    for _ in range(NUM_LAYER):
        blk = {
            'ln1_w': 1.0 + nrm((1, HIDDEN)), 'ln1_b': nrm((1, HIDDEN)),
            'wq': nrm((HIDDEN, HIDDEN)), 'bq': nrm((1, HIDDEN)),
            'wk': nrm((HIDDEN, HIDDEN)), 'bk': nrm((1, HIDDEN)),
            'wv': nrm((HIDDEN, HIDDEN)), 'bv': nrm((1, HIDDEN)),
            'wp': nrm((HIDDEN, HIDDEN)), 'bp': nrm((1, HIDDEN)),
            'ln2_w': 1.0 + nrm((1, HIDDEN)), 'ln2_b': nrm((1, HIDDEN)),
            'w1': nrm((HIDDEN, 4 * HIDDEN)), 'b1': nrm((1, 4 * HIDDEN)),
            'w2': nrm((4 * HIDDEN, HIDDEN)), 'b2': nrm((1, HIDDEN)),
        }
        params['blocks'].append(blk)
    return params


# --------------------------- pure-JAX reference ------------------------------
def _ref_block(x, blk):
    B, T, C = x.shape
    xn = _layernorm(x, blk['ln1_w'][0], blk['ln1_b'][0])
    q = xn @ blk['wq'] + blk['bq'][0]
    k = xn @ blk['wk'] + blk['bk'][0]
    v = xn @ blk['wv'] + blk['bv'][0]
    split = lambda z: z.reshape(B, T, NUM_HEAD, HEAD_DIM).transpose(0, 2, 1, 3)
    q, k, v = split(q), split(k), split(v)
    att = jnp.einsum('bhtd,bhsd->bhts', q, k) / math.sqrt(HEAD_DIM)
    causal = jnp.tril(jnp.ones((T, T), bool))
    att = jnp.where(causal[None, None], att, -jnp.inf)
    att = jax.nn.softmax(att, axis=-1)
    y = jnp.einsum('bhts,bhsd->bhtd', att, v)
    y = y.transpose(0, 2, 1, 3).reshape(B, T, C)
    x = x + (y @ blk['wp'] + blk['bp'][0])
    xn2 = _layernorm(x, blk['ln2_w'][0], blk['ln2_b'][0])
    h = _gelu(xn2 @ blk['w1'] + blk['b1'][0]) @ blk['w2'] + blk['b2'][0]
    return x + h, att


def ref_forward(params, idx, prop):
    b, t = idx.shape
    x = params['tok_emb'][idx] + params['pos_emb'][:, :t, :] \
        + params['type_emb'][1][None, None, :]
    p = prop[:, None, :] @ params['prop_w'] + params['prop_b'] \
        + params['type_emb'][0][None, None, :]
    x = jnp.concatenate([p, x], axis=1)
    attn_maps = []
    for blk in params['blocks']:
        x, a = _ref_block(x, blk)
        attn_maps.append(a)
    xn = _layernorm(x, params['lnf_w'][0], params['lnf_b'][0])
    logits = xn @ params['head_w']
    return logits[:, int(bool(NUM_TASK)):, :], attn_maps


# ------------------------------------ main -----------------------------------
if __name__ == "__main__":
    key = jax.random.PRNGKey(0)
    kp, kidx, kprop = jax.random.split(key, 3)
    params = init_params(kp)

    B, t = 2, MAX_LEN
    idx = jax.random.randint(kidx, (B, t), 0, VOCAB)
    prop = jax.random.normal(kprop, (B, NUM_TASK), dtype=jnp.float32)

    logits, attn_maps = gpt_forward(params, idx, prop)
    logits = jax.block_until_ready(logits)
    attn_maps = [jax.block_until_ready(a) for a in attn_maps]

    assert logits.shape == (B, t, VOCAB)
    assert attn_maps[0].shape == (B, NUM_HEAD, t + 1, t + 1)

    ref_logits, ref_attn = ref_forward(params, idx, prop)
    assert jnp.allclose(logits, ref_logits, atol=1e-3, rtol=1e-3), "logits mismatch"
    for a, ra in zip(attn_maps, ref_attn):
        assert jnp.allclose(a, ra, atol=1e-3, rtol=1e-3), "attn map mismatch"

    print("KERNEL_OK")
</pallas_src>

<mosaic_0001>
module attributes {stable_mosaic.version = 11 : i64} {
  func.func @kernel(%arg0: i32, %arg1: memref<32x40xf32, #tpu.memory_space<vmem>>, %arg2: memref<32x32xf32, #tpu.memory_space<vmem>>, %arg3: memref<40x32xf32, #tpu.memory_space<vmem>>, %arg4: memref<34x32xf32, #tpu.memory_space<vmem>>, %arg5: memref<32x128xf32, #tpu.memory_space<vmem>>, %arg6: memref<128x32xf32, #tpu.memory_space<vmem>>, %arg7: memref<128x128xf32, #tpu.memory_space<vmem>>, %arg8: memref<2x32x256xf32, #tpu.memory_space<vmem>>, %arg9: memref<2x128x32xf32, #tpu.memory_space<vmem>>, %arg10: memref<2x8x128xf32, #tpu.memory_space<vmem>>, %arg11: memref<32x32xf32, #tpu.memory_space<vmem>>, %arg12: memref<2x32x128xf32, #tpu.memory_space<vmem>>) attributes {dimension_semantics = [#tpu.dimension_semantics<arbitrary>], iteration_bounds = array<i64: 1>, scalar_prefetch = 0 : i64, scratch_operands = 0 : i64, tpu.core_type = #tpu.core_type<tc>, window_params = [{pipeline_mode = #tpu.pipeline_mode<synchronous>, transform_indices = @transform_0, window_bounds = array<i64: 32, 40>}, {pipeline_mode = #tpu.pipeline_mode<synchronous>, transform_indices = @transform_1, window_bounds = array<i64: 32, 32>}, {pipeline_mode = #tpu.pipeline_mode<synchronous>, transform_indices = @transform_2, window_bounds = array<i64: 40, 32>}, {pipeline_mode = #tpu.pipeline_mode<synchronous>, transform_indices = @transform_3, window_bounds = array<i64: 34, 32>}, {pipeline_mode = #tpu.pipeline_mode<synchronous>, transform_indices = @transform_4, window_bounds = array<i64: 32, 128>}, {pipeline_mode = #tpu.pipeline_mode<synchronous>, transform_indices = @transform_5, window_bounds = array<i64: 128, 32>}, {pipeline_mode = #tpu.pipeline_mode<synchronous>, transform_indices = @transform_6, window_bounds = array<i64: 128, 128>}, {pipeline_mode = #tpu.pipeline_mode<synchronous>, transform_indices = @transform_7, window_bounds = array<i64: 2, 32, 256>}, {pipeline_mode = #tpu.pipeline_mode<synchronous>, transform_indices = @transform_8, window_bounds = array<i64: 2, 128, 32>}, {pipeline_mode = #tpu.pipeline_mode<synchronous>, transform_indices = @transform_9, window_bounds = array<i64: 2, 8, 128>}, {pipeline_mode = #tpu.pipeline_mode<synchronous>, transform_indices = @transform_10, window_bounds = array<i64: 32, 32>}, {pipeline_mode = #tpu.pipeline_mode<synchronous>, transform_indices = @transform_11, window_bounds = array<i64: 2, 32, 128>}]} {
    %c0 = arith.constant 0 : index
    %c0_0 = arith.constant 0 : index
    %0 = vector.load %arg1[%c0, %c0_0] : memref<32x40xf32, #tpu.memory_space<vmem>>, vector<32x40xf32>
    %c0_1 = arith.constant 0 : index
    %c0_2 = arith.constant 0 : index
    %1 = vector.load %arg3[%c0_1, %c0_2] : memref<40x32xf32, #tpu.memory_space<vmem>>, vector<40x32xf32>
    %cst = arith.constant dense<0.000000e+00> : vector<32x32xf32>
    %2 = tpu.matmul %0, %1, %cst {dimension_numbers = #tpu.dot_dimension_numbers<[1], [0], [0], [1], [0, 0, 1, 1], [], []>} : vector<32x40xf32>, vector<40x32xf32>, vector<32x32xf32> -> vector<32x32xf32>
    %c0_3 = arith.constant 0 : index
    %c0_4 = arith.constant 0 : index
    %3 = vector.load %arg2[%c0_3, %c0_4] : memref<32x32xf32, #tpu.memory_space<vmem>>, vector<32x32xf32>
    %4 = arith.addf %2, %3 : vector<32x32xf32>
    %c0_5 = arith.constant 0 : index
    %c0_6 = arith.constant 0 : index
    %5 = vector.load %arg5[%c0_5, %c0_6] : memref<32x128xf32, #tpu.memory_space<vmem>>, vector<32x128xf32>
    %c0_7 = arith.constant 0 : index
    %c0_8 = arith.constant 0 : index
    %6 = vector.load %arg6[%c0_7, %c0_8] : memref<128x32xf32, #tpu.memory_space<vmem>>, vector<128x32xf32>
    %c0_9 = arith.constant 0 : index
    %c0_10 = arith.constant 0 : index
    %7 = vector.load %arg7[%c0_9, %c0_10] : memref<128x128xf32, #tpu.memory_space<vmem>>, vector<128x128xf32>
    %c0_11 = arith.constant 0 : index
    %c0_12 = arith.constant 0 : index
    %c0_13 = arith.constant 0 : index
    %8 = vector.load %arg8[%c0_11, %c0_12, %c0_13] : memref<2x32x256xf32, #tpu.memory_space<vmem>>, vector<1x32x256xf32>
    %9 = vector.shape_cast %8 : vector<1x32x256xf32> to vector<32x256xf32>
    %c0_14 = arith.constant 0 : index
    %c0_15 = arith.constant 0 : index
    %c0_16 = arith.constant 0 : index
    %10 = vector.load %arg9[%c0_14, %c0_15, %c0_16] : memref<2x128x32xf32, #tpu.memory_space<vmem>>, vector<1x128x32xf32>
    %11 = vector.shape_cast %10 : vector<1x128x32xf32> to vector<128x32xf32>
    %c0_17 = arith.constant 0 : index
    %c0_18 = arith.constant 0 : index
    %c0_19 = arith.constant 0 : index
    %12 = vector.load %arg10[%c0_17, %c0_18, %c0_19] : memref<2x8x128xf32, #tpu.memory_space<vmem>>, vector<1x8x128xf32>
    %13 = vector.shape_cast %12 : vector<1x8x128xf32> to vector<8x128xf32>
    %14 = vector.extract_strided_slice %13 {offsets = [0, 0], sizes = [1, 32], strides = [1, 1]} : vector<8x128xf32> to vector<1x32xf32>
    %15 = vector.extract_strided_slice %13 {offsets = [1, 0], sizes = [1, 32], strides = [1, 1]} : vector<8x128xf32> to vector<1x32xf32>
    %16 = vector.extract_strided_slice %13 {offsets = [2, 0], sizes = [1, 32], strides = [1, 1]} : vector<8x128xf32> to vector<1x32xf32>
    %17 = vector.extract_strided_slice %13 {offsets = [3, 0], sizes = [1, 32], strides = [1, 1]} : vector<8x128xf32> to vector<1x32xf32>
    %18 = vector.extract_strided_slice %13 {offsets = [4, 0], sizes = [1, 32], strides = [1, 1]} : vector<8x128xf32> to vector<1x32xf32>
    %19 = vector.extract_strided_slice %13 {offsets = [5, 0], sizes = [1, 32], strides = [1, 1]} : vector<8x128xf32> to vector<1x32xf32>
    %20 = vector.extract_strided_slice %13 {offsets = [6, 0], sizes = [1, 96], strides = [1, 1]} : vector<8x128xf32> to vector<1x96xf32>
    %21 = vector.extract_strided_slice %13 {offsets = [7, 0], sizes = [1, 128], strides = [1, 1]} : vector<8x128xf32> to vector<1x128xf32>
    %cst_20 = arith.constant dense<0.000000e+00> : vector<32xf32>
    %22 = vector.multi_reduction <add>, %4, %cst_20 [1] : vector<32x32xf32> to vector<32xf32>
    %23 = vector.shape_cast %22 : vector<32xf32> to vector<32x1xf32>
    %cst_21 = arith.constant 3.200000e+01 : f32
    %24 = vector.broadcast %cst_21 : f32 to vector<32x1xf32>
    %25 = arith.divf %23, %24 : vector<32x1xf32>
    %26 = vector.broadcast %25 : vector<32x1xf32> to vector<32x32xf32>
    %27 = arith.subf %4, %26 : vector<32x32xf32>
    %28 = arith.mulf %27, %27 : vector<32x32xf32>
    %cst_22 = arith.constant dense<0.000000e+00> : vector<32xf32>
    %29 = vector.multi_reduction <add>, %28, %cst_22 [1] : vector<32x32xf32> to vector<32xf32>
    %30 = vector.shape_cast %29 : vector<32xf32> to vector<32x1xf32>
    %cst_23 = arith.constant 3.200000e+01 : f32
    %31 = vector.broadcast %cst_23 : f32 to vector<32x1xf32>
    %32 = arith.divf %30, %31 : vector<32x1xf32>
    %33 = vector.broadcast %25 : vector<32x1xf32> to vector<32x32xf32>
    %34 = arith.subf %4, %33 : vector<32x32xf32>
    %cst_24 = arith.constant 9.99999974E-6 : f32
    %35 = vector.broadcast %cst_24 : f32 to vector<32x1xf32>
    %36 = arith.addf %32, %35 : vector<32x1xf32>
    %37 = math.rsqrt %36 : vector<32x1xf32>
    %38 = vector.broadcast %37 : vector<32x1xf32> to vector<32x32xf32>
    %39 = arith.mulf %34, %38 : vector<32x32xf32>
    %40 = vector.broadcast %14 : vector<1x32xf32> to vector<32x32xf32>
    %41 = arith.mulf %39, %40 : vector<32x32xf32>
    %42 = vector.broadcast %15 : vector<1x32xf32> to vector<32x32xf32>
    %43 = arith.addf %41, %42 : vector<32x32xf32>
    %44 = vector.extract_strided_slice %9 {offsets = [0, 0], sizes = [32, 96], strides = [1, 1]} : vector<32x256xf32> to vector<32x96xf32>
    %cst_25 = arith.constant dense<0.000000e+00> : vector<32x96xf32>
    %45 = tpu.matmul %43, %44, %cst_25 {dimension_numbers = #tpu.dot_dimension_numbers<[1], [0], [0], [1], [0, 0, 1, 1], [], []>} : vector<32x32xf32>, vector<32x96xf32>, vector<32x96xf32> -> vector<32x96xf32>
    %46 = vector.broadcast %20 : vector<1x96xf32> to vector<32x96xf32>
    %47 = arith.addf %45, %46 : vector<32x96xf32>
    %48 = vector.extract_strided_slice %47 {offsets = [0, 0], sizes = [32, 32], strides = [1, 1]} : vector<32x96xf32> to vector<32x32xf32>
    %49 = vector.extract_strided_slice %47 {offsets = [0, 32], sizes = [32, 32], strides = [1, 1]} : vector<32x96xf32> to vector<32x32xf32>
    %50 = vector.extract_strided_slice %47 {offsets = [0, 64], sizes = [32, 32], strides = [1, 1]} : vector<32x96xf32> to vector<32x32xf32>
    %51 = tpu.concatenate %49, %49, %49, %49 in 0 : vector<32x32xf32>, vector<32x32xf32>, vector<32x32xf32>, vector<32x32xf32> -> vector<128x32xf32>
    %52 = arith.mulf %51, %6 : vector<128x32xf32>
    %53 = tpu.concatenate %50, %50, %50, %50 in 0 : vector<32x32xf32>, vector<32x32xf32>, vector<32x32xf32>, vector<32x32xf32> -> vector<128x32xf32>
    %54 = arith.mulf %53, %6 : vector<128x32xf32>
    %cst_26 = arith.constant dense<0.000000e+00> : vector<32x128xf32>
    %55 = tpu.matmul %48, %52, %cst_26 {dimension_numbers = #tpu.dot_dimension_numbers<[1], [1], [0], [0], [0, 0, 1, 0], [], []>} : vector<32x32xf32>, vector<128x32xf32>, vector<32x128xf32> -> vector<32x128xf32>
    %cst_27 = arith.constant 0.353553385 : f32
    %56 = vector.broadcast %cst_27 : f32 to vector<32x128xf32>
    %57 = arith.mulf %55, %56 : vector<32x128xf32>
    %58 = arith.addf %57, %5 : vector<32x128xf32>
    %cst_28 = arith.constant dense<0xFF800000> : vector<32xf32>
    %59 = vector.multi_reduction <maximumf>, %58, %cst_28 [1] : vector<32x128xf32> to vector<32xf32>
    %60 = vector.shape_cast %59 : vector<32xf32> to vector<32x1xf32>
    %61 = vector.broadcast %60 : vector<32x1xf32> to vector<32x128xf32>
    %62 = arith.subf %58, %61 : vector<32x128xf32>
    %63 = math.exp %62 : vector<32x128xf32>
    %cst_29 = arith.constant dense<0.000000e+00> : vector<32x128xf32>
    %64 = tpu.matmul %63, %7, %cst_29 {dimension_numbers = #tpu.dot_dimension_numbers<[1], [0], [0], [1], [0, 0, 1, 1], [], []>} : vector<32x128xf32>, vector<128x128xf32>, vector<32x128xf32> -> vector<32x128xf32>
    %65 = tpu.reciprocal %64 {approx = true} : vector<32x128xf32> -> vector<32x128xf32>
    %66 = arith.mulf %63, %65 : vector<32x128xf32>
    %c0_30 = arith.constant 0 : index
    %c0_31 = arith.constant 0 : index
    %c0_32 = arith.constant 0 : index
    %67 = vector.load %arg12[%c0_30, %c0_31, %c0_32] : memref<2x32x128xf32, #tpu.memory_space<vmem>>, vector<1x32x128xf32>
    %68 = vector.shape_cast %67 : vector<1x32x128xf32> to vector<32x128xf32>
    %69 = vector.shape_cast %66 : vector<32x128xf32> to vector<1x32x128xf32>
    tpu.vector_store %arg12[%c0_30, %c0_31, %c0_32], %69 {strides = array<i32>} : memref<2x32x128xf32, #tpu.memory_space<vmem>>, vector<1x32x128xf32>,
    %cst_33 = arith.constant dense<0.000000e+00> : vector<32x32xf32>
    %70 = tpu.matmul %66, %54, %cst_33 {dimension_numbers = #tpu.dot_dimension_numbers<[1], [0], [0], [1], [0, 0, 1, 1], [], []>} : vector<32x128xf32>, vector<128x32xf32>, vector<32x32xf32> -> vector<32x32xf32>
    %71 = vector.extract_strided_slice %9 {offsets = [0, 96], sizes = [32, 32], strides = [1, 1]} : vector<32x256xf32> to vector<32x32xf32>
    %cst_34 = arith.constant dense<0.000000e+00> : vector<32x32xf32>
    %72 = tpu.matmul %70, %71, %cst_34 {dimension_numbers = #tpu.dot_dimension_numbers<[1], [0], [0], [1], [0, 0, 1, 1], [], []>} : vector<32x32xf32>, vector<32x32xf32>, vector<32x32xf32> -> vector<32x32xf32>
    %73 = arith.addf %4, %72 : vector<32x32xf32>
    %74 = vector.broadcast %18 : vector<1x32xf32> to vector<32x32xf32>
    %75 = arith.addf %73, %74 : vector<32x32xf32>
    %cst_35 = arith.constant dense<0.000000e+00> : vector<32xf32>
    %76 = vector.multi_reduction <add>, %75, %cst_35 [1] : vector<32x32xf32> to vector<32xf32>
    %77 = vector.shape_cast %76 : vector<32xf32> to vector<32x1xf32>
    %cst_36 = arith.constant 3.200000e+01 : f32
    %78 = vector.broadcast %cst_36 : f32 to vector<32x1xf32>
    %79 = arith.divf %77, %78 : vector<32x1xf32>
    %80 = vector.broadcast %79 : vector<32x1xf32> to vector<32x32xf32>
    %81 = arith.subf %75, %80 : vector<32x32xf32>
    %82 = arith.mulf %81, %81 : vector<32x32xf32>
    %cst_37 = arith.constant dense<0.000000e+00> : vector<32xf32>
    %83 = vector.multi_reduction <add>, %82, %cst_37 [1] : vector<32x32xf32> to vector<32xf32>
    %84 = vector.shape_cast %83 : vector<32xf32> to vector<32x1xf32>
    %cst_38 = arith.constant 3.200000e+01 : f32
    %85 = vector.broadcast %cst_38 : f32 to vector<32x1xf32>
    %86 = arith.divf %84, %85 : vector<32x1xf32>
    %87 = vector.broadcast %79 : vector<32x1xf32> to vector<32x32xf32>
    %88 = arith.subf %75, %87 : vector<32x32xf32>
    %cst_39 = arith.constant 9.99999974E-6 : f32
    %89 = vector.broadcast %cst_39 : f32 to vector<32x1xf32>
    %90 = arith.addf %86, %89 : vector<32x1xf32>
    %91 = math.rsqrt %90 : vector<32x1xf32>
    %92 = vector.broadcast %91 : vector<32x1xf32> to vector<32x32xf32>
    %93 = arith.mulf %88, %92 : vector<32x32xf32>
    %94 = vector.broadcast %16 : vector<1x32xf32> to vector<32x32xf32>
    %95 = arith.mulf %93, %94 : vector<32x32xf32>
    %96 = vector.broadcast %17 : vector<1x32xf32> to vector<32x32xf32>
    %97 = arith.addf %95, %96 : vector<32x32xf32>
    %98 = vector.extract_strided_slice %9 {offsets = [0, 128], sizes = [32, 128], strides = [1, 1]} : vector<32x256xf32> to vector<32x128xf32>
    %cst_40 = arith.constant dense<0.000000e+00> : vector<32x128xf32>
    %99 = tpu.matmul %97, %98, %cst_40 {dimension_numbers = #tpu.dot_dimension_numbers<[1], [0], [0], [1], [0, 0, 1, 1], [], []>} : vector<32x32xf32>, vector<32x128xf32>, vector<32x128xf32> -> vector<32x128xf32>
    %100 = vector.broadcast %21 : vector<1x128xf32> to vector<32x128xf32>
    %101 = arith.addf %99, %100 : vector<32x128xf32>
    %cst_41 = arith.constant 5.000000e-01 : f32
    %102 = vector.broadcast %cst_41 : f32 to vector<32x128xf32>
    %103 = arith.mulf %102, %101 : vector<32x128xf32>
    %cst_42 = arith.constant 0.707106769 : f32
    %104 = vector.broadcast %cst_42 : f32 to vector<32x128xf32>
    %105 = arith.mulf %101, %104 : vector<32x128xf32>
    %cst_43 = arith.constant 0.000000e+00 : f32
    %106 = vector.broadcast %cst_43 : f32 to vector<32x128xf32>
    %107 = arith.cmpf oge, %105, %106 : vector<32x128xf32>
    %cst_44 = arith.constant 1.000000e+00 : f32
    %cst_45 = arith.constant -1.000000e+00 : f32
    %108 = vector.broadcast %cst_44 : f32 to vector<32x128xf32>
    %109 = vector.broadcast %cst_45 : f32 to vector<32x128xf32>
    %110 = arith.select %107, %108, %109 : vector<32x128xi1>, vector<32x128xf32>
    %111 = math.absf %105 : vector<32x128xf32>
    %cst_46 = arith.constant 0.327591091 : f32
    %112 = vector.broadcast %cst_46 : f32 to vector<32x128xf32>
    %113 = arith.mulf %112, %111 : vector<32x128xf32>
    %cst_47 = arith.constant 1.000000e+00 : f32
    %114 = vector.broadcast %cst_47 : f32 to vector<32x128xf32>
    %115 = arith.addf %114, %113 : vector<32x128xf32>
    %cst_48 = arith.constant 1.000000e+00 : f32
    %116 = vector.broadcast %cst_48 : f32 to vector<32x128xf32>
    %117 = arith.divf %116, %115 : vector<32x128xf32>
    %cst_49 = arith.constant 1.06140542 : f32
    %118 = vector.broadcast %cst_49 : f32 to vector<32x128xf32>
    %119 = arith.mulf %118, %117 : vector<32x128xf32>
    %cst_50 = arith.constant -1.45315206 : f32
    %120 = vector.broadcast %cst_50 : f32 to vector<32x128xf32>
    %121 = arith.addf %119, %120 : vector<32x128xf32>
    %122 = arith.mulf %121, %117 : vector<32x128xf32>
    %cst_51 = arith.constant 1.42141378 : f32
    %123 = vector.broadcast %cst_51 : f32 to vector<32x128xf32>
    %124 = arith.addf %122, %123 : vector<32x128xf32>
    %125 = arith.mulf %124, %117 : vector<32x128xf32>
    %cst_52 = arith.constant -0.284496725 : f32
    %126 = vector.broadcast %cst_52 : f32 to vector<32x128xf32>
    %127 = arith.addf %125, %126 : vector<32x128xf32>
    %128 = arith.mulf %127, %117 : vector<32x128xf32>
    %cst_53 = arith.constant 0.254829586 : f32
    %129 = vector.broadcast %cst_53 : f32 to vector<32x128xf32>
    %130 = arith.addf %128, %129 : vector<32x128xf32>
    %131 = arith.mulf %130, %117 : vector<32x128xf32>
    %cst_54 = arith.constant 0.000000e+00 : f32
    %132 = vector.broadcast %cst_54 : f32 to vector<32x128xf32>
    %133 = arith.subf %132, %111 : vector<32x128xf32>
    %134 = arith.mulf %133, %111 : vector<32x128xf32>
    %135 = math.exp %134 : vector<32x128xf32>
    %136 = arith.mulf %131, %135 : vector<32x128xf32>
    %cst_55 = arith.constant 1.000000e+00 : f32
    %137 = vector.broadcast %cst_55 : f32 to vector<32x128xf32>
    %138 = arith.subf %137, %136 : vector<32x128xf32>
    %139 = arith.mulf %110, %138 : vector<32x128xf32>
    %cst_56 = arith.constant 1.000000e+00 : f32
    %140 = vector.broadcast %cst_56 : f32 to vector<32x128xf32>
    %141 = arith.addf %140, %139 : vector<32x128xf32>
    %142 = arith.mulf %103, %141 : vector<32x128xf32>
    %cst_57 = arith.constant dense<0.000000e+00> : vector<32x32xf32>
    %143 = tpu.matmul %142, %11, %cst_57 {dimension_numbers = #tpu.dot_dimension_numbers<[1], [0], [0], [1], [0, 0, 1, 1], [], []>} : vector<32x128xf32>, vector<128x32xf32>, vector<32x32xf32> -> vector<32x32xf32>
    %144 = arith.addf %75, %143 : vector<32x32xf32>
    %145 = vector.broadcast %19 : vector<1x32xf32> to vector<32x32xf32>
    %146 = arith.addf %144, %145 : vector<32x32xf32>
    %c1 = arith.constant 1 : index
    %c0_58 = arith.constant 0 : index
    %c0_59 = arith.constant 0 : index
    %147 = vector.load %arg8[%c1, %c0_58, %c0_59] : memref<2x32x256xf32, #tpu.memory_space<vmem>>, vector<1x32x256xf32>
    %148 = vector.shape_cast %147 : vector<1x32x256xf32> to vector<32x256xf32>
    %c1_60 = arith.constant 1 : index
    %c0_61 = arith.constant 0 : index
    %c0_62 = arith.constant 0 : index
    %149 = vector.load %arg9[%c1_60, %c0_61, %c0_62] : memref<2x128x32xf32, #tpu.memory_space<vmem>>, vector<1x128x32xf32>
    %150 = vector.shape_cast %149 : vector<1x128x32xf32> to vector<128x32xf32>
    %c1_63 = arith.constant 1 : index
    %c0_64 = arith.constant 0 : index
    %c0_65 = arith.constant 0 : index
    %151 = vector.load %arg10[%c1_63, %c0_64, %c0_65] : memref<2x8x128xf32, #tpu.memory_space<vmem>>, vector<1x8x128xf32>
    %152 = vector.shape_cast %151 : vector<1x8x128xf32> to vector<8x128xf32>
    %153 = vector.extract_strided_slice %152 {offsets = [0, 0], sizes = [1, 32], strides = [1, 1]} : vector<8x128xf32> to vector<1x32xf32>
    %154 = vector.extract_strided_slice %152 {offsets = [1, 0], sizes = [1, 32], strides = [1, 1]} : vector<8x128xf32> to vector<1x32xf32>
    %155 = vector.extract_strided_slice %152 {offsets = [2, 0], sizes = [1, 32], strides = [1, 1]} : vector<8x128xf32> to vector<1x32xf32>
    %156 = vector.extract_strided_slice %152 {offsets = [3, 0], sizes = [1, 32], strides = [1, 1]} : vector<8x128xf32> to vector<1x32xf32>
    %157 = vector.extract_strided_slice %152 {offsets = [4, 0], sizes = [1, 32], strides = [1, 1]} : vector<8x128xf32> to vector<1x32xf32>
    %158 = vector.extract_strided_slice %152 {offsets = [5, 0], sizes = [1, 32], strides = [1, 1]} : vector<8x128xf32> to vector<1x32xf32>
    %159 = vector.extract_strided_slice %152 {offsets = [6, 0], sizes = [1, 96], strides = [1, 1]} : vector<8x128xf32> to vector<1x96xf32>
    %160 = vector.extract_strided_slice %152 {offsets = [7, 0], sizes = [1, 128], strides = [1, 1]} : vector<8x128xf32> to vector<1x128xf32>
    %cst_66 = arith.constant dense<0.000000e+00> : vector<32xf32>
    %161 = vector.multi_reduction <add>, %146, %cst_66 [1] : vector<32x32xf32> to vector<32xf32>
    %162 = vector.shape_cast %161 : vector<32xf32> to vector<32x1xf32>
    %cst_67 = arith.constant 3.200000e+01 : f32
    %163 = vector.broadcast %cst_67 : f32 to vector<32x1xf32>
    %164 = arith.divf %162, %163 : vector<32x1xf32>
    %165 = vector.broadcast %164 : vector<32x1xf32> to vector<32x32xf32>
    %166 = arith.subf %146, %165 : vector<32x32xf32>
    %167 = arith.mulf %166, %166 : vector<32x32xf32>
    %cst_68 = arith.constant dense<0.000000e+00> : vector<32xf32>
    %168 = vector.multi_reduction <add>, %167, %cst_68 [1] : vector<32x32xf32> to vector<32xf32>
    %169 = vector.shape_cast %168 : vector<32xf32> to vector<32x1xf32>
    %cst_69 = arith.constant 3.200000e+01 : f32
    %170 = vector.broadcast %cst_69 : f32 to vector<32x1xf32>
    %171 = arith.divf %169, %170 : vector<32x1xf32>
    %172 = vector.broadcast %164 : vector<32x1xf32> to vector<32x32xf32>
    %173 = arith.subf %146, %172 : vector<32x32xf32>
    %cst_70 = arith.constant 9.99999974E-6 : f32
    %174 = vector.broadcast %cst_70 : f32 to vector<32x1xf32>
    %175 = arith.addf %171, %174 : vector<32x1xf32>
    %176 = math.rsqrt %175 : vector<32x1xf32>
    %177 = vector.broadcast %176 : vector<32x1xf32> to vector<32x32xf32>
    %178 = arith.mulf %173, %177 : vector<32x32xf32>
    %179 = vector.broadcast %153 : vector<1x32xf32> to vector<32x32xf32>
    %180 = arith.mulf %178, %179 : vector<32x32xf32>
    %181 = vector.broadcast %154 : vector<1x32xf32> to vector<32x32xf32>
    %182 = arith.addf %180, %181 : vector<32x32xf32>
    %183 = vector.extract_strided_slice %148 {offsets = [0, 0], sizes = [32, 96], strides = [1, 1]} : vector<32x256xf32> to vector<32x96xf32>
    %cst_71 = arith.constant dense<0.000000e+00> : vector<32x96xf32>
    %184 = tpu.matmul %182, %183, %cst_71 {dimension_numbers = #tpu.dot_dimension_numbers<[1], [0], [0], [1], [0, 0, 1, 1], [], []>} : vector<32x32xf32>, vector<32x96xf32>, vector<32x96xf32> -> vector<32x96xf32>
    %185 = vector.broadcast %159 : vector<1x96xf32> to vector<32x96xf32>
    %186 = arith.addf %184, %185 : vector<32x96xf32>
    %187 = vector.extract_strided_slice %186 {offsets = [0, 0], sizes = [32, 32], strides = [1, 1]} : vector<32x96xf32> to vector<32x32xf32>
    %188 = vector.extract_strided_slice %186 {offsets = [0, 32], sizes = [32, 32], strides = [1, 1]} : vector<32x96xf32> to vector<32x32xf32>
    %189 = vector.extract_strided_slice %186 {offsets = [0, 64], sizes = [32, 32], strides = [1, 1]} : vector<32x96xf32> to vector<32x32xf32>
    %190 = tpu.concatenate %188, %188, %188, %188 in 0 : vector<32x32xf32>, vector<32x32xf32>, vector<32x32xf32>, vector<32x32xf32> -> vector<128x32xf32>
    %191 = arith.mulf %190, %6 : vector<128x32xf32>
    %192 = tpu.concatenate %189, %189, %189, %189 in 0 : vector<32x32xf32>, vector<32x32xf32>, vector<32x32xf32>, vector<32x32xf32> -> vector<128x32xf32>
    %193 = arith.mulf %192, %6 : vector<128x32xf32>
    %cst_72 = arith.constant dense<0.000000e+00> : vector<32x128xf32>
    %194 = tpu.matmul %187, %191, %cst_72 {dimension_numbers = #tpu.dot_dimension_numbers<[1], [1], [0], [0], [0, 0, 1, 0], [], []>} : vector<32x32xf32>, vector<128x32xf32>, vector<32x128xf32> -> vector<32x128xf32>
    %cst_73 = arith.constant 0.353553385 : f32
    %195 = vector.broadcast %cst_73 : f32 to vector<32x128xf32>
    %196 = arith.mulf %194, %195 : vector<32x128xf32>
    %197 = arith.addf %196, %5 : vector<32x128xf32>
    %cst_74 = arith.constant dense<0xFF800000> : vector<32xf32>
    %198 = vector.multi_reduction <maximumf>, %197, %cst_74 [1] : vector<32x128xf32> to vector<32xf32>
    %199 = vector.shape_cast %198 : vector<32xf32> to vector<32x1xf32>
    %200 = vector.broadcast %199 : vector<32x1xf32> to vector<32x128xf32>
    %201 = arith.subf %197, %200 : vector<32x128xf32>
    %202 = math.exp %201 : vector<32x128xf32>
    %cst_75 = arith.constant dense<0.000000e+00> : vector<32x128xf32>
    %203 = tpu.matmul %202, %7, %cst_75 {dimension_numbers = #tpu.dot_dimension_numbers<[1], [0], [0], [1], [0, 0, 1, 1], [], []>} : vector<32x128xf32>, vector<128x128xf32>, vector<32x128xf32> -> vector<32x128xf32>
    %204 = tpu.reciprocal %203 {approx = true} : vector<32x128xf32> -> vector<32x128xf32>
    %205 = arith.mulf %202, %204 : vector<32x128xf32>
    %c1_76 = arith.constant 1 : index
    %c0_77 = arith.constant 0 : index
    %c0_78 = arith.constant 0 : index
    %206 = vector.load %arg12[%c1_76, %c0_77, %c0_78] : memref<2x32x128xf32, #tpu.memory_space<vmem>>, vector<1x32x128xf32>
    %207 = vector.shape_cast %206 : vector<1x32x128xf32> to vector<32x128xf32>
    %208 = vector.shape_cast %205 : vector<32x128xf32> to vector<1x32x128xf32>
    tpu.vector_store %arg12[%c1_76, %c0_77, %c0_78], %208 {strides = array<i32>} : memref<2x32x128xf32, #tpu.memory_space<vmem>>, vector<1x32x128xf32>,
    %cst_79 = arith.constant dense<0.000000e+00> : vector<32x32xf32>
    %209 = tpu.matmul %205, %193, %cst_79 {dimension_numbers = #tpu.dot_dimension_numbers<[1], [0], [0], [1], [0, 0, 1, 1], [], []>} : vector<32x128xf32>, vector<128x32xf32>, vector<32x32xf32> -> vector<32x32xf32>
    %210 = vector.extract_strided_slice %148 {offsets = [0, 96], sizes = [32, 32], strides = [1, 1]} : vector<32x256xf32> to vector<32x32xf32>
    %cst_80 = arith.constant dense<0.000000e+00> : vector<32x32xf32>
    %211 = tpu.matmul %209, %210, %cst_80 {dimension_numbers = #tpu.dot_dimension_numbers<[1], [0], [0], [1], [0, 0, 1, 1], [], []>} : vector<32x32xf32>, vector<32x32xf32>, vector<32x32xf32> -> vector<32x32xf32>
    %212 = arith.addf %146, %211 : vector<32x32xf32>
    %213 = vector.broadcast %157 : vector<1x32xf32> to vector<32x32xf32>
    %214 = arith.addf %212, %213 : vector<32x32xf32>
    %cst_81 = arith.constant dense<0.000000e+00> : vector<32xf32>
    %215 = vector.multi_reduction <add>, %214, %cst_81 [1] : vector<32x32xf32> to vector<32xf32>
    %216 = vector.shape_cast %215 : vector<32xf32> to vector<32x1xf32>
    %cst_82 = arith.constant 3.200000e+01 : f32
    %217 = vector.broadcast %cst_82 : f32 to vector<32x1xf32>
    %218 = arith.divf %216, %217 : vector<32x1xf32>
    %219 = vector.broadcast %218 : vector<32x1xf32> to vector<32x32xf32>
    %220 = arith.subf %214, %219 : vector<32x32xf32>
    %221 = arith.mulf %220, %220 : vector<32x32xf32>
    %cst_83 = arith.constant dense<0.000000e+00> : vector<32xf32>
    %222 = vector.multi_reduction <add>, %221, %cst_83 [1] : vector<32x32xf32> to vector<32xf32>
    %223 = vector.shape_cast %222 : vector<32xf32> to vector<32x1xf32>
    %cst_84 = arith.constant 3.200000e+01 : f32
    %224 = vector.broadcast %cst_84 : f32 to vector<32x1xf32>
    %225 = arith.divf %223, %224 : vector<32x1xf32>
    %226 = vector.broadcast %218 : vector<32x1xf32> to vector<32x32xf32>
    %227 = arith.subf %214, %226 : vector<32x32xf32>
    %cst_85 = arith.constant 9.99999974E-6 : f32
    %228 = vector.broadcast %cst_85 : f32 to vector<32x1xf32>
    %229 = arith.addf %225, %228 : vector<32x1xf32>
    %230 = math.rsqrt %229 : vector<32x1xf32>
    %231 = vector.broadcast %230 : vector<32x1xf32> to vector<32x32xf32>
    %232 = arith.mulf %227, %231 : vector<32x32xf32>
    %233 = vector.broadcast %155 : vector<1x32xf32> to vector<32x32xf32>
    %234 = arith.mulf %232, %233 : vector<32x32xf32>
    %235 = vector.broadcast %156 : vector<1x32xf32> to vector<32x32xf32>
    %236 = arith.addf %234, %235 : vector<32x32xf32>
    %237 = vector.extract_strided_slice %148 {offsets = [0, 128], sizes = [32, 128], strides = [1, 1]} : vector<32x256xf32> to vector<32x128xf32>
    %cst_86 = arith.constant dense<0.000000e+00> : vector<32x128xf32>
    %238 = tpu.matmul %236, %237, %cst_86 {dimension_numbers = #tpu.dot_dimension_numbers<[1], [0], [0], [1], [0, 0, 1, 1], [], []>} : vector<32x32xf32>, vector<32x128xf32>, vector<32x128xf32> -> vector<32x128xf32>
    %239 = vector.broadcast %160 : vector<1x128xf32> to vector<32x128xf32>
    %240 = arith.addf %238, %239 : vector<32x128xf32>
    %cst_87 = arith.constant 5.000000e-01 : f32
    %241 = vector.broadcast %cst_87 : f32 to vector<32x128xf32>
    %242 = arith.mulf %241, %240 : vector<32x128xf32>
    %cst_88 = arith.constant 0.707106769 : f32
    %243 = vector.broadcast %cst_88 : f32 to vector<32x128xf32>
    %244 = arith.mulf %240, %243 : vector<32x128xf32>
    %cst_89 = arith.constant 0.000000e+00 : f32
    %245 = vector.broadcast %cst_89 : f32 to vector<32x128xf32>
    %246 = arith.cmpf oge, %244, %245 : vector<32x128xf32>
    %cst_90 = arith.constant 1.000000e+00 : f32
    %cst_91 = arith.constant -1.000000e+00 : f32
    %247 = vector.broadcast %cst_90 : f32 to vector<32x128xf32>
    %248 = vector.broadcast %cst_91 : f32 to vector<32x128xf32>
    %249 = arith.select %246, %247, %248 : vector<32x128xi1>, vector<32x128xf32>
    %250 = math.absf %244 : vector<32x128xf32>
    %cst_92 = arith.constant 0.327591091 : f32
    %251 = vector.broadcast %cst_92 : f32 to vector<32x128xf32>
    %252 = arith.mulf %251, %250 : vector<32x128xf32>
    %cst_93 = arith.constant 1.000000e+00 : f32
    %253 = vector.broadcast %cst_93 : f32 to vector<32x128xf32>
    %254 = arith.addf %253, %252 : vector<32x128xf32>
    %cst_94 = arith.constant 1.000000e+00 : f32
    %255 = vector.broadcast %cst_94 : f32 to vector<32x128xf32>
    %256 = arith.divf %255, %254 : vector<32x128xf32>
    %cst_95 = arith.constant 1.06140542 : f32
    %257 = vector.broadcast %cst_95 : f32 to vector<32x128xf32>
    %258 = arith.mulf %257, %256 : vector<32x128xf32>
    %cst_96 = arith.constant -1.45315206 : f32
    %259 = vector.broadcast %cst_96 : f32 to vector<32x128xf32>
    %260 = arith.addf %258, %259 : vector<32x128xf32>
    %261 = arith.mulf %260, %256 : vector<32x128xf32>
    %cst_97 = arith.constant 1.42141378 : f32
    %262 = vector.broadcast %cst_97 : f32 to vector<32x128xf32>
    %263 = arith.addf %261, %262 : vector<32x128xf32>
    %264 = arith.mulf %263, %256 : vector<32x128xf32>
    %cst_98 = arith.constant -0.284496725 : f32
    %265 = vector.broadcast %cst_98 : f32 to vector<32x128xf32>
    %266 = arith.addf %264, %265 : vector<32x128xf32>
    %267 = arith.mulf %266, %256 : vector<32x128xf32>
    %cst_99 = arith.constant 0.254829586 : f32
    %268 = vector.broadcast %cst_99 : f32 to vector<32x128xf32>
    %269 = arith.addf %267, %268 : vector<32x128xf32>
    %270 = arith.mulf %269, %256 : vector<32x128xf32>
    %cst_100 = arith.constant 0.000000e+00 : f32
    %271 = vector.broadcast %cst_100 : f32 to vector<32x128xf32>
    %272 = arith.subf %271, %250 : vector<32x128xf32>
    %273 = arith.mulf %272, %250 : vector<32x128xf32>
    %274 = math.exp %273 : vector<32x128xf32>
    %275 = arith.mulf %270, %274 : vector<32x128xf32>
    %cst_101 = arith.constant 1.000000e+00 : f32
    %276 = vector.broadcast %cst_101 : f32 to vector<32x128xf32>
    %277 = arith.subf %276, %275 : vector<32x128xf32>
    %278 = arith.mulf %249, %277 : vector<32x128xf32>
    %cst_102 = arith.constant 1.000000e+00 : f32
    %279 = vector.broadcast %cst_102 : f32 to vector<32x128xf32>
    %280 = arith.addf %279, %278 : vector<32x128xf32>
    %281 = arith.mulf %242, %280 : vector<32x128xf32>
    %cst_103 = arith.constant dense<0.000000e+00> : vector<32x32xf32>
    %282 = tpu.matmul %281, %150, %cst_103 {dimension_numbers = #tpu.dot_dimension_numbers<[1], [0], [0], [1], [0, 0, 1, 1], [], []>} : vector<32x128xf32>, vector<128x32xf32>, vector<32x32xf32> -> vector<32x32xf32>
    %283 = arith.addf %214, %282 : vector<32x32xf32>
    %284 = vector.broadcast %158 : vector<1x32xf32> to vector<32x32xf32>
    %285 = arith.addf %283, %284 : vector<32x32xf32>
    %c0_104 = arith.constant 0 : index
    %c0_105 = arith.constant 0 : index
    %286 = vector.load %arg4[%c0_104, %c0_105] : memref<34x32xf32, #tpu.memory_space<vmem>>, vector<34x32xf32>
    %287 = vector.extract_strided_slice %286 {offsets = [0, 0], sizes = [32, 32], strides = [1, 1]} : vector<34x32xf32> to vector<32x32xf32>
    %288 = vector.extract_strided_slice %286 {offsets = [32, 0], sizes = [1, 32], strides = [1, 1]} : vector<34x32xf32> to vector<1x32xf32>
    %289 = vector.extract_strided_slice %286 {offsets = [33, 0], sizes = [1, 32], strides = [1, 1]} : vector<34x32xf32> to vector<1x32xf32>
    %cst_106 = arith.constant dense<0.000000e+00> : vector<32xf32>
    %290 = vector.multi_reduction <add>, %285, %cst_106 [1] : vector<32x32xf32> to vector<32xf32>
    %291 = vector.shape_cast %290 : vector<32xf32> to vector<32x1xf32>
    %cst_107 = arith.constant 3.200000e+01 : f32
    %292 = vector.broadcast %cst_107 : f32 to vector<32x1xf32>
    %293 = arith.divf %291, %292 : vector<32x1xf32>
    %294 = vector.broadcast %293 : vector<32x1xf32> to vector<32x32xf32>
    %295 = arith.subf %285, %294 : vector<32x32xf32>
    %296 = arith.mulf %295, %295 : vector<32x32xf32>
    %cst_108 = arith.constant dense<0.000000e+00> : vector<32xf32>
    %297 = vector.multi_reduction <add>, %296, %cst_108 [1] : vector<32x32xf32> to vector<32xf32>
    %298 = vector.shape_cast %297 : vector<32xf32> to vector<32x1xf32>
    %cst_109 = arith.constant 3.200000e+01 : f32
    %299 = vector.broadcast %cst_109 : f32 to vector<32x1xf32>
    %300 = arith.divf %298, %299 : vector<32x1xf32>
    %301 = vector.broadcast %293 : vector<32x1xf32> to vector<32x32xf32>
    %302 = arith.subf %285, %301 : vector<32x32xf32>
    %cst_110 = arith.constant 9.99999974E-6 : f32
    %303 = vector.broadcast %cst_110 : f32 to vector<32x1xf32>
    %304 = arith.addf %300, %303 : vector<32x1xf32>
    %305 = math.rsqrt %304 : vector<32x1xf32>
    %306 = vector.broadcast %305 : vector<32x1xf32> to vector<32x32xf32>
    %307 = arith.mulf %302, %306 : vector<32x32xf32>
    %308 = vector.broadcast %288 : vector<1x32xf32> to vector<32x32xf32>
    %309 = arith.mulf %307, %308 : vector<32x32xf32>
    %310 = vector.broadcast %289 : vector<1x32xf32> to vector<32x32xf32>
    %311 = arith.addf %309, %310 : vector<32x32xf32>
    %cst_111 = arith.constant dense<0.000000e+00> : vector<32x32xf32>
    %312 = tpu.matmul %311, %287, %cst_111 {dimension_numbers = #tpu.dot_dimension_numbers<[1], [0], [0], [1], [0, 0, 1, 1], [], []>} : vector<32x32xf32>, vector<32x32xf32>, vector<32x32xf32> -> vector<32x32xf32>
    %c0_112 = arith.constant 0 : index
    %c0_113 = arith.constant 0 : index
    %313 = vector.load %arg11[%c0_112, %c0_113] : memref<32x32xf32, #tpu.memory_space<vmem>>, vector<32x32xf32>
    tpu.vector_store %arg11[%c0_112, %c0_113], %312 {strides = array<i32>} : memref<32x32xf32, #tpu.memory_space<vmem>>, vector<32x32xf32>,
    return
  }
  func.func @transform_0(%arg0: i32) -> (i32, i32) {
    %c0_i32 = arith.constant 0 : i32
    %c0_i32_0 = arith.constant 0 : i32
    %c0_i32_1 = arith.constant 0 : i32
    return %c0_i32, %c0_i32_0 : i32, i32
  }
  func.func @transform_1(%arg0: i32) -> (i32, i32) {
    %c0_i32 = arith.constant 0 : i32
    %c0_i32_0 = arith.constant 0 : i32
    %c0_i32_1 = arith.constant 0 : i32
    return %c0_i32, %c0_i32_0 : i32, i32
  }
  func.func @transform_2(%arg0: i32) -> (i32, i32) {
    %c0_i32 = arith.constant 0 : i32
    %c0_i32_0 = arith.constant 0 : i32
    %c0_i32_1 = arith.constant 0 : i32
    return %c0_i32, %c0_i32_0 : i32, i32
  }
  func.func @transform_3(%arg0: i32) -> (i32, i32) {
    %c0_i32 = arith.constant 0 : i32
    %c0_i32_0 = arith.constant 0 : i32
    %c0_i32_1 = arith.constant 0 : i32
    return %c0_i32, %c0_i32_0 : i32, i32
  }
  func.func @transform_4(%arg0: i32) -> (i32, i32) {
    %c0_i32 = arith.constant 0 : i32
    %c0_i32_0 = arith.constant 0 : i32
    %c0_i32_1 = arith.constant 0 : i32
    return %c0_i32, %c0_i32_0 : i32, i32
  }
  func.func @transform_5(%arg0: i32) -> (i32, i32) {
    %c0_i32 = arith.constant 0 : i32
    %c0_i32_0 = arith.constant 0 : i32
    %c0_i32_1 = arith.constant 0 : i32
    return %c0_i32, %c0_i32_0 : i32, i32
  }
  func.func @transform_6(%arg0: i32) -> (i32, i32) {
    %c0_i32 = arith.constant 0 : i32
    %c0_i32_0 = arith.constant 0 : i32
    %c0_i32_1 = arith.constant 0 : i32
    return %c0_i32, %c0_i32_0 : i32, i32
  }
  func.func @transform_7(%arg0: i32) -> (i32, i32, i32) {
    %c0_i32 = arith.constant 0 : i32
    %c0_i32_0 = arith.constant 0 : i32
    %c0_i32_1 = arith.constant 0 : i32
    %c0_i32_2 = arith.constant 0 : i32
    return %c0_i32, %c0_i32_0, %c0_i32_1 : i32, i32, i32
  }
  func.func @transform_8(%arg0: i32) -> (i32, i32, i32) {
    %c0_i32 = arith.constant 0 : i32
    %c0_i32_0 = arith.constant 0 : i32
    %c0_i32_1 = arith.constant 0 : i32
    %c0_i32_2 = arith.constant 0 : i32
    return %c0_i32, %c0_i32_0, %c0_i32_1 : i32, i32, i32
  }
  func.func @transform_9(%arg0: i32) -> (i32, i32, i32) {
    %c0_i32 = arith.constant 0 : i32
    %c0_i32_0 = arith.constant 0 : i32
    %c0_i32_1 = arith.constant 0 : i32
    %c0_i32_2 = arith.constant 0 : i32
    return %c0_i32, %c0_i32_0, %c0_i32_1 : i32, i32, i32
  }
  func.func @transform_10(%arg0: i32) -> (i32, i32) {
    %c0_i32 = arith.constant 0 : i32
    %c0_i32_0 = arith.constant 0 : i32
    %c0_i32_1 = arith.constant 0 : i32
    return %c0_i32, %c0_i32_0 : i32, i32
  }
  func.func @transform_11(%arg0: i32) -> (i32, i32, i32) {
    %c0_i32 = arith.constant 0 : i32
    %c0_i32_0 = arith.constant 0 : i32
    %c0_i32_1 = arith.constant 0 : i32
    %c0_i32_2 = arith.constant 0 : i32
    return %c0_i32, %c0_i32_0, %c0_i32_1 : i32, i32, i32
  }
}

</mosaic_0001>

<llo_original>
// kernel: tile.9
$region0: #{tile.9}
  %s0 = inlined_call_operand.vmem [shape: f32[32,4,32], index: 0, kind: input, shape index: {}]
  %s1 = inlined_call_operand.vmem [shape: f32[32,128], index: 1, kind: output, shape index: {}]
  $region1: #{tile.9} parent=0
    #allocation0 [shape = 'u8[131072]{0}', space=vmem, size = 0x20000, scoped, tag = 'scoped mem for input reshape']
    %s3 = sshllo.u32 0, 4
    %s4 = smul.addr 4, 31
    %s5 = scalar_lea.vmem %s0, %s4
    %v6 = vld [vmem:[%s5] sm:%s3]
    %s7 = scalar_lea.vmem [#allocation0], 248
    %8 = vst [vmem:[%s7] sm:%s3] %v6
    %s9 = smul.addr 4, 30
    %s10 = scalar_lea.vmem %s0, %s9
    %v11 = vld [vmem:[%s10] sm:%s3]
    %s12 = scalar_lea.vmem [#allocation0], 240
    %13 = vst [vmem:[%s12] sm:%s3] %v11
    %s14 = smul.addr 4, 29
    %s15 = scalar_lea.vmem %s0, %s14
    %v16 = vld [vmem:[%s15] sm:%s3]
    %s17 = scalar_lea.vmem [#allocation0], 232
    %18 = vst [vmem:[%s17] sm:%s3] %v16
    %s19 = smul.addr 4, 28
    %s20 = scalar_lea.vmem %s0, %s19
    %v21 = vld [vmem:[%s20] sm:%s3]
    %s22 = scalar_lea.vmem [#allocation0], 224
    %23 = vst [vmem:[%s22] sm:%s3] %v21
    %s24 = smul.addr 4, 27
    %s25 = scalar_lea.vmem %s0, %s24
    %v26 = vld [vmem:[%s25] sm:%s3]
    %s27 = scalar_lea.vmem [#allocation0], 216
    %28 = vst [vmem:[%s27] sm:%s3] %v26
    %s29 = smul.addr 4, 26
    %s30 = scalar_lea.vmem %s0, %s29
    %v31 = vld [vmem:[%s30] sm:%s3]
    %s32 = scalar_lea.vmem [#allocation0], 208
    %33 = vst [vmem:[%s32] sm:%s3] %v31
    %s34 = smul.addr 4, 25
    %s35 = scalar_lea.vmem %s0, %s34
    %v36 = vld [vmem:[%s35] sm:%s3]
    %s37 = scalar_lea.vmem [#allocation0], 200
    %38 = vst [vmem:[%s37] sm:%s3] %v36
    %s39 = smul.addr 4, 24
    %s40 = scalar_lea.vmem %s0, %s39
    %v41 = vld [vmem:[%s40] sm:%s3]
    %s42 = scalar_lea.vmem [#allocation0], 192
    %43 = vst [vmem:[%s42] sm:%s3] %v41
    %s44 = smul.addr 4, 23
    %s45 = scalar_lea.vmem %s0, %s44
    %v46 = vld [vmem:[%s45] sm:%s3]
    %s47 = scalar_lea.vmem [#allocation0], 184
    %48 = vst [vmem:[%s47] sm:%s3] %v46
    %s49 = smul.addr 4, 22
    %s50 = scalar_lea.vmem %s0, %s49
    %v51 = vld [vmem:[%s50] sm:%s3]
    %s52 = scalar_lea.vmem [#allocation0], 176
    %53 = vst [vmem:[%s52] sm:%s3] %v51
    %s54 = smul.addr 4, 21
    %s55 = scalar_lea.vmem %s0, %s54
    %v56 = vld [vmem:[%s55] sm:%s3]
    %s57 = scalar_lea.vmem [#allocation0], 168
    %58 = vst [vmem:[%s57] sm:%s3] %v56
    %s59 = smul.addr 4, 20
    %s60 = scalar_lea.vmem %s0, %s59
    %v61 = vld [vmem:[%s60] sm:%s3]
    %s62 = scalar_lea.vmem [#allocation0], 160
    %63 = vst [vmem:[%s62] sm:%s3] %v61
    %s64 = smul.addr 4, 19
    %s65 = scalar_lea.vmem %s0, %s64
    %v66 = vld [vmem:[%s65] sm:%s3]
    %s67 = scalar_lea.vmem [#allocation0], 152
    %68 = vst [vmem:[%s67] sm:%s3] %v66
    %s69 = smul.addr 4, 18
    %s70 = scalar_lea.vmem %s0, %s69
    %v71 = vld [vmem:[%s70] sm:%s3]
    %s72 = scalar_lea.vmem [#allocation0], 144
    %73 = vst [vmem:[%s72] sm:%s3] %v71
    %s74 = smul.addr 4, 17
    %s75 = scalar_lea.vmem %s0, %s74
    %v76 = vld [vmem:[%s75] sm:%s3]
    %s77 = scalar_lea.vmem [#allocation0], 136
    %78 = vst [vmem:[%s77] sm:%s3] %v76
    %s79 = smul.addr 4, 16
    %s80 = scalar_lea.vmem %s0, %s79
    %v81 = vld [vmem:[%s80] sm:%s3]
    %s82 = scalar_lea.vmem [#allocation0], 128
    %83 = vst [vmem:[%s82] sm:%s3] %v81
    %s84 = smul.addr 4, 15
    %s85 = scalar_lea.vmem %s0, %s84
    %v86 = vld [vmem:[%s85] sm:%s3]
    %s87 = scalar_lea.vmem [#allocation0], 120
    %88 = vst [vmem:[%s87] sm:%s3] %v86
    %s89 = smul.addr 4, 14
    %s90 = scalar_lea.vmem %s0, %s89
    %v91 = vld [vmem:[%s90] sm:%s3]
    %s92 = scalar_lea.vmem [#allocation0], 112
    %93 = vst [vmem:[%s92] sm:%s3] %v91
    %s94 = smul.addr 4, 13
    %s95 = scalar_lea.vmem %s0, %s94
    %v96 = vld [vmem:[%s95] sm:%s3]
    %s97 = scalar_lea.vmem [#allocation0], 104
    %98 = vst [vmem:[%s97] sm:%s3] %v96
    %s99 = smul.addr 4, 12
    %s100 = scalar_lea.vmem %s0, %s99
    %v101 = vld [vmem:[%s100] sm:%s3]
    %s102 = scalar_lea.vmem [#allocation0], 96
    %103 = vst [vmem:[%s102] sm:%s3] %v101
    %s104 = smul.addr 4, 11
    %s105 = scalar_lea.vmem %s0, %s104
    %v106 = vld [vmem:[%s105] sm:%s3]
    %s107 = scalar_lea.vmem [#allocation0], 88
    %108 = vst [vmem:[%s107] sm:%s3] %v106
    %s109 = smul.addr 4, 10
    %s110 = scalar_lea.vmem %s0, %s109
    %v111 = vld [vmem:[%s110] sm:%s3]
    %s112 = scalar_lea.vmem [#allocation0], 80
    %113 = vst [vmem:[%s112] sm:%s3] %v111
    %s114 = smul.addr 4, 9
    %s115 = scalar_lea.vmem %s0, %s114
    %v116 = vld [vmem:[%s115] sm:%s3]
    %s117 = scalar_lea.vmem [#allocation0], 72
    %118 = vst [vmem:[%s117] sm:%s3] %v116
    %s119 = smul.addr 4, 8
    %s120 = scalar_lea.vmem %s0, %s119
    %v121 = vld [vmem:[%s120] sm:%s3]
    %s122 = scalar_lea.vmem [#allocation0], 64
    %123 = vst [vmem:[%s122] sm:%s3] %v121
    %s124 = smul.addr 4, 7
    %s125 = scalar_lea.vmem %s0, %s124
    %v126 = vld [vmem:[%s125] sm:%s3]
    %s127 = scalar_lea.vmem [#allocation0], 56
    %128 = vst [vmem:[%s127] sm:%s3] %v126
    %s129 = smul.addr 4, 6
    %s130 = scalar_lea.vmem %s0, %s129
    %v131 = vld [vmem:[%s130] sm:%s3]
    %s132 = scalar_lea.vmem [#allocation0], 48
    %133 = vst [vmem:[%s132] sm:%s3] %v131
    %s134 = smul.addr 4, 5
    %s135 = scalar_lea.vmem %s0, %s134
    %v136 = vld [vmem:[%s135] sm:%s3]
    %s137 = scalar_lea.vmem [#allocation0], 40
    %138 = vst [vmem:[%s137] sm:%s3] %v136
    %s139 = smul.addr 4, 4
    %s140 = scalar_lea.vmem %s0, %s139
    %v141 = vld [vmem:[%s140] sm:%s3]
    %s142 = scalar_lea.vmem [#allocation0], 32
    %143 = vst [vmem:[%s142] sm:%s3] %v141
    %s144 = smul.addr 4, 3
    %s145 = scalar_lea.vmem %s0, %s144
    %v146 = vld [vmem:[%s145] sm:%s3]
    %s147 = scalar_lea.vmem [#allocation0], 24
    %148 = vst [vmem:[%s147] sm:%s3] %v146
    %s149 = smul.addr 4, 2
    %s150 = scalar_lea.vmem %s0, %s149
    %v151 = vld [vmem:[%s150] sm:%s3]
    %s152 = scalar_lea.vmem [#allocation0], 16
    %153 = vst [vmem:[%s152] sm:%s3] %v151
    %s154 = scalar_lea.vmem %s0, 4
    %v155 = vld [vmem:[%s154] sm:%s3]
    %s156 = scalar_lea.vmem [#allocation0], 8
    %157 = vst [vmem:[%s156] sm:%s3] %v155
    %v158 = vld [vmem:[%s0] sm:%s3]
    %159 = vst [vmem:[#allocation0] sm:%s3] %v158
    %v160 = vld [vmem:[#allocation0] ss:$8 sm:$0xf]
    %v161 = vld [vmem:[#allocation0] ss:$8 sm:$0xf0]
    %vm162 = vcmask 1047556
    %v163 = vsel %vm162, %v161, %v160
    %vm164 = vcmask 261120
    %165 = vst.msk [vmem:[%s1] sm:$0xff] %vm164, %v163
    %s166 = scalar_lea.vmem [#allocation0], 64
    %v167 = vld [vmem:[%s166] ss:$8 sm:$0xf]
    %s168 = scalar_lea.vmem [#allocation0], 64
    %v169 = vld [vmem:[%s168] ss:$8 sm:$0xf0]
    %vm170 = vcmask 1047556
    %v171 = vsel %vm170, %v169, %v167
    %vm172 = vcmask 261120
    %s173 = scalar_lea.vmem %s1, 8
    %174 = vst.msk [vmem:[%s173] sm:$0xff] %vm172, %v171
    %s175 = scalar_lea.vmem [#allocation0], 128
    %v176 = vld [vmem:[%s175] ss:$8 sm:$0xf]
    %s177 = scalar_lea.vmem [#allocation0], 128
    %v178 = vld [vmem:[%s177] ss:$8 sm:$0xf0]
    %vm179 = vcmask 1047556
    %v180 = vsel %vm179, %v178, %v176
    %vm181 = vcmask 261120
    %s182 = scalar_lea.vmem %s1, 16
    %183 = vst.msk [vmem:[%s182] sm:$0xff] %vm181, %v180
    %s184 = scalar_lea.vmem [#allocation0], 192
    %v185 = vld [vmem:[%s184] ss:$8 sm:$0xf]
    %s186 = scalar_lea.vmem [#allocation0], 192
    %v187 = vld [vmem:[%s186] ss:$8 sm:$0xf0]
    %vm188 = vcmask 1047556
    %v189 = vsel %vm188, %v187, %v185
    %vm190 = vcmask 261120
    %s191 = scalar_lea.vmem %s1, 24
    %192 = vst.msk [vmem:[%s191] sm:$0xff] %vm190, %v189
    %s193 = scalar_lea.vmem [#allocation0], 3
    %v194 = vld [vmem:[%s193] ss:$8 sm:$0xf]
    %s195 = scalar_lea.vmem [#allocation0], 3
    %v196 = vld [vmem:[%s195] ss:$8 sm:$0xf0]
    %vm197 = vcmask 1047556
    %v198 = vsel %vm197, %v196, %v194
    %199 = vrot.lane.b32.xlu0 %v198, 96
    %v200 = vpop.permute.xlu0 %199
    %vm201 = vcmask 1048320
    %202 = vst.msk [vmem:[%s1] sm:$0xff] %vm201, %v200
    %s203 = scalar_lea.vmem [#allocation0], 67
    %v204 = vld [vmem:[%s203] ss:$8 sm:$0xf]
    %s205 = scalar_lea.vmem [#allocation0], 67
    %v206 = vld [vmem:[%s205] ss:$8 sm:$0xf0]
    %vm207 = vcmask 1047556
    %v208 = vsel %vm207, %v206, %v204
    %209 = vrot.lane.b32.xlu0 %v208, 96
    %v210 = vpop.permute.xlu0 %209
    %vm211 = vcmask 1048320
    %s212 = scalar_lea.vmem %s1, 8
    %213 = vst.msk [vmem:[%s212] sm:$0xff] %vm211, %v210
    %s214 = scalar_lea.vmem [#allocation0], 131
    %v215 = vld [vmem:[%s214] ss:$8 sm:$0xf]
    %s216 = scalar_lea.vmem [#allocation0], 131
    %v217 = vld [vmem:[%s216] ss:$8 sm:$0xf0]
    %vm218 = vcmask 1047556
    %v219 = vsel %vm218, %v217, %v215
    %220 = vrot.lane.b32.xlu0 %v219, 96
    %v221 = vpop.permute.xlu0 %220
    %vm222 = vcmask 1048320
    %s223 = scalar_lea.vmem %s1, 16
    %224 = vst.msk [vmem:[%s223] sm:$0xff] %vm222, %v221
    %s225 = scalar_lea.vmem [#allocation0], 195
    %v226 = vld [vmem:[%s225] ss:$8 sm:$0xf]
    %s227 = scalar_lea.vmem [#allocation0], 195
    %v228 = vld [vmem:[%s227] ss:$8 sm:$0xf0]
    %vm229 = vcmask 1047556
    %v230 = vsel %vm229, %v228, %v226
    %231 = vrot.lane.b32.xlu0 %v230, 96
    %v232 = vpop.permute.xlu0 %231
    %vm233 = vcmask 1048320
    %s234 = scalar_lea.vmem %s1, 24
    %235 = vst.msk [vmem:[%s234] sm:$0xff] %vm233, %v232
    %s236 = scalar_lea.vmem [#allocation0], 2
    %v237 = vld [vmem:[%s236] ss:$8 sm:$0xf]
    %s238 = scalar_lea.vmem [#allocation0], 2
    %v239 = vld [vmem:[%s238] ss:$8 sm:$0xf0]
    %vm240 = vcmask 1047556
    %v241 = vsel %vm240, %v239, %v237
    %242 = vrot.lane.b32.xlu0 %v241, 64
    %v243 = vpop.permute.xlu0 %242
    %vm244 = vcmask 785920
    %245 = vst.msk [vmem:[%s1] sm:$0xff] %vm244, %v243
    %s246 = scalar_lea.vmem [#allocation0], 66
    %v247 = vld [vmem:[%s246] ss:$8 sm:$0xf]
    %s248 = scalar_lea.vmem [#allocation0], 66
    %v249 = vld [vmem:[%s248] ss:$8 sm:$0xf0]
    %vm250 = vcmask 1047556
    %v251 = vsel %vm250, %v249, %v247
    %252 = vrot.lane.b32.xlu0 %v251, 64
    %v253 = vpop.permute.xlu0 %252
    %vm254 = vcmask 785920
    %s255 = scalar_lea.vmem %s1, 8
    %256 = vst.msk [vmem:[%s255] sm:$0xff] %vm254, %v253
    %s257 = scalar_lea.vmem [#allocation0], 130
    %v258 = vld [vmem:[%s257] ss:$8 sm:$0xf]
    %s259 = scalar_lea.vmem [#allocation0], 130
    %v260 = vld [vmem:[%s259] ss:$8 sm:$0xf0]
    %vm261 = vcmask 1047556
    %v262 = vsel %vm261, %v260, %v258
    %263 = vrot.lane.b32.xlu0 %v262, 64
    %v264 = vpop.permute.xlu0 %263
    %vm265 = vcmask 785920
    %s266 = scalar_lea.vmem %s1, 16
    %267 = vst.msk [vmem:[%s266] sm:$0xff] %vm265, %v264
    %s268 = scalar_lea.vmem [#allocation0], 194
    %v269 = vld [vmem:[%s268] ss:$8 sm:$0xf]
    %s270 = scalar_lea.vmem [#allocation0], 194
    %v271 = vld [vmem:[%s270] ss:$8 sm:$0xf0]
    %vm272 = vcmask 1047556
    %v273 = vsel %vm272, %v271, %v269
    %274 = vrot.lane.b32.xlu0 %v273, 64
    %v275 = vpop.permute.xlu0 %274
    %vm276 = vcmask 785920
    %s277 = scalar_lea.vmem %s1, 24
    %278 = vst.msk [vmem:[%s277] sm:$0xff] %vm276, %v275
    %s279 = scalar_lea.vmem [#allocation0], 1
    %v280 = vld [vmem:[%s279] ss:$8 sm:$0xf]
    %s281 = scalar_lea.vmem [#allocation0], 1
    %v282 = vld [vmem:[%s281] ss:$8 sm:$0xf0]
    %vm283 = vcmask 1047556
    %v284 = vsel %vm283, %v282, %v280
    %285 = vrot.lane.b32.xlu0 %v284, 32
    %v286 = vpop.permute.xlu0 %285
    %vm287 = vcmask 523520
    %288 = vst.msk [vmem:[%s1] sm:$0xff] %vm287, %v286
    %s289 = scalar_lea.vmem [#allocation0], 65
    %v290 = vld [vmem:[%s289] ss:$8 sm:$0xf]
    %s291 = scalar_lea.vmem [#allocation0], 65
    %v292 = vld [vmem:[%s291] ss:$8 sm:$0xf0]
    %vm293 = vcmask 1047556
    %v294 = vsel %vm293, %v292, %v290
    %295 = vrot.lane.b32.xlu0 %v294, 32
    %v296 = vpop.permute.xlu0 %295
    %vm297 = vcmask 523520
    %s298 = scalar_lea.vmem %s1, 8
    %299 = vst.msk [vmem:[%s298] sm:$0xff] %vm297, %v296
    %s300 = scalar_lea.vmem [#allocation0], 129
    %v301 = vld [vmem:[%s300] ss:$8 sm:$0xf]
    %s302 = scalar_lea.vmem [#allocation0], 129
    %v303 = vld [vmem:[%s302] ss:$8 sm:$0xf0]
    %vm304 = vcmask 1047556
    %v305 = vsel %vm304, %v303, %v301
    %306 = vrot.lane.b32.xlu0 %v305, 32
    %v307 = vpop.permute.xlu0 %306
    %vm308 = vcmask 523520
    %s309 = scalar_lea.vmem %s1, 16
    %310 = vst.msk [vmem:[%s309] sm:$0xff] %vm308, %v307
    %s311 = scalar_lea.vmem [#allocation0], 193
    %v312 = vld [vmem:[%s311] ss:$8 sm:$0xf]
    %s313 = scalar_lea.vmem [#allocation0], 193
    %v314 = vld [vmem:[%s313] ss:$8 sm:$0xf0]
    %vm315 = vcmask 1047556
    %v316 = vsel %vm315, %v314, %v312
    %317 = vrot.lane.b32.xlu0 %v316, 32
    %v318 = vpop.permute.xlu0 %317
    %vm319 = vcmask 523520
    %s320 = scalar_lea.vmem %s1, 24
    %321 = vst.msk [vmem:[%s320] sm:$0xff] %vm319, %v318

// kernel: gpt_forward.1
$region0: #{gpt_forward.1}
  #allocation0 [shape = 'u32[]', space=smem, size = 0x4, offset = 0x4, fixed_abs, tag = 'smem constant byte address 0x4 - core index']
  #allocation1 [shape = 'u32[144,128]{1,0:T(1,128)}', space=vmem, size = 0x12000, scoped, tag = 'internal scratch']
  %s0 = inlined_call_operand.vmem [shape: f32[32,40], index: 0, kind: input, shape index: {}]
  %s1 = inlined_call_operand.vmem [shape: f32[32,32], index: 1, kind: input, shape index: {}]
  %s2 = inlined_call_operand.vmem [shape: f32[40,32], index: 2, kind: input, shape index: {}]
  %s3 = inlined_call_operand.vmem [shape: f32[34,32], index: 3, kind: input, shape index: {}]
  %s4 = inlined_call_operand.vmem [shape: f32[32,128], index: 4, kind: input, shape index: {}]
  %s5 = inlined_call_operand.vmem [shape: f32[128,32], index: 5, kind: input, shape index: {}]
  %s6 = inlined_call_operand.vmem [shape: f32[128,128], index: 6, kind: input, shape index: {}]
  %s7 = inlined_call_operand.vmem [shape: f32[2,32,256], index: 7, kind: input, shape index: {}]
  %s8 = inlined_call_operand.vmem [shape: f32[2,128,32], index: 8, kind: input, shape index: {}]
  %s9 = inlined_call_operand.vmem [shape: f32[2,8,128], index: 9, kind: input, shape index: {}]
  %s10 = inlined_call_operand.vmem [shape: f32[32,32], index: 10, kind: output, shape index: {0}]
  %s11 = inlined_call_operand.vmem [shape: f32[2,32,128], index: 11, kind: output, shape index: {1}]
  %12 = xla_tuple %s10, %s11
  %s13 = sld [smem:[#allocation0]]
  $region58: #{gpt_forward.1} parent=0
    _
  %s15 = ssub.s32 1, %s13
  %s16 = scalar_select 0, %s15, %s13
  // Predicated region
  $region2: #{gpt_forward.1} parent=0 // pred_check
    _
  $region3: #{gpt_forward.1} parent=0 // pred_check_branch
    %18 = sbr.rel (0) target = $region5
  $region4: #{gpt_forward.1} parent=0 // pred_region
    _
  $region5: #{gpt_forward.1} parent=0 // pred_fallthru
    _
  // Predicated region
  $region6: #{gpt_forward.1} parent=0 // pred_check
    _
  $region7: #{gpt_forward.1} parent=0 // pred_check_branch
    %20 = sbr.rel (0) target = $region9
  $region8: #{gpt_forward.1} parent=0 // pred_region
    _
  $region9: #{gpt_forward.1} parent=0 // pred_fallthru
    _
  // Predicated region
  $region10: #{gpt_forward.1} parent=0 // pred_check
    _
  $region11: #{gpt_forward.1} parent=0 // pred_check_branch
    %22 = sbr.rel (0) target = $region13
  $region12: #{gpt_forward.1} parent=0 // pred_region
    _
  $region13: #{gpt_forward.1} parent=0 // pred_fallthru
    _
  // Predicated region
  $region14: #{gpt_forward.1} parent=0 // pred_check
    _
  $region15: #{gpt_forward.1} parent=0 // pred_check_branch
    %24 = sbr.rel (0) target = $region17
  $region16: #{gpt_forward.1} parent=0 // pred_region
    _
  $region17: #{gpt_forward.1} parent=0 // pred_fallthru
    _
  // Predicated region
  $region18: #{gpt_forward.1} parent=0 // pred_check
    _
  $region19: #{gpt_forward.1} parent=0 // pred_check_branch
    %26 = sbr.rel (0) target = $region21
  $region20: #{gpt_forward.1} parent=0 // pred_region
    _
  $region21: #{gpt_forward.1} parent=0 // pred_fallthru
    _
  // Predicated region
  $region22: #{gpt_forward.1} parent=0 // pred_check
    _
  $region23: #{gpt_forward.1} parent=0 // pred_check_branch
    %28 = sbr.rel (0) target = $region25
  $region24: #{gpt_forward.1} parent=0 // pred_region
    _
  $region25: #{gpt_forward.1} parent=0 // pred_fallthru
    _
  // Predicated region
  $region26: #{gpt_forward.1} parent=0 // pred_check
    _
  $region27: #{gpt_forward.1} parent=0 // pred_check_branch
    %30 = sbr.rel (0) target = $region29
  $region28: #{gpt_forward.1} parent=0 // pred_region
    _
  $region29: #{gpt_forward.1} parent=0 // pred_fallthru
    _
  // Predicated region
  $region30: #{gpt_forward.1} parent=0 // pred_check
    _
  $region31: #{gpt_forward.1} parent=0 // pred_check_branch
    %32 = sbr.rel (0) target = $region33
  $region32: #{gpt_forward.1} parent=0 // pred_region
    _
  $region33: #{gpt_forward.1} parent=0 // pred_fallthru
    _
  // Predicated region
  $region34: #{gpt_forward.1} parent=0 // pred_check
    _
  $region35: #{gpt_forward.1} parent=0 // pred_check_branch
    %34 = sbr.rel (0) target = $region37
  $region36: #{gpt_forward.1} parent=0 // pred_region
    _
  $region37: #{gpt_forward.1} parent=0 // pred_fallthru
    _
  // Predicated region
  $region38: #{gpt_forward.1} parent=0 // pred_check
    _
  $region39: #{gpt_forward.1} parent=0 // pred_check_branch
    %36 = sbr.rel (0) target = $region41
  $region40: #{gpt_forward.1} parent=0 // pred_region
    _
  $region41: #{gpt_forward.1} parent=0 // pred_fallthru
    _
  %v37 = vld [vmem:[%s0] sm:$0xff]
  %v38 = vld [vmem:[%s0 + $0x8] sm:$0xff]
  %v39 = vld [vmem:[%s0 + $0x10] sm:$0xff]
  %v40 = vld [vmem:[%s0 + $0x18] sm:$0xff]
  %v41 = vld [vmem:[%s2] sm:$0xff]
  %v42 = vld [vmem:[%s2 + $0x8] sm:$0xff]
  %v43 = vld [vmem:[%s2 + $0x10] sm:$0xff]
  %v44 = vld [vmem:[%s2 + $0x18] sm:$0xff]
  %v45 = vld [vmem:[%s2 + $0x20] sm:$0xff]
  %v46 = vld [vmem:[%s1] sm:$0xff]
  %v47 = vld [vmem:[%s1 + $0x8] sm:$0xff]
  %v48 = vld [vmem:[%s1 + $0x10] sm:$0xff]
  %v49 = vld [vmem:[%s1 + $0x18] sm:$0xff]
  %vm50 = vcmask 326656
  %v52 = vsel %vm50, %v37, 0
  %v55 = vsel %vm50, %v38, 0
  %v58 = vsel %vm50, %v39, 0
  %v61 = vsel %vm50, %v40, 0
  %63 = vmatprep.subr.mxu0 0.0
  %64 = vmatpush1.msra.mxu0 %v41
  %65 = vmatprep.subr.mxu0 0.0
  %66 = vmatpush1.msra.mxu0 %v42
  %67 = vmatprep.subr.mxu0 0.0
  %68 = vmatpush1.msra.mxu0 %v43
  %69 = vmatprep.subr.mxu0 0.0
  %70 = vmatpush1.msra.mxu0 %v44
  %71 = vmatprep.subr.mxu0 0.0
  %72 = vmatpush1.msra.mxu0 %v45
  %73 = vmatprep.subr.mxu0 0.0
  %74 = vmatpush1.msra.mxu0 0.0
  %75 = vmatprep.subr.mxu0 0.0
  %76 = vmatpush1.msra.mxu0 0.0
  %77 = vmatprep.subr.mxu0 0.0
  %78 = vmatpush1.msra.mxu0 0.0
  %79 = vmatprep.subr.mxu0 0.0
  %80 = vmatpush1.msra.mxu0 0.0
  %81 = vmatprep.subr.mxu0 0.0
  %82 = vmatpush1.msra.mxu0 0.0
  %83 = vmatprep.subr.mxu0 0.0
  %84 = vmatpush1.msra.mxu0 0.0
  %85 = vmatprep.subr.mxu0 0.0
  %86 = vmatpush1.msra.mxu0 0.0
  %87 = vmatprep.subr.mxu0 0.0
  %88 = vmatpush1.msra.mxu0 0.0
  %89 = vmatprep.subr.mxu0 0.0
  %90 = vmatpush1.msra.mxu0 0.0
  %91 = vmatprep.subr.mxu0 0.0
  %92 = vmatpush1.msra.mxu0 0.0
  %93 = vmatprep.subr.mxu0 0.0
  %94 = vmatpush1.msra.mxu0 0.0
  %95 = vmatprep.subr.mxu0 0.0
  %96 = vmatpush1.msra.mxu0 0.0
  %97 = vmatprep.subr.mxu0 0.0
  %98 = vmatpush1.msra.mxu0 0.0
  %99 = vmatprep.subr.mxu0 0.0
  %100 = vmatpush1.msra.mxu0 0.0
  %101 = vmatprep.subr.mxu0 0.0
  %102 = vmatpush1.msra.mxu0 0.0
  %103 = vmatprep.subr.mxu0 0.0
  %104 = vmatpush1.msra.mxu0 0.0
  %105 = vmatprep.subr.mxu0 0.0
  %106 = vmatpush1.msra.mxu0 0.0
  %107 = vmatprep.subr.mxu0 0.0
  %108 = vmatpush1.msra.mxu0 0.0
  %109 = vmatprep.subr.mxu0 0.0
  %110 = vmatpush1.msra.mxu0 0.0
  %111 = vmatprep.subr.mxu0 0.0
  %112 = vmatpush1.msra.mxu0 0.0
  %113 = vmatprep.subr.mxu0 0.0
  %114 = vmatpush1.msra.mxu0 0.0
  %115 = vmatprep.subr.mxu0 0.0
  %116 = vmatpush1.msra.mxu0 0.0
  %117 = vmatprep.subr.mxu0 0.0
  %118 = vmatpush1.msra.mxu0 0.0
  %119 = vmatprep.subr.mxu0 0.0
  %120 = vmatpush1.msra.mxu0 0.0
  %121 = vmatprep.subr.mxu0 0.0
  %122 = vmatpush1.msra.mxu0 0.0
  %123 = vmatprep.subr.mxu0 0.0
  %124 = vmatpush1.msra.mxu0 0.0
  %125 = vmatprep.subr.mxu0 0.0
  %126 = vmatpush1.msra.mxu0 0.0
  %127 = vmatprep.mubr.f32.mxu0 0.0
  %128 = vmatmul.mubr.f32.gmra.mrb[0].mxu0 %v52
  %v129 = vpop.f32.mrb[0].mxu0
  %v130 = vadd.f32 %v46, %v129
  %v131 = vpop.f32.mrb[0].mxu0
  %132 = vmatprep.mubr.f32.mxu0 0.0
  %133 = vmatmul.mubr.f32.gmra.mrb[0].mxu0 %v55
  %v134 = vpop.f32.mrb[0].mxu0
  %v135 = vadd.f32 %v47, %v134
  %v136 = vpop.f32.mrb[0].mxu0
  %137 = vmatprep.mubr.f32.mxu0 0.0
  %138 = vmatmul.mubr.f32.gmra.mrb[0].mxu0 %v58
  %v139 = vpop.f32.mrb[0].mxu0
  %v140 = vadd.f32 %v48, %v139
  %v141 = vpop.f32.mrb[0].mxu0
  %142 = vmatprep.mubr.f32.mxu0 0.0
  %143 = vmatmul.mubr.f32.gmra.mrb[0].mxu0 %v61
  %v144 = vpop.f32.mrb[0].mxu0
  %v145 = vadd.f32 %v49, %v144
  %v146 = vpop.f32.mrb[0].mxu0
  %147 = vdwg.mxu0
  %v148 = vld [vmem:[%s4] sm:$0xff]
  %v149 = vld [vmem:[%s4 + $0x8] sm:$0xff]
  %v150 = vld [vmem:[%s4 + $0x10] sm:$0xff]
  %v151 = vld [vmem:[%s4 + $0x18] sm:$0xff]
  %v152 = vld [vmem:[%s5] sm:$0xff]
  %v153 = vld [vmem:[%s5 + $0x8] sm:$0xff]
  %v154 = vld [vmem:[%s5 + $0x10] sm:$0xff]
  %v155 = vld [vmem:[%s5 + $0x18] sm:$0xff]
  %v156 = vld [vmem:[%s5 + $0x20] sm:$0xff]
  %v157 = vld [vmem:[%s5 + $0x28] sm:$0xff]
  %v158 = vld [vmem:[%s5 + $0x30] sm:$0xff]
  %v159 = vld [vmem:[%s5 + $0x38] sm:$0xff]
  %v160 = vld [vmem:[%s5 + $0x40] sm:$0xff]
  %v161 = vld [vmem:[%s5 + $0x48] sm:$0xff]
  %v162 = vld [vmem:[%s5 + $0x50] sm:$0xff]
  %v163 = vld [vmem:[%s5 + $0x58] sm:$0xff]
  %v164 = vld [vmem:[%s5 + $0x60] sm:$0xff]
  %v165 = vld [vmem:[%s5 + $0x68] sm:$0xff]
  %v166 = vld [vmem:[%s5 + $0x70] sm:$0xff]
  %v167 = vld [vmem:[%s5 + $0x78] sm:$0xff]
  %v168 = vld [vmem:[%s6] sm:$0xff]
  %v169 = vld [vmem:[%s6 + $0x8] sm:$0xff]
  %v170 = vld [vmem:[%s6 + $0x10] sm:$0xff]
  %v171 = vld [vmem:[%s6 + $0x18] sm:$0xff]
  %v172 = vld [vmem:[%s6 + $0x20] sm:$0xff]
  %v173 = vld [vmem:[%s6 + $0x28] sm:$0xff]
  %v174 = vld [vmem:[%s6 + $0x30] sm:$0xff]
  %v175 = vld [vmem:[%s6 + $0x38] sm:$0xff]
  %v176 = vld [vmem:[%s6 + $0x40] sm:$0xff]
  %v177 = vld [vmem:[%s6 + $0x48] sm:$0xff]
  %v178 = vld [vmem:[%s6 + $0x50] sm:$0xff]
  %v179 = vld [vmem:[%s6 + $0x58] sm:$0xff]
  %v180 = vld [vmem:[%s6 + $0x60] sm:$0xff]
  %v181 = vld [vmem:[%s6 + $0x68] sm:$0xff]
  %v182 = vld [vmem:[%s6 + $0x70] sm:$0xff]
  %v183 = vld [vmem:[%s6 + $0x78] sm:$0xff]
  %v184 = vld [vmem:[%s7] sm:$0xff]
  %v185 = vld [vmem:[%s7 + $0x8] sm:$0xff]
  %v186 = vld [vmem:[%s7 + $0x10] sm:$0xff]
  %v187 = vld [vmem:[%s7 + $0x18] sm:$0xff]
  %v188 = vld [vmem:[%s7 + $0x20] sm:$0xff]
  %v189 = vld [vmem:[%s7 + $0x28] sm:$0xff]
  %v190 = vld [vmem:[%s7 + $0x30] sm:$0xff]
  %v191 = vld [vmem:[%s7 + $0x38] sm:$0xff]
  %v192 = vld [vmem:[%s8] sm:$0xff]
  %v193 = vld [vmem:[%s8 + $0x8] sm:$0xff]
  %v194 = vld [vmem:[%s8 + $0x10] sm:$0xff]
  %v195 = vld [vmem:[%s8 + $0x18] sm:$0xff]
  %v196 = vld [vmem:[%s8 + $0x20] sm:$0xff]
  %v197 = vld [vmem:[%s8 + $0x28] sm:$0xff]
  %v198 = vld [vmem:[%s8 + $0x30] sm:$0xff]
  %v199 = vld [vmem:[%s8 + $0x38] sm:$0xff]
  %v200 = vld [vmem:[%s8 + $0x40] sm:$0xff]
  %v201 = vld [vmem:[%s8 + $0x48] sm:$0xff]
  %v202 = vld [vmem:[%s8 + $0x50] sm:$0xff]
  %v203 = vld [vmem:[%s8 + $0x58] sm:$0xff]
  %v204 = vld [vmem:[%s8 + $0x60] sm:$0xff]
  %v205 = vld [vmem:[%s8 + $0x68] sm:$0xff]
  %v206 = vld [vmem:[%s8 + $0x70] sm:$0xff]
  %v207 = vld [vmem:[%s8 + $0x78] sm:$0xff]
  %v208 = vld [vmem:[%s9] sm:$0xff]
  %vm209 = vcmask 261120
  %v210 = vsel %vm209, %v130, 0.0
  %211 = vadd.xlane.f32.xlu0 %v210
  %v212 = vpop.xlane.xlu0 %211
  %v213 = vsel %vm209, %v135, 0.0
  %214 = vadd.xlane.f32.xlu0 %v213
  %v215 = vpop.xlane.xlu0 %214
  %v216 = vsel %vm209, %v140, 0.0
  %217 = vadd.xlane.f32.xlu0 %v216
  %v218 = vpop.xlane.xlu0 %217
  %v219 = vsel %vm209, %v145, 0.0
  %220 = vadd.xlane.f32.xlu0 %v219
  %v221 = vpop.xlane.xlu0 %220
  %v222 = vrcp.pop 32.0
  %v223 = vmul.f32 %v212, %v222
  %v224 = vmul.f32 %v215, %v222
  %v225 = vmul.f32 %v218, %v222
  %v226 = vmul.f32 %v221, %v222
  %v227 = vsub.f32 %v130, %v223
  %v228 = vsub.f32 %v135, %v224
  %v229 = vsub.f32 %v140, %v225
  %v230 = vsub.f32 %v145, %v226
  %v231 = vmul.f32 %v227, %v227
  %v232 = vmul.f32 %v228, %v228
  %v233 = vmul.f32 %v229, %v229
  %v234 = vmul.f32 %v230, %v230
  %v235 = vsel %vm209, %v231, 0.0
  %236 = vadd.xlane.f32.xlu0 %v235
  %v237 = vpop.xlane.xlu0 %236
  %v238 = vsel %vm209, %v232, 0.0
  %239 = vadd.xlane.f32.xlu0 %v238
  %v240 = vpop.xlane.xlu0 %239
  %v241 = vsel %vm209, %v233, 0.0
  %242 = vadd.xlane.f32.xlu0 %v241
  %v243 = vpop.xlane.xlu0 %242
  %v244 = vsel %vm209, %v234, 0.0
  %245 = vadd.xlane.f32.xlu0 %v244
  %v246 = vpop.xlane.xlu0 %245
  %v247 = vmul.f32 %v237, %v222
  %v248 = vmul.f32 %v240, %v222
  %v249 = vmul.f32 %v243, %v222
  %v250 = vmul.f32 %v246, %v222
  %v251 = vadd.f32 %v247, 1e-05
  %v252 = vadd.f32 %v248, 1e-05
  %v253 = vadd.f32 %v249, 1e-05
  %v254 = vadd.f32 %v250, 1e-05
  %v255 = vrsqrt.pop %v251
  %v256 = vrsqrt.pop %v252
  %v257 = vrsqrt.pop %v253
  %v258 = vrsqrt.pop %v254
  %v259 = vmul.f32 %v227, %v255
  %v260 = vmul.f32 %v228, %v256
  %v261 = vmul.f32 %v229, %v257
  %v262 = vmul.f32 %v230, %v258
  %v263 = vlaneseq
  %v264 = vshrl.u32 %v263, 7
  %v265 = vsub.s32 0, %v264
  %v266 = vrot.slane %v208, %v265
  %v267 = vmul.f32 %v259, %v266
  %v268 = vmul.f32 %v260, %v266
  %v269 = vmul.f32 %v261, %v266
  %v270 = vmul.f32 %v262, %v266
  %v271 = vlaneseq
  %v272 = vshrl.u32 %v271, 7
  %v273 = vsub.s32 1, %v272
  %v274 = vrot.slane %v208, %v273
  %v275 = vadd.f32 %v267, %v274
  %v276 = vadd.f32 %v268, %v274
  %v277 = vadd.f32 %v269, %v274
  %v278 = vadd.f32 %v270, %v274
  %v279 = vlaneseq
  %v280 = vshrl.u32 %v279, 7
  %v281 = vsub.s32 6, %v280
  %v282 = vrot.slane %v208, %v281
  %v284 = vsel %vm209, %v275, 0
  %v287 = vsel %vm209, %v276, 0
  %v290 = vsel %vm209, %v277, 0
  %v293 = vsel %vm209, %v278, 0
  %295 = vmatprep.subr.mxu0 0.0
  %296 = vmatpush1.msra.mxu0 %v184
  %297 = vmatprep.subr.mxu0 0.0
  %298 = vmatpush1.msra.mxu0 %v186
  %299 = vmatprep.subr.mxu0 0.0
  %300 = vmatpush1.msra.mxu0 %v188
  %301 = vmatprep.subr.mxu0 0.0
  %302 = vmatpush1.msra.mxu0 %v190
  %303 = vmatprep.subr.mxu0 0.0
  %304 = vmatpush1.msra.mxu0 0.0
  %305 = vmatprep.subr.mxu0 0.0
  %306 = vmatpush1.msra.mxu0 0.0
  %307 = vmatprep.subr.mxu0 0.0
  %308 = vmatpush1.msra.mxu0 0.0
  %309 = vmatprep.subr.mxu0 0.0
  %310 = vmatpush1.msra.mxu0 0.0
  %311 = vmatprep.subr.mxu0 0.0
  %312 = vmatpush1.msra.mxu0 0.0
  %313 = vmatprep.subr.mxu0 0.0
  %314 = vmatpush1.msra.mxu0 0.0
  %315 = vmatprep.subr.mxu0 0.0
  %316 = vmatpush1.msra.mxu0 0.0
  %317 = vmatprep.subr.mxu0 0.0
  %318 = vmatpush1.msra.mxu0 0.0
  %319 = vmatprep.subr.mxu0 0.0
  %320 = vmatpush1.msra.mxu0 0.0
  %321 = vmatprep.subr.mxu0 0.0
  %322 = vmatpush1.msra.mxu0 0.0
  %323 = vmatprep.subr.mxu0 0.0
  %324 = vmatpush1.msra.mxu0 0.0
  %325 = vmatprep.subr.mxu0 0.0
  %326 = vmatpush1.msra.mxu0 0.0
  %327 = vmatprep.subr.mxu0 0.0
  %328 = vmatpush1.msra.mxu0 0.0
  %329 = vmatprep.subr.mxu0 0.0
  %330 = vmatpush1.msra.mxu0 0.0
  %331 = vmatprep.subr.mxu0 0.0
  %332 = vmatpush1.msra.mxu0 0.0
  %333 = vmatprep.subr.mxu0 0.0
  %334 = vmatpush1.msra.mxu0 0.0
  %335 = vmatprep.subr.mxu0 0.0
  %336 = vmatpush1.msra.mxu0 0.0
  %337 = vmatprep.subr.mxu0 0.0
  %338 = vmatpush1.msra.mxu0 0.0
  %339 = vmatprep.subr.mxu0 0.0
  %340 = vmatpush1.msra.mxu0 0.0
  %341 = vmatprep.subr.mxu0 0.0
  %342 = vmatpush1.msra.mxu0 0.0
  %343 = vmatprep.subr.mxu0 0.0
  %344 = vmatpush1.msra.mxu0 0.0
  %345 = vmatprep.subr.mxu0 0.0
  %346 = vmatpush1.msra.mxu0 0.0
  %347 = vmatprep.subr.mxu0 0.0
  %348 = vmatpush1.msra.mxu0 0.0
  %349 = vmatprep.subr.mxu0 0.0
  %350 = vmatpush1.msra.mxu0 0.0
  %351 = vmatprep.subr.mxu0 0.0
  %352 = vmatpush1.msra.mxu0 0.0
  %353 = vmatprep.subr.mxu0 0.0
  %354 = vmatpush1.msra.mxu0 0.0
  %355 = vmatprep.subr.mxu0 0.0
  %356 = vmatpush1.msra.mxu0 0.0
  %357 = vmatprep.subr.mxu0 0.0
  %358 = vmatpush1.msra.mxu0 0.0
  %359 = vmatprep.mubr.f32.mxu0 0.0
  %360 = vmatmul.mubr.f32.gmra.mrb[0].mxu0 %v284
  %v361 = vpop.f32.mrb[0].mxu0
  %v362 = vadd.f32 %v282, %v361
  %v363 = vpop.f32.mrb[0].mxu0
  %364 = vmatprep.mubr.f32.mxu0 0.0
  %365 = vmatmul.mubr.f32.gmra.mrb[0].mxu0 %v287
  %v366 = vpop.f32.mrb[0].mxu0
  %v367 = vadd.f32 %v282, %v366
  %v368 = vpop.f32.mrb[0].mxu0
  %369 = vmatprep.mubr.f32.mxu0 0.0
  %370 = vmatmul.mubr.f32.gmra.mrb[0].mxu0 %v290
  %v371 = vpop.f32.mrb[0].mxu0
  %v372 = vadd.f32 %v282, %v371
  %v373 = vpop.f32.mrb[0].mxu0
  %374 = vmatprep.mubr.f32.mxu0 0.0
  %375 = vmatmul.mubr.f32.gmra.mrb[0].mxu0 %v293
  %v376 = vpop.f32.mrb[0].mxu0
  %v377 = vadd.f32 %v282, %v376
  %v378 = vpop.f32.mrb[0].mxu0
  %379 = vdwg.mxu0
  %396 = vrot.lane.b32.xlu0 %v152, 32
  %v397 = vpop.permute.xlu0 %396
  %398 = vrot.lane.b32.xlu0 %v153, 32
  %v399 = vpop.permute.xlu0 %398
  %400 = vrot.lane.b32.xlu0 %v154, 32
  %v401 = vpop.permute.xlu0 %400
  %402 = vrot.lane.b32.xlu0 %v155, 32
  %v403 = vpop.permute.xlu0 %402
  %404 = vrot.lane.b32.xlu0 %v156, 32
  %v405 = vpop.permute.xlu0 %404
  %406 = vrot.lane.b32.xlu0 %v157, 32
  %v407 = vpop.permute.xlu0 %406
  %408 = vrot.lane.b32.xlu0 %v158, 32
  %v409 = vpop.permute.xlu0 %408
  %410 = vrot.lane.b32.xlu0 %v159, 32
  %v411 = vpop.permute.xlu0 %410
  %412 = vrot.lane.b32.xlu0 %v160, 32
  %v413 = vpop.permute.xlu0 %412
  %414 = vrot.lane.b32.xlu0 %v161, 32
  %v415 = vpop.permute.xlu0 %414
  %416 = vrot.lane.b32.xlu0 %v162, 32
  %v417 = vpop.permute.xlu0 %416
  %418 = vrot.lane.b32.xlu0 %v163, 32
  %v419 = vpop.permute.xlu0 %418
  %420 = vrot.lane.b32.xlu0 %v164, 32
  %v421 = vpop.permute.xlu0 %420
  %422 = vrot.lane.b32.xlu0 %v165, 32
  %v423 = vpop.permute.xlu0 %422
  %424 = vrot.lane.b32.xlu0 %v166, 32
  %v425 = vpop.permute.xlu0 %424
  %426 = vrot.lane.b32.xlu0 %v167, 32
  %v427 = vpop.permute.xlu0 %426
  %v444 = vmul.f32 %v362, %v397
  %v445 = vmul.f32 %v367, %v399
  %v446 = vmul.f32 %v372, %v401
  %v447 = vmul.f32 %v377, %v403
  %v448 = vmul.f32 %v362, %v405
  %v449 = vmul.f32 %v367, %v407
  %v450 = vmul.f32 %v372, %v409
  %v451 = vmul.f32 %v377, %v411
  %v452 = vmul.f32 %v362, %v413
  %v453 = vmul.f32 %v367, %v415
  %v454 = vmul.f32 %v372, %v417
  %v455 = vmul.f32 %v377, %v419
  %v456 = vmul.f32 %v362, %v421
  %v457 = vmul.f32 %v367, %v423
  %v458 = vmul.f32 %v372, %v425
  %v459 = vmul.f32 %v377, %v427
  %460 = vrot.lane.b32.xlu0 %v152, 64
  %v461 = vpop.permute.xlu0 %460
  %462 = vrot.lane.b32.xlu0 %v153, 64
  %v463 = vpop.permute.xlu0 %462
  %464 = vrot.lane.b32.xlu0 %v154, 64
  %v465 = vpop.permute.xlu0 %464
  %466 = vrot.lane.b32.xlu0 %v155, 64
  %v467 = vpop.permute.xlu0 %466
  %468 = vrot.lane.b32.xlu0 %v156, 64
  %v469 = vpop.permute.xlu0 %468
  %470 = vrot.lane.b32.xlu0 %v157, 64
  %v471 = vpop.permute.xlu0 %470
  %472 = vrot.lane.b32.xlu0 %v158, 64
  %v473 = vpop.permute.xlu0 %472
  %474 = vrot.lane.b32.xlu0 %v159, 64
  %v475 = vpop.permute.xlu0 %474
  %476 = vrot.lane.b32.xlu0 %v160, 64
  %v477 = vpop.permute.xlu0 %476
  %478 = vrot.lane.b32.xlu0 %v161, 64
  %v479 = vpop.permute.xlu0 %478
  %480 = vrot.lane.b32.xlu0 %v162, 64
  %v481 = vpop.permute.xlu0 %480
  %482 = vrot.lane.b32.xlu0 %v163, 64
  %v483 = vpop.permute.xlu0 %482
  %484 = vrot.lane.b32.xlu0 %v164, 64
  %v485 = vpop.permute.xlu0 %484
  %486 = vrot.lane.b32.xlu0 %v165, 64
  %v487 = vpop.permute.xlu0 %486
  %488 = vrot.lane.b32.xlu0 %v166, 64
  %v489 = vpop.permute.xlu0 %488
  %490 = vrot.lane.b32.xlu0 %v167, 64
  %v491 = vpop.permute.xlu0 %490
  %v508 = vmul.f32 %v362, %v461
  %v509 = vmul.f32 %v367, %v463
  %v510 = vmul.f32 %v372, %v465
  %v511 = vmul.f32 %v377, %v467
  %v512 = vmul.f32 %v362, %v469
  %v513 = vmul.f32 %v367, %v471
  %v514 = vmul.f32 %v372, %v473
  %v515 = vmul.f32 %v377, %v475
  %v516 = vmul.f32 %v362, %v477
  %v517 = vmul.f32 %v367, %v479
  %v518 = vmul.f32 %v372, %v481
  %v519 = vmul.f32 %v377, %v483
  %v520 = vmul.f32 %v362, %v485
  %v521 = vmul.f32 %v367, %v487
  %v522 = vmul.f32 %v372, %v489
  %v523 = vmul.f32 %v377, %v491
  %540 = vrot.lane.b32.xlu0 %v444, 96
  %v541 = vpop.permute.xlu0 %540
  %542 = vrot.lane.b32.xlu0 %v445, 96
  %v543 = vpop.permute.xlu0 %542
  %544 = vrot.lane.b32.xlu0 %v446, 96
  %v545 = vpop.permute.xlu0 %544
  %546 = vrot.lane.b32.xlu0 %v447, 96
  %v547 = vpop.permute.xlu0 %546
  %548 = vrot.lane.b32.xlu0 %v448, 96
  %v549 = vpop.permute.xlu0 %548
  %550 = vrot.lane.b32.xlu0 %v449, 96
  %v551 = vpop.permute.xlu0 %550
  %552 = vrot.lane.b32.xlu0 %v450, 96
  %v553 = vpop.permute.xlu0 %552
  %554 = vrot.lane.b32.xlu0 %v451, 96
  %v555 = vpop.permute.xlu0 %554
  %556 = vrot.lane.b32.xlu0 %v452, 96
  %v557 = vpop.permute.xlu0 %556
  %558 = vrot.lane.b32.xlu0 %v453, 96
  %v559 = vpop.permute.xlu0 %558
  %560 = vrot.lane.b32.xlu0 %v454, 96
  %v561 = vpop.permute.xlu0 %560
  %562 = vrot.lane.b32.xlu0 %v455, 96
  %v563 = vpop.permute.xlu0 %562
  %564 = vrot.lane.b32.xlu0 %v456, 96
  %v565 = vpop.permute.xlu0 %564
  %566 = vrot.lane.b32.xlu0 %v457, 96
  %v567 = vpop.permute.xlu0 %566
  %568 = vrot.lane.b32.xlu0 %v458, 96
  %v569 = vpop.permute.xlu0 %568
  %570 = vrot.lane.b32.xlu0 %v459, 96
  %v571 = vpop.permute.xlu0 %570
  %v573 = vsel %vm209, %v362, 0
  %v576 = vsel %vm209, %v367, 0
  %v579 = vsel %vm209, %v372, 0
  %v582 = vsel %vm209, %v377, 0
  %v584 = vsel %vm209, %v541, 0
  %v586 = vsel %vm209, %v543, 0
  %v588 = vsel %vm209, %v545, 0
  %v590 = vsel %vm209, %v547, 0
  %v592 = vsel %vm209, %v549, 0
  %v594 = vsel %vm209, %v551, 0
  %v596 = vsel %vm209, %v553, 0
  %v598 = vsel %vm209, %v555, 0
  %v600 = vsel %vm209, %v557, 0
  %v602 = vsel %vm209, %v559, 0
  %v604 = vsel %vm209, %v561, 0
  %v606 = vsel %vm209, %v563, 0
  %v608 = vsel %vm209, %v565, 0
  %v610 = vsel %vm209, %v567, 0
  %v612 = vsel %vm209, %v569, 0
  %v614 = vsel %vm209, %v571, 0
  %616 = vmatprep.subr.mxu0 0.0
  %617 = vmatpush1.xpose.msra.mxu0 %v584
  %618 = vmatprep.subr.mxu0 0.0
  %619 = vmatpush1.xpose.msra.mxu0 %v586
  %620 = vmatprep.subr.mxu0 0.0
  %621 = vmatpush1.xpose.msra.mxu0 %v588
  %622 = vmatprep.subr.mxu0 0.0
  %623 = vmatpush1.xpose.msra.mxu0 %v590
  %624 = vmatprep.subr.mxu0 0.0
  %625 = vmatpush1.xpose.msra.mxu0 %v592
  %626 = vmatprep.subr.mxu0 0.0
  %627 = vmatpush1.xpose.msra.mxu0 %v594
  %628 = vmatprep.subr.mxu0 0.0
  %629 = vmatpush1.xpose.msra.mxu0 %v596
  %630 = vmatprep.subr.mxu0 0.0
  %631 = vmatpush1.xpose.msra.mxu0 %v598
  %632 = vmatprep.subr.mxu0 0.0
  %633 = vmatpush1.xpose.msra.mxu0 %v600
  %634 = vmatprep.subr.mxu0 0.0
  %635 = vmatpush1.xpose.msra.mxu0 %v602
  %636 = vmatprep.subr.mxu0 0.0
  %637 = vmatpush1.xpose.msra.mxu0 %v604
  %638 = vmatprep.subr.mxu0 0.0
  %639 = vmatpush1.xpose.msra.mxu0 %v606
  %640 = vmatprep.subr.mxu0 0.0
  %641 = vmatpush1.xpose.msra.mxu0 %v608
  %642 = vmatprep.subr.mxu0 0.0
  %643 = vmatpush1.xpose.msra.mxu0 %v610
  %644 = vmatprep.subr.mxu0 0.0
  %645 = vmatpush1.xpose.msra.mxu0 %v612
  %646 = vmatprep.subr.mxu0 0.0
  %647 = vmatpush1.xpose.msra.mxu0 %v614
  %648 = vmatprep.subr.mxu0 0.0
  %649 = vmatpush1.xpose.msra.mxu0 0.0
  %650 = vmatprep.subr.mxu0 0.0
  %651 = vmatpush1.xpose.msra.mxu0 0.0
  %652 = vmatprep.subr.mxu0 0.0
  %653 = vmatpush1.xpose.msra.mxu0 0.0
  %654 = vmatprep.subr.mxu0 0.0
  %655 = vmatpush1.xpose.msra.mxu0 0.0
  %656 = vmatprep.subr.mxu0 0.0
  %657 = vmatpush1.xpose.msra.mxu0 0.0
  %658 = vmatprep.subr.mxu0 0.0
  %659 = vmatpush1.xpose.msra.mxu0 0.0
  %660 = vmatprep.subr.mxu0 0.0
  %661 = vmatpush1.xpose.msra.mxu0 0.0
  %662 = vmatprep.subr.mxu0 0.0
  %663 = vmatpush1.xpose.msra.mxu0 0.0
  %664 = vmatprep.subr.mxu0 0.0
  %665 = vmatpush1.xpose.msra.mxu0 0.0
  %666 = vmatprep.subr.mxu0 0.0
  %667 = vmatpush1.xpose.msra.mxu0 0.0
  %668 = vmatprep.subr.mxu0 0.0
  %669 = vmatpush1.xpose.msra.mxu0 0.0
  %670 = vmatprep.subr.mxu0 0.0
  %671 = vmatpush1.xpose.msra.mxu0 0.0
  %672 = vmatprep.subr.mxu0 0.0
  %673 = vmatpush1.xpose.msra.mxu0 0.0
  %674 = vmatprep.subr.mxu0 0.0
  %675 = vmatpush1.xpose.msra.mxu0 0.0
  %676 = vmatprep.subr.mxu0 0.0
  %677 = vmatpush1.xpose.msra.mxu0 0.0
  %678 = vmatprep.subr.mxu0 0.0
  %679 = vmatpush1.xpose.msra.mxu0 0.0
  %680 = vmatprep.mubr.f32.mxu0 0.0
  %681 = vmatmul.mubr.f32.gmra.mrb[0].mxu0 %v573
  %v682 = vpop.f32.mrb[0].mxu0
  %v683 = vadd.f32 0.0, %v682
  %v684 = vpop.f32.mrb[0].mxu0
  %685 = vmatprep.mubr.f32.mxu0 0.0
  %686 = vmatmul.mubr.f32.gmra.mrb[0].mxu0 %v576
  %v687 = vpop.f32.mrb[0].mxu0
  %v688 = vadd.f32 0.0, %v687
  %v689 = vpop.f32.mrb[0].mxu0
  %690 = vmatprep.mubr.f32.mxu0 0.0
  %691 = vmatmul.mubr.f32.gmra.mrb[0].mxu0 %v579
  %v692 = vpop.f32.mrb[0].mxu0
  %v693 = vadd.f32 0.0, %v692
  %v694 = vpop.f32.mrb[0].mxu0
  %695 = vmatprep.mubr.f32.mxu0 0.0
  %696 = vmatmul.mubr.f32.gmra.mrb[0].mxu0 %v582
  %v697 = vpop.f32.mrb[0].mxu0
  %v698 = vadd.f32 0.0, %v697
  %v699 = vpop.f32.mrb[0].mxu0
  %700 = vdwg.mxu0
  %v701 = vmul.f32 %v683, 0.35355338
  %v702 = vmul.f32 %v688, 0.35355338
  %v703 = vmul.f32 %v693, 0.35355338
  %v704 = vmul.f32 %v698, 0.35355338
  %v705 = vadd.f32 %v701, %v148
  %v706 = vadd.f32 %v702, %v149
  %v707 = vadd.f32 %v703, %v150
  %v708 = vadd.f32 %v704, %v151
  %709 = vmax.xlane.f32.xlu0 %v705
  %v710 = vpop.xlane.xlu0 %709
  %711 = vmax.xlane.f32.xlu0 %v706
  %v712 = vpop.xlane.xlu0 %711
  %713 = vmax.xlane.f32.xlu0 %v707
  %v714 = vpop.xlane.xlu0 %713
  %715 = vmax.xlane.f32.xlu0 %v708
  %v716 = vpop.xlane.xlu0 %715
  %v717 = vsub.f32 %v705, %v710
  %v718 = vsub.f32 %v706, %v712
  %v719 = vsub.f32 %v707, %v714
  %v720 = vsub.f32 %v708, %v716
  %v721 = vmul.f32 %v717, 1.442695
  %v722 = vpow.pop %v721
  %v723 = vmul.f32 %v718, 1.442695
  %v724 = vpow.pop %v723
  %v725 = vmul.f32 %v719, 1.442695
  %v726 = vpow.pop %v725
  %v727 = vmul.f32 %v720, 1.442695
  %v728 = vpow.pop %v727
  %729 = vmatprep.subr.mxu0 0.0
  %730 = vmatpush1.msra.mxu0 %v168
  %731 = vmatprep.subr.mxu0 0.0
  %732 = vmatpush1.msra.mxu0 %v169
  %733 = vmatprep.subr.mxu0 0.0
  %734 = vmatpush1.msra.mxu0 %v170
  %735 = vmatprep.subr.mxu0 0.0
  %736 = vmatpush1.msra.mxu0 %v171
  %737 = vmatprep.subr.mxu0 0.0
  %738 = vmatpush1.msra.mxu0 %v172
  %739 = vmatprep.subr.mxu0 0.0
  %740 = vmatpush1.msra.mxu0 %v173
  %741 = vmatprep.subr.mxu0 0.0
  %742 = vmatpush1.msra.mxu0 %v174
  %743 = vmatprep.subr.mxu0 0.0
  %744 = vmatpush1.msra.mxu0 %v175
  %745 = vmatprep.subr.mxu0 0.0
  %746 = vmatpush1.msra.mxu0 %v176
  %747 = vmatprep.subr.mxu0 0.0
  %748 = vmatpush1.msra.mxu0 %v177
  %749 = vmatprep.subr.mxu0 0.0
  %750 = vmatpush1.msra.mxu0 %v178
  %751 = vmatprep.subr.mxu0 0.0
  %752 = vmatpush1.msra.mxu0 %v179
  %753 = vmatprep.subr.mxu0 0.0
  %754 = vmatpush1.msra.mxu0 %v180
  %755 = vmatprep.subr.mxu0 0.0
  %756 = vmatpush1.msra.mxu0 %v181
  %757 = vmatprep.subr.mxu0 0.0
  %758 = vmatpush1.msra.mxu0 %v182
  %759 = vmatprep.subr.mxu0 0.0
  %760 = vmatpush1.msra.mxu0 %v183
  %761 = vmatprep.subr.mxu0 0.0
  %762 = vmatpush1.msra.mxu0 0.0
  %763 = vmatprep.subr.mxu0 0.0
  %764 = vmatpush1.msra.mxu0 0.0
  %765 = vmatprep.subr.mxu0 0.0
  %766 = vmatpush1.msra.mxu0 0.0
  %767 = vmatprep.subr.mxu0 0.0
  %768 = vmatpush1.msra.mxu0 0.0
  %769 = vmatprep.subr.mxu0 0.0
  %770 = vmatpush1.msra.mxu0 0.0
  %771 = vmatprep.subr.mxu0 0.0
  %772 = vmatpush1.msra.mxu0 0.0
  %773 = vmatprep.subr.mxu0 0.0
  %774 = vmatpush1.msra.mxu0 0.0
  %775 = vmatprep.subr.mxu0 0.0
  %776 = vmatpush1.msra.mxu0 0.0
  %777 = vmatprep.subr.mxu0 0.0
  %778 = vmatpush1.msra.mxu0 0.0
  %779 = vmatprep.subr.mxu0 0.0
  %780 = vmatpush1.msra.mxu0 0.0
  %781 = vmatprep.subr.mxu0 0.0
  %782 = vmatpush1.msra.mxu0 0.0
  %783 = vmatprep.subr.mxu0 0.0
  %784 = vmatpush1.msra.mxu0 0.0
  %785 = vmatprep.subr.mxu0 0.0
  %786 = vmatpush1.msra.mxu0 0.0
  %787 = vmatprep.subr.mxu0 0.0
  %788 = vmatpush1.msra.mxu0 0.0
  %789 = vmatprep.subr.mxu0 0.0
  %790 = vmatpush1.msra.mxu0 0.0
  %791 = vmatprep.subr.mxu0 0.0
  %792 = vmatpush1.msra.mxu0 0.0
  %793 = vmatprep.mubr.f32.mxu0 0.0
  %794 = vmatmul.mubr.f32.gmra.mrb[0].mxu0 %v722
  %v795 = vpop.f32.mrb[0].mxu0
  %v796 = vadd.f32 0.0, %v795
  %v797 = vpop.f32.mrb[0].mxu0
  %798 = vmatprep.mubr.f32.mxu0 0.0
  %799 = vmatmul.mubr.f32.gmra.mrb[0].mxu0 %v724
  %v800 = vpop.f32.mrb[0].mxu0
  %v801 = vadd.f32 0.0, %v800
  %v802 = vpop.f32.mrb[0].mxu0
  %803 = vmatprep.mubr.f32.mxu0 0.0
  %804 = vmatmul.mubr.f32.gmra.mrb[0].mxu0 %v726
  %v805 = vpop.f32.mrb[0].mxu0
  %v806 = vadd.f32 0.0, %v805
  %v807 = vpop.f32.mrb[0].mxu0
  %808 = vmatprep.mubr.f32.mxu0 0.0
  %809 = vmatmul.mubr.f32.gmra.mrb[0].mxu0 %v728
  %v810 = vpop.f32.mrb[0].mxu0
  %v811 = vadd.f32 0.0, %v810
  %v812 = vpop.f32.mrb[0].mxu0
  %813 = vdwg.mxu0
  %v814 = vrcp.pop %v796
  %v815 = vrcp.pop %v801
  %v816 = vrcp.pop %v806
  %v817 = vrcp.pop %v811
  %v818 = vmul.f32 %v722, %v814
  %v819 = vmul.f32 %v724, %v815
  %v820 = vmul.f32 %v726, %v816
  %v821 = vmul.f32 %v728, %v817
  %822 = vst [vmem:[%s11] sm:$0xff] %v818
  %823 = vst [vmem:[%s11 + $0x8] sm:$0xff] %v819
  %824 = vst [vmem:[%s11 + $0x10] sm:$0xff] %v820
  %825 = vst [vmem:[%s11 + $0x18] sm:$0xff] %v821
  %842 = vrot.lane.b32.xlu0 %v508, 64
  %v843 = vpop.permute.xlu0 %842
  %844 = vrot.lane.b32.xlu0 %v509, 64
  %v845 = vpop.permute.xlu0 %844
  %846 = vrot.lane.b32.xlu0 %v510, 64
  %v847 = vpop.permute.xlu0 %846
  %848 = vrot.lane.b32.xlu0 %v511, 64
  %v849 = vpop.permute.xlu0 %848
  %850 = vrot.lane.b32.xlu0 %v512, 64
  %v851 = vpop.permute.xlu0 %850
  %852 = vrot.lane.b32.xlu0 %v513, 64
  %v853 = vpop.permute.xlu0 %852
  %854 = vrot.lane.b32.xlu0 %v514, 64
  %v855 = vpop.permute.xlu0 %854
  %856 = vrot.lane.b32.xlu0 %v515, 64
  %v857 = vpop.permute.xlu0 %856
  %858 = vrot.lane.b32.xlu0 %v516, 64
  %v859 = vpop.permute.xlu0 %858
  %860 = vrot.lane.b32.xlu0 %v517, 64
  %v861 = vpop.permute.xlu0 %860
  %862 = vrot.lane.b32.xlu0 %v518, 64
  %v863 = vpop.permute.xlu0 %862
  %864 = vrot.lane.b32.xlu0 %v519, 64
  %v865 = vpop.permute.xlu0 %864
  %866 = vrot.lane.b32.xlu0 %v520, 64
  %v867 = vpop.permute.xlu0 %866
  %868 = vrot.lane.b32.xlu0 %v521, 64
  %v869 = vpop.permute.xlu0 %868
  %870 = vrot.lane.b32.xlu0 %v522, 64
  %v871 = vpop.permute.xlu0 %870
  %872 = vrot.lane.b32.xlu0 %v523, 64
  %v873 = vpop.permute.xlu0 %872
  %890 = vmatprep.subr.mxu0 0.0
  %891 = vmatpush1.msra.mxu0 %v843
  %892 = vmatprep.subr.mxu0 0.0
  %893 = vmatpush1.msra.mxu0 %v845
  %894 = vmatprep.subr.mxu0 0.0
  %895 = vmatpush1.msra.mxu0 %v847
  %896 = vmatprep.subr.mxu0 0.0
  %897 = vmatpush1.msra.mxu0 %v849
  %898 = vmatprep.subr.mxu0 0.0
  %899 = vmatpush1.msra.mxu0 %v851
  %900 = vmatprep.subr.mxu0 0.0
  %901 = vmatpush1.msra.mxu0 %v853
  %902 = vmatprep.subr.mxu0 0.0
  %903 = vmatpush1.msra.mxu0 %v855
  %904 = vmatprep.subr.mxu0 0.0
  %905 = vmatpush1.msra.mxu0 %v857
  %906 = vmatprep.subr.mxu0 0.0
  %907 = vmatpush1.msra.mxu0 %v859
  %908 = vmatprep.subr.mxu0 0.0
  %909 = vmatpush1.msra.mxu0 %v861
  %910 = vmatprep.subr.mxu0 0.0
  %911 = vmatpush1.msra.mxu0 %v863
  %912 = vmatprep.subr.mxu0 0.0
  %913 = vmatpush1.msra.mxu0 %v865
  %914 = vmatprep.subr.mxu0 0.0
  %915 = vmatpush1.msra.mxu0 %v867
  %916 = vmatprep.subr.mxu0 0.0
  %917 = vmatpush1.msra.mxu0 %v869
  %918 = vmatprep.subr.mxu0 0.0
  %919 = vmatpush1.msra.mxu0 %v871
  %920 = vmatprep.subr.mxu0 0.0
  %921 = vmatpush1.msra.mxu0 %v873
  %922 = vmatprep.subr.mxu0 0.0
  %923 = vmatpush1.msra.mxu0 0.0
  %924 = vmatprep.subr.mxu0 0.0
  %925 = vmatpush1.msra.mxu0 0.0
  %926 = vmatprep.subr.mxu0 0.0
  %927 = vmatpush1.msra.mxu0 0.0
  %928 = vmatprep.subr.mxu0 0.0
  %929 = vmatpush1.msra.mxu0 0.0
  %930 = vmatprep.subr.mxu0 0.0
  %931 = vmatpush1.msra.mxu0 0.0
  %932 = vmatprep.subr.mxu0 0.0
  %933 = vmatpush1.msra.mxu0 0.0
  %934 = vmatprep.subr.mxu0 0.0
  %935 = vmatpush1.msra.mxu0 0.0
  %936 = vmatprep.subr.mxu0 0.0
  %937 = vmatpush1.msra.mxu0 0.0
  %938 = vmatprep.subr.mxu0 0.0
  %939 = vmatpush1.msra.mxu0 0.0
  %940 = vmatprep.subr.mxu0 0.0
  %941 = vmatpush1.msra.mxu0 0.0
  %942 = vmatprep.subr.mxu0 0.0
  %943 = vmatpush1.msra.mxu0 0.0
  %944 = vmatprep.subr.mxu0 0.0
  %945 = vmatpush1.msra.mxu0 0.0
  %946 = vmatprep.subr.mxu0 0.0
  %947 = vmatpush1.msra.mxu0 0.0
  %948 = vmatprep.subr.mxu0 0.0
  %949 = vmatpush1.msra.mxu0 0.0
  %950 = vmatprep.subr.mxu0 0.0
  %951 = vmatpush1.msra.mxu0 0.0
  %952 = vmatprep.subr.mxu0 0.0
  %953 = vmatpush1.msra.mxu0 0.0
  %954 = vmatprep.mubr.f32.mxu0 0.0
  %955 = vmatmul.mubr.f32.gmra.mrb[0].mxu0 %v818
  %v956 = vpop.f32.mrb[0].mxu0
  %v957 = vadd.f32 0.0, %v956
  %v958 = vpop.f32.mrb[0].mxu0
  %959 = vmatprep.mubr.f32.mxu0 0.0
  %960 = vmatmul.mubr.f32.gmra.mrb[0].mxu0 %v819
  %v961 = vpop.f32.mrb[0].mxu0
  %v962 = vadd.f32 0.0, %v961
  %v963 = vpop.f32.mrb[0].mxu0
  %964 = vmatprep.mubr.f32.mxu0 0.0
  %965 = vmatmul.mubr.f32.gmra.mrb[0].mxu0 %v820
  %v966 = vpop.f32.mrb[0].mxu0
  %v967 = vadd.f32 0.0, %v966
  %v968 = vpop.f32.mrb[0].mxu0
  %969 = vmatprep.mubr.f32.mxu0 0.0
  %970 = vmatmul.mubr.f32.gmra.mrb[0].mxu0 %v821
  %v971 = vpop.f32.mrb[0].mxu0
  %v972 = vadd.f32 0.0, %v971
  %v973 = vpop.f32.mrb[0].mxu0
  %974 = vdwg.mxu0
  %979 = vrot.lane.b32.xlu0 %v184, 32
  %v980 = vpop.permute.xlu0 %979
  %981 = vrot.lane.b32.xlu0 %v186, 32
  %v982 = vpop.permute.xlu0 %981
  %983 = vrot.lane.b32.xlu0 %v188, 32
  %v984 = vpop.permute.xlu0 %983
  %985 = vrot.lane.b32.xlu0 %v190, 32
  %v986 = vpop.permute.xlu0 %985
  %v992 = vsel %vm209, %v957, 0
  %v995 = vsel %vm209, %v962, 0
  %v998 = vsel %vm209, %v967, 0
  %v1001 = vsel %vm209, %v972, 0
  %1003 = vmatprep.subr.mxu0 0.0
  %1004 = vmatpush1.msra.mxu0 %v980
  %1005 = vmatprep.subr.mxu0 0.0
  %1006 = vmatpush1.msra.mxu0 %v982
  %1007 = vmatprep.subr.mxu0 0.0
  %1008 = vmatpush1.msra.mxu0 %v984
  %1009 = vmatprep.subr.mxu0 0.0
  %1010 = vmatpush1.msra.mxu0 %v986
  %1011 = vmatprep.subr.mxu0 0.0
  %1012 = vmatpush1.msra.mxu0 0.0
  %1013 = vmatprep.subr.mxu0 0.0
  %1014 = vmatpush1.msra.mxu0 0.0
  %1015 = vmatprep.subr.mxu0 0.0
  %1016 = vmatpush1.msra.mxu0 0.0
  %1017 = vmatprep.subr.mxu0 0.0
  %1018 = vmatpush1.msra.mxu0 0.0
  %1019 = vmatprep.subr.mxu0 0.0
  %1020 = vmatpush1.msra.mxu0 0.0
  %1021 = vmatprep.subr.mxu0 0.0
  %1022 = vmatpush1.msra.mxu0 0.0
  %1023 = vmatprep.subr.mxu0 0.0
  %1024 = vmatpush1.msra.mxu0 0.0
  %1025 = vmatprep.subr.mxu0 0.0
  %1026 = vmatpush1.msra.mxu0 0.0
  %1027 = vmatprep.subr.mxu0 0.0
  %1028 = vmatpush1.msra.mxu0 0.0
  %1029 = vmatprep.subr.mxu0 0.0
  %1030 = vmatpush1.msra.mxu0 0.0
  %1031 = vmatprep.subr.mxu0 0.0
  %1032 = vmatpush1.msra.mxu0 0.0
  %1033 = vmatprep.subr.mxu0 0.0
  %1034 = vmatpush1.msra.mxu0 0.0
  %1035 = vmatprep.subr.mxu0 0.0
  %1036 = vmatpush1.msra.mxu0 0.0
  %1037 = vmatprep.subr.mxu0 0.0
  %1038 = vmatpush1.msra.mxu0 0.0
  %1039 = vmatprep.subr.mxu0 0.0
  %1040 = vmatpush1.msra.mxu0 0.0
  %1041 = vmatprep.subr.mxu0 0.0
  %1042 = vmatpush1.msra.mxu0 0.0
  %1043 = vmatprep.subr.mxu0 0.0
  %1044 = vmatpush1.msra.mxu0 0.0
  %1045 = vmatprep.subr.mxu0 0.0
  %1046 = vmatpush1.msra.mxu0 0.0
  %1047 = vmatprep.subr.mxu0 0.0
  %1048 = vmatpush1.msra.mxu0 0.0
  %1049 = vmatprep.subr.mxu0 0.0
  %1050 = vmatpush1.msra.mxu0 0.0
  %1051 = vmatprep.subr.mxu0 0.0
  %1052 = vmatpush1.msra.mxu0 0.0
  %1053 = vmatprep.subr.mxu0 0.0
  %1054 = vmatpush1.msra.mxu0 0.0
  %1055 = vmatprep.subr.mxu0 0.0
  %1056 = vmatpush1.msra.mxu0 0.0
  %1057 = vmatprep.subr.mxu0 0.0
  %1058 = vmatpush1.msra.mxu0 0.0
  %1059 = vmatprep.subr.mxu0 0.0
  %1060 = vmatpush1.msra.mxu0 0.0
  %1061 = vmatprep.subr.mxu0 0.0
  %1062 = vmatpush1.msra.mxu0 0.0
  %1063 = vmatprep.subr.mxu0 0.0
  %1064 = vmatpush1.msra.mxu0 0.0
  %1065 = vmatprep.subr.mxu0 0.0
  %1066 = vmatpush1.msra.mxu0 0.0
  %1067 = vmatprep.mubr.f32.mxu0 0.0
  %1068 = vmatmul.mubr.f32.gmra.mrb[0].mxu0 %v992
  %v1069 = vpop.f32.mrb[0].mxu0
  %v1070 = vadd.f32 0.0, %v1069
  %v1071 = vpop.f32.mrb[0].mxu0
  %1072 = vmatprep.mubr.f32.mxu0 0.0
  %1073 = vmatmul.mubr.f32.gmra.mrb[0].mxu0 %v995
  %v1074 = vpop.f32.mrb[0].mxu0
  %v1075 = vadd.f32 0.0, %v1074
  %v1076 = vpop.f32.mrb[0].mxu0
  %1077 = vmatprep.mubr.f32.mxu0 0.0
  %1078 = vmatmul.mubr.f32.gmra.mrb[0].mxu0 %v998
  %v1079 = vpop.f32.mrb[0].mxu0
  %v1080 = vadd.f32 0.0, %v1079
  %v1081 = vpop.f32.mrb[0].mxu0
  %1082 = vmatprep.mubr.f32.mxu0 0.0
  %1083 = vmatmul.mubr.f32.gmra.mrb[0].mxu0 %v1001
  %v1084 = vpop.f32.mrb[0].mxu0
  %v1085 = vadd.f32 0.0, %v1084
  %v1086 = vpop.f32.mrb[0].mxu0
  %1087 = vdwg.mxu0
  %v1088 = vadd.f32 %v130, %v1070
  %v1089 = vadd.f32 %v135, %v1075
  %v1090 = vadd.f32 %v140, %v1080
  %v1091 = vadd.f32 %v145, %v1085
  %v1092 = vlaneseq
  %v1093 = vshrl.u32 %v1092, 7
  %v1094 = vsub.s32 4, %v1093
  %v1095 = vrot.slane %v208, %v1094
  %v1096 = vadd.f32 %v1088, %v1095
  %v1097 = vadd.f32 %v1089, %v1095
  %v1098 = vadd.f32 %v1090, %v1095
  %v1099 = vadd.f32 %v1091, %v1095
  %v1100 = vsel %vm209, %v1096, 0.0
  %1101 = vadd.xlane.f32.xlu0 %v1100
  %v1102 = vpop.xlane.xlu0 %1101
  %v1103 = vsel %vm209, %v1097, 0.0
  %1104 = vadd.xlane.f32.xlu0 %v1103
  %v1105 = vpop.xlane.xlu0 %1104
  %v1106 = vsel %vm209, %v1098, 0.0
  %1107 = vadd.xlane.f32.xlu0 %v1106
  %v1108 = vpop.xlane.xlu0 %1107
  %v1109 = vsel %vm209, %v1099, 0.0
  %1110 = vadd.xlane.f32.xlu0 %v1109
  %v1111 = vpop.xlane.xlu0 %1110
  %v1112 = vmul.f32 %v1102, %v222
  %v1113 = vmul.f32 %v1105, %v222
  %v1114 = vmul.f32 %v1108, %v222
  %v1115 = vmul.f32 %v1111, %v222
  %v1116 = vsub.f32 %v1096, %v1112
  %v1117 = vsub.f32 %v1097, %v1113
  %v1118 = vsub.f32 %v1098, %v1114
  %v1119 = vsub.f32 %v1099, %v1115
  %v1120 = vmul.f32 %v1116, %v1116
  %v1121 = vmul.f32 %v1117, %v1117
  %v1122 = vmul.f32 %v1118, %v1118
  %v1123 = vmul.f32 %v1119, %v1119
  %v1124 = vsel %vm209, %v1120, 0.0
  %1125 = vadd.xlane.f32.xlu0 %v1124
  %v1126 = vpop.xlane.xlu0 %1125
  %v1127 = vsel %vm209, %v1121, 0.0
  %1128 = vadd.xlane.f32.xlu0 %v1127
  %v1129 = vpop.xlane.xlu0 %1128
  %v1130 = vsel %vm209, %v1122, 0.0
  %1131 = vadd.xlane.f32.xlu0 %v1130
  %v1132 = vpop.xlane.xlu0 %1131
  %v1133 = vsel %vm209, %v1123, 0.0
  %1134 = vadd.xlane.f32.xlu0 %v1133
  %v1135 = vpop.xlane.xlu0 %1134
  %v1136 = vmul.f32 %v1126, %v222
  %v1137 = vmul.f32 %v1129, %v222
  %v1138 = vmul.f32 %v1132, %v222
  %v1139 = vmul.f32 %v1135, %v222
  %v1140 = vadd.f32 %v1136, 1e-05
  %v1141 = vadd.f32 %v1137, 1e-05
  %v1142 = vadd.f32 %v1138, 1e-05
  %v1143 = vadd.f32 %v1139, 1e-05
  %v1144 = vrsqrt.pop %v1140
  %v1145 = vrsqrt.pop %v1141
  %v1146 = vrsqrt.pop %v1142
  %v1147 = vrsqrt.pop %v1143
  %v1148 = vmul.f32 %v1116, %v1144
  %v1149 = vmul.f32 %v1117, %v1145
  %v1150 = vmul.f32 %v1118, %v1146
  %v1151 = vmul.f32 %v1119, %v1147
  %v1152 = vlaneseq
  %v1153 = vshrl.u32 %v1152, 7
  %v1154 = vsub.s32 2, %v1153
  %v1155 = vrot.slane %v208, %v1154
  %v1156 = vmul.f32 %v1148, %v1155
  %v1157 = vmul.f32 %v1149, %v1155
  %v1158 = vmul.f32 %v1150, %v1155
  %v1159 = vmul.f32 %v1151, %v1155
  %v1160 = vlaneseq
  %v1161 = vshrl.u32 %v1160, 7
  %v1162 = vsub.s32 3, %v1161
  %v1163 = vrot.slane %v208, %v1162
  %v1164 = vadd.f32 %v1156, %v1163
  %v1165 = vadd.f32 %v1157, %v1163
  %v1166 = vadd.f32 %v1158, %v1163
  %v1167 = vadd.f32 %v1159, %v1163
  %v1168 = vlaneseq
  %v1169 = vshrl.u32 %v1168, 7
  %v1170 = vsub.s32 7, %v1169
  %v1171 = vrot.slane %v208, %v1170
  %v1173 = vsel %vm209, %v1164, 0
  %v1176 = vsel %vm209, %v1165, 0
  %v1179 = vsel %vm209, %v1166, 0
  %v1182 = vsel %vm209, %v1167, 0
  %1184 = vmatprep.subr.mxu0 0.0
  %1185 = vmatpush1.msra.mxu0 %v185
  %1186 = vmatprep.subr.mxu0 0.0
  %1187 = vmatpush1.msra.mxu0 %v187
  %1188 = vmatprep.subr.mxu0 0.0
  %1189 = vmatpush1.msra.mxu0 %v189
  %1190 = vmatprep.subr.mxu0 0.0
  %1191 = vmatpush1.msra.mxu0 %v191
  %1192 = vmatprep.subr.mxu0 0.0
  %1193 = vmatpush1.msra.mxu0 0.0
  %1194 = vmatprep.subr.mxu0 0.0
  %1195 = vmatpush1.msra.mxu0 0.0
  %1196 = vmatprep.subr.mxu0 0.0
  %1197 = vmatpush1.msra.mxu0 0.0
  %1198 = vmatprep.subr.mxu0 0.0
  %1199 = vmatpush1.msra.mxu0 0.0
  %1200 = vmatprep.subr.mxu0 0.0
  %1201 = vmatpush1.msra.mxu0 0.0
  %1202 = vmatprep.subr.mxu0 0.0
  %1203 = vmatpush1.msra.mxu0 0.0
  %1204 = vmatprep.subr.mxu0 0.0
  %1205 = vmatpush1.msra.mxu0 0.0
  %1206 = vmatprep.subr.mxu0 0.0
  %1207 = vmatpush1.msra.mxu0 0.0
  %1208 = vmatprep.subr.mxu0 0.0
  %1209 = vmatpush1.msra.mxu0 0.0
  %1210 = vmatprep.subr.mxu0 0.0
  %1211 = vmatpush1.msra.mxu0 0.0
  %1212 = vmatprep.subr.mxu0 0.0
  %1213 = vmatpush1.msra.mxu0 0.0
  %1214 = vmatprep.subr.mxu0 0.0
  %1215 = vmatpush1.msra.mxu0 0.0
  %1216 = vmatprep.subr.mxu0 0.0
  %1217 = vmatpush1.msra.mxu0 0.0
  %1218 = vmatprep.subr.mxu0 0.0
  %1219 = vmatpush1.msra.mxu0 0.0
  %1220 = vmatprep.subr.mxu0 0.0
  %1221 = vmatpush1.msra.mxu0 0.0
  %1222 = vmatprep.subr.mxu0 0.0
  %1223 = vmatpush1.msra.mxu0 0.0
  %1224 = vmatprep.subr.mxu0 0.0
  %1225 = vmatpush1.msra.mxu0 0.0
  %1226 = vmatprep.subr.mxu0 0.0
  %1227 = vmatpush1.msra.mxu0 0.0
  %1228 = vmatprep.subr.mxu0 0.0
  %1229 = vmatpush1.msra.mxu0 0.0
  %1230 = vmatprep.subr.mxu0 0.0
  %1231 = vmatpush1.msra.mxu0 0.0
  %1232 = vmatprep.subr.mxu0 0.0
  %1233 = vmatpush1.msra.mxu0 0.0
  %1234 = vmatprep.subr.mxu0 0.0
  %1235 = vmatpush1.msra.mxu0 0.0
  %1236 = vmatprep.subr.mxu0 0.0
  %1237 = vmatpush1.msra.mxu0 0.0
  %1238 = vmatprep.subr.mxu0 0.0
  %1239 = vmatpush1.msra.mxu0 0.0
  %1240 = vmatprep.subr.mxu0 0.0
  %1241 = vmatpush1.msra.mxu0 0.0
  %1242 = vmatprep.subr.mxu0 0.0
  %1243 = vmatpush1.msra.mxu0 0.0
  %1244 = vmatprep.subr.mxu0 0.0
  %1245 = vmatpush1.msra.mxu0 0.0
  %1246 = vmatprep.subr.mxu0 0.0
  %1247 = vmatpush1.msra.mxu0 0.0
  %1248 = vmatprep.mubr.f32.mxu0 0.0
  %1249 = vmatmul.mubr.f32.gmra.mrb[0].mxu0 %v1173
  %v1250 = vpop.f32.mrb[0].mxu0
  %v1251 = vadd.f32 %v1171, %v1250
  %v1252 = vpop.f32.mrb[0].mxu0
  %1253 = vmatprep.mubr.f32.mxu0 0.0
  %1254 = vmatmul.mubr.f32.gmra.mrb[0].mxu0 %v1176
  %v1255 = vpop.f32.mrb[0].mxu0
  %v1256 = vadd.f32 %v1171, %v1255
  %v1257 = vpop.f32.mrb[0].mxu0
  %1258 = vmatprep.mubr.f32.mxu0 0.0
  %1259 = vmatmul.mubr.f32.gmra.mrb[0].mxu0 %v1179
  %v1260 = vpop.f32.mrb[0].mxu0
  %v1261 = vadd.f32 %v1171, %v1260
  %v1262 = vpop.f32.mrb[0].mxu0
  %1263 = vmatprep.mubr.f32.mxu0 0.0
  %1264 = vmatmul.mubr.f32.gmra.mrb[0].mxu0 %v1182
  %v1265 = vpop.f32.mrb[0].mxu0
  %v1266 = vadd.f32 %v1171, %v1265
  %v1267 = vpop.f32.mrb[0].mxu0
  %1268 = vdwg.mxu0
  %v1269 = vmul.f32 %v1251, 0.5
  %v1270 = vmul.f32 %v1256, 0.5
  %v1271 = vmul.f32 %v1261, 0.5
  %v1272 = vmul.f32 %v1266, 0.5
  %v1273 = vmul.f32 %v1251, 0.70710677
  %v1274 = vmul.f32 %v1256, 0.70710677
  %v1275 = vmul.f32 %v1261, 0.70710677
  %v1276 = vmul.f32 %v1266, 0.70710677
  %vm1277 = vcmp.ge.f32.partialorder %v1273, 0.0
  %vm1278 = vcmp.ge.f32.partialorder %v1274, 0.0
  %vm1279 = vcmp.ge.f32.partialorder %v1275, 0.0
  %vm1280 = vcmp.ge.f32.partialorder %v1276, 0.0
  %v1281 = vsel %vm1277, 1.0, -1.0
  %v1282 = vsel %vm1278, 1.0, -1.0
  %v1283 = vsel %vm1279, 1.0, -1.0
  %v1284 = vsel %vm1280, 1.0, -1.0
  %v1285 = vand.u32 2147483647, %v1273
  %v1286 = vand.u32 2147483647, %v1274
  %v1287 = vand.u32 2147483647, %v1275
  %v1288 = vand.u32 2147483647, %v1276
  %v1289 = vmul.f32 %v1285, 0.3275911
  %v1290 = vmul.f32 %v1286, 0.3275911
  %v1291 = vmul.f32 %v1287, 0.3275911
  %v1292 = vmul.f32 %v1288, 0.3275911
  %v1293 = vadd.f32 %v1289, 1.0
  %v1294 = vadd.f32 %v1290, 1.0
  %v1295 = vadd.f32 %v1291, 1.0
  %v1296 = vadd.f32 %v1292, 1.0
  %v1297 = vrcp.pop %v1293
  %v1298 = vmul.f32 1.0, %v1297
  %v1299 = vrcp.pop %v1294
  %v1300 = vmul.f32 1.0, %v1299
  %v1301 = vrcp.pop %v1295
  %v1302 = vmul.f32 1.0, %v1301
  %v1303 = vrcp.pop %v1296
  %v1304 = vmul.f32 1.0, %v1303
  %v1305 = vmul.f32 %v1298, 1.0614054
  %v1306 = vmul.f32 %v1300, 1.0614054
  %v1307 = vmul.f32 %v1302, 1.0614054
  %v1308 = vmul.f32 %v1304, 1.0614054
  %v1309 = vadd.f32 %v1305, -1.4531521
  %v1310 = vadd.f32 %v1306, -1.4531521
  %v1311 = vadd.f32 %v1307, -1.4531521
  %v1312 = vadd.f32 %v1308, -1.4531521
  %v1313 = vmul.f32 %v1309, %v1298
  %v1314 = vmul.f32 %v1310, %v1300
  %v1315 = vmul.f32 %v1311, %v1302
  %v1316 = vmul.f32 %v1312, %v1304
  %v1317 = vadd.f32 %v1313, 1.4214138
  %v1318 = vadd.f32 %v1314, 1.4214138
  %v1319 = vadd.f32 %v1315, 1.4214138
  %v1320 = vadd.f32 %v1316, 1.4214138
  %v1321 = vmul.f32 %v1317, %v1298
  %v1322 = vmul.f32 %v1318, %v1300
  %v1323 = vmul.f32 %v1319, %v1302
  %v1324 = vmul.f32 %v1320, %v1304
  %v1325 = vadd.f32 %v1321, -0.28449672
  %v1326 = vadd.f32 %v1322, -0.28449672
  %v1327 = vadd.f32 %v1323, -0.28449672
  %v1328 = vadd.f32 %v1324, -0.28449672
  %v1329 = vmul.f32 %v1325, %v1298
  %v1330 = vmul.f32 %v1326, %v1300
  %v1331 = vmul.f32 %v1327, %v1302
  %v1332 = vmul.f32 %v1328, %v1304
  %v1333 = vadd.f32 %v1329, 0.2548296
  %v1334 = vadd.f32 %v1330, 0.2548296
  %v1335 = vadd.f32 %v1331, 0.2548296
  %v1336 = vadd.f32 %v1332, 0.2548296
  %v1337 = vmul.f32 %v1333, %v1298
  %v1338 = vmul.f32 %v1334, %v1300
  %v1339 = vmul.f32 %v1335, %v1302
  %v1340 = vmul.f32 %v1336, %v1304
  %v1341 = vsub.f32 0.0, %v1285
  %v1342 = vsub.f32 0.0, %v1286
  %v1343 = vsub.f32 0.0, %v1287
  %v1344 = vsub.f32 0.0, %v1288
  %v1345 = vmul.f32 %v1341, %v1285
  %v1346 = vmul.f32 %v1342, %v1286
  %v1347 = vmul.f32 %v1343, %v1287
  %v1348 = vmul.f32 %v1344, %v1288
  %v1349 = vmul.f32 %v1345, 1.442695
  %v1350 = vpow.pop %v1349
  %v1351 = vmul.f32 %v1346, 1.442695
  %v1352 = vpow.pop %v1351
  %v1353 = vmul.f32 %v1347, 1.442695
  %v1354 = vpow.pop %v1353
  %v1355 = vmul.f32 %v1348, 1.442695
  %v1356 = vpow.pop %v1355
  %v1357 = vmul.f32 %v1337, %v1350
  %v1358 = vmul.f32 %v1338, %v1352
  %v1359 = vmul.f32 %v1339, %v1354
  %v1360 = vmul.f32 %v1340, %v1356
  %v1361 = vsub.f32 1.0, %v1357
  %v1362 = vsub.f32 1.0, %v1358
  %v1363 = vsub.f32 1.0, %v1359
  %v1364 = vsub.f32 1.0, %v1360
  %v1365 = vmul.f32 %v1281, %v1361
  %v1366 = vmul.f32 %v1282, %v1362
  %v1367 = vmul.f32 %v1283, %v1363
  %v1368 = vmul.f32 %v1284, %v1364
  %v1369 = vadd.f32 %v1365, 1.0
  %v1370 = vadd.f32 %v1366, 1.0
  %v1371 = vadd.f32 %v1367, 1.0
  %v1372 = vadd.f32 %v1368, 1.0
  %v1373 = vmul.f32 %v1269, %v1369
  %v1374 = vmul.f32 %v1270, %v1370
  %v1375 = vmul.f32 %v1271, %v1371
  %v1376 = vmul.f32 %v1272, %v1372
  %1377 = vmatprep.subr.mxu0 0.0
  %1378 = vmatpush1.msra.mxu0 %v192
  %1379 = vmatprep.subr.mxu0 0.0
  %1380 = vmatpush1.msra.mxu0 %v193
  %1381 = vmatprep.subr.mxu0 0.0
  %1382 = vmatpush1.msra.mxu0 %v194
  %1383 = vmatprep.subr.mxu0 0.0
  %1384 = vmatpush1.msra.mxu0 %v195
  %1385 = vmatprep.subr.mxu0 0.0
  %1386 = vmatpush1.msra.mxu0 %v196
  %1387 = vmatprep.subr.mxu0 0.0
  %1388 = vmatpush1.msra.mxu0 %v197
  %1389 = vmatprep.subr.mxu0 0.0
  %1390 = vmatpush1.msra.mxu0 %v198
  %1391 = vmatprep.subr.mxu0 0.0
  %1392 = vmatpush1.msra.mxu0 %v199
  %1393 = vmatprep.subr.mxu0 0.0
  %1394 = vmatpush1.msra.mxu0 %v200
  %1395 = vmatprep.subr.mxu0 0.0
  %1396 = vmatpush1.msra.mxu0 %v201
  %1397 = vmatprep.subr.mxu0 0.0
  %1398 = vmatpush1.msra.mxu0 %v202
  %1399 = vmatprep.subr.mxu0 0.0
  %1400 = vmatpush1.msra.mxu0 %v203
  %1401 = vmatprep.subr.mxu0 0.0
  %1402 = vmatpush1.msra.mxu0 %v204
  %1403 = vmatprep.subr.mxu0 0.0
  %1404 = vmatpush1.msra.mxu0 %v205
  %1405 = vmatprep.subr.mxu0 0.0
  %1406 = vmatpush1.msra.mxu0 %v206
  %1407 = vmatprep.subr.mxu0 0.0
  %1408 = vmatpush1.msra.mxu0 %v207
  %1409 = vmatprep.subr.mxu0 0.0
  %1410 = vmatpush1.msra.mxu0 0.0
  %1411 = vmatprep.subr.mxu0 0.0
  %1412 = vmatpush1.msra.mxu0 0.0
  %1413 = vmatprep.subr.mxu0 0.0
  %1414 = vmatpush1.msra.mxu0 0.0
  %1415 = vmatprep.subr.mxu0 0.0
  %1416 = vmatpush1.msra.mxu0 0.0
  %1417 = vmatprep.subr.mxu0 0.0
  %1418 = vmatpush1.msra.mxu0 0.0
  %1419 = vmatprep.subr.mxu0 0.0
  %1420 = vmatpush1.msra.mxu0 0.0
  %1421 = vmatprep.subr.mxu0 0.0
  %1422 = vmatpush1.msra.mxu0 0.0
  %1423 = vmatprep.subr.mxu0 0.0
  %1424 = vmatpush1.msra.mxu0 0.0
  %1425 = vmatprep.subr.mxu0 0.0
  %1426 = vmatpush1.msra.mxu0 0.0
  %1427 = vmatprep.subr.mxu0 0.0
  %1428 = vmatpush1.msra.mxu0 0.0
  %1429 = vmatprep.subr.mxu0 0.0
  %1430 = vmatpush1.msra.mxu0 0.0
  %1431 = vmatprep.subr.mxu0 0.0
  %1432 = vmatpush1.msra.mxu0 0.0
  %1433 = vmatprep.subr.mxu0 0.0
  %1434 = vmatpush1.msra.mxu0 0.0
  %1435 = vmatprep.subr.mxu0 0.0
  %1436 = vmatpush1.msra.mxu0 0.0
  %1437 = vmatprep.subr.mxu0 0.0
  %1438 = vmatpush1.msra.mxu0 0.0
  %1439 = vmatprep.subr.mxu0 0.0
  %1440 = vmatpush1.msra.mxu0 0.0
  %1441 = vmatprep.mubr.f32.mxu0 0.0
  %1442 = vmatmul.mubr.f32.gmra.mrb[0].mxu0 %v1373
  %v1443 = vpop.f32.mrb[0].mxu0
  %v1444 = vadd.f32 0.0, %v1443
  %v1445 = vpop.f32.mrb[0].mxu0
  %1446 = vmatprep.mubr.f32.mxu0 0.0
  %1447 = vmatmul.mubr.f32.gmra.mrb[0].mxu0 %v1374
  %v1448 = vpop.f32.mrb[0].mxu0
  %v1449 = vadd.f32 0.0, %v1448
  %v1450 = vpop.f32.mrb[0].mxu0
  %1451 = vmatprep.mubr.f32.mxu0 0.0
  %1452 = vmatmul.mubr.f32.gmra.mrb[0].mxu0 %v1375
  %v1453 = vpop.f32.mrb[0].mxu0
  %v1454 = vadd.f32 0.0, %v1453
  %v1455 = vpop.f32.mrb[0].mxu0
  %1456 = vmatprep.mubr.f32.mxu0 0.0
  %1457 = vmatmul.mubr.f32.gmra.mrb[0].mxu0 %v1376
  %v1458 = vpop.f32.mrb[0].mxu0
  %v1459 = vadd.f32 0.0, %v1458
  %v1460 = vpop.f32.mrb[0].mxu0
  %1461 = vdwg.mxu0
  %v1462 = vadd.f32 %v1096, %v1444
  %v1463 = vadd.f32 %v1097, %v1449
  %v1464 = vadd.f32 %v1098, %v1454
  %v1465 = vadd.f32 %v1099, %v1459
  %v1466 = vlaneseq
  %v1467 = vshrl.u32 %v1466, 7
  %v1468 = vsub.s32 5, %v1467
  %v1469 = vrot.slane %v208, %v1468
  %v1470 = vadd.f32 %v1462, %v1469
  %v1471 = vadd.f32 %v1463, %v1469
  %v1472 = vadd.f32 %v1464, %v1469
  %v1473 = vadd.f32 %v1465, %v1469
  %s1474 = scalar_lea.vmem %s7, 64
  %v1475 = vld [vmem:[%s1474] sm:$0xff]
  %v1476 = vld [vmem:[%s1474 + $0x8] sm:$0xff]
  %v1477 = vld [vmem:[%s1474 + $0x10] sm:$0xff]
  %v1478 = vld [vmem:[%s1474 + $0x18] sm:$0xff]
  %v1479 = vld [vmem:[%s1474 + $0x20] sm:$0xff]
  %v1480 = vld [vmem:[%s1474 + $0x28] sm:$0xff]
  %v1481 = vld [vmem:[%s1474 + $0x30] sm:$0xff]
  %v1482 = vld [vmem:[%s1474 + $0x38] sm:$0xff]
  %s1483 = scalar_lea.vmem %s8, 128
  %v1484 = vld [vmem:[%s1483] sm:$0xff]
  %v1485 = vld [vmem:[%s1483 + $0x8] sm:$0xff]
  %v1486 = vld [vmem:[%s1483 + $0x10] sm:$0xff]
  %v1487 = vld [vmem:[%s1483 + $0x18] sm:$0xff]
  %v1488 = vld [vmem:[%s1483 + $0x20] sm:$0xff]
  %v1489 = vld [vmem:[%s1483 + $0x28] sm:$0xff]
  %v1490 = vld [vmem:[%s1483 + $0x30] sm:$0xff]
  %v1491 = vld [vmem:[%s1483 + $0x38] sm:$0xff]
  %v1492 = vld [vmem:[%s1483 + $0x40] sm:$0xff]
  %v1493 = vld [vmem:[%s1483 + $0x48] sm:$0xff]
  %v1494 = vld [vmem:[%s1483 + $0x50] sm:$0xff]
  %v1495 = vld [vmem:[%s1483 + $0x58] sm:$0xff]
  %v1496 = vld [vmem:[%s1483 + $0x60] sm:$0xff]
  %v1497 = vld [vmem:[%s1483 + $0x68] sm:$0xff]
  %v1498 = vld [vmem:[%s1483 + $0x70] sm:$0xff]
  %v1499 = vld [vmem:[%s1483 + $0x78] sm:$0xff]
  %s1500 = scalar_lea.vmem %s9, 8
  %v1501 = vld [vmem:[%s1500] sm:$0xff]
  %v1502 = vsel %vm209, %v1470, 0.0
  %1503 = vadd.xlane.f32.xlu0 %v1502
  %v1504 = vpop.xlane.xlu0 %1503
  %v1505 = vsel %vm209, %v1471, 0.0
  %1506 = vadd.xlane.f32.xlu0 %v1505
  %v1507 = vpop.xlane.xlu0 %1506
  %v1508 = vsel %vm209, %v1472, 0.0
  %1509 = vadd.xlane.f32.xlu0 %v1508
  %v1510 = vpop.xlane.xlu0 %1509
  %v1511 = vsel %vm209, %v1473, 0.0
  %1512 = vadd.xlane.f32.xlu0 %v1511
  %v1513 = vpop.xlane.xlu0 %1512
  %v1514 = vmul.f32 %v1504, %v222
  %v1515 = vmul.f32 %v1507, %v222
  %v1516 = vmul.f32 %v1510, %v222
  %v1517 = vmul.f32 %v1513, %v222
  %v1518 = vsub.f32 %v1470, %v1514
  %v1519 = vsub.f32 %v1471, %v1515
  %v1520 = vsub.f32 %v1472, %v1516
  %v1521 = vsub.f32 %v1473, %v1517
  %v1522 = vmul.f32 %v1518, %v1518
  %v1523 = vmul.f32 %v1519, %v1519
  %v1524 = vmul.f32 %v1520, %v1520
  %v1525 = vmul.f32 %v1521, %v1521
  %v1526 = vsel %vm209, %v1522, 0.0
  %1527 = vadd.xlane.f32.xlu0 %v1526
  %v1528 = vpop.xlane.xlu0 %1527
  %v1529 = vsel %vm209, %v1523, 0.0
  %1530 = vadd.xlane.f32.xlu0 %v1529
  %v1531 = vpop.xlane.xlu0 %1530
  %v1532 = vsel %vm209, %v1524, 0.0
  %1533 = vadd.xlane.f32.xlu0 %v1532
  %v1534 = vpop.xlane.xlu0 %1533
  %v1535 = vsel %vm209, %v1525, 0.0
  %1536 = vadd.xlane.f32.xlu0 %v1535
  %v1537 = vpop.xlane.xlu0 %1536
  %v1538 = vmul.f32 %v1528, %v222
  %v1539 = vmul.f32 %v1531, %v222
  %v1540 = vmul.f32 %v1534, %v222
  %v1541 = vmul.f32 %v1537, %v222
  %v1542 = vadd.f32 %v1538, 1e-05
  %v1543 = vadd.f32 %v1539, 1e-05
  %v1544 = vadd.f32 %v1540, 1e-05
  %v1545 = vadd.f32 %v1541, 1e-05
  %v1546 = vrsqrt.pop %v1542
  %v1547 = vrsqrt.pop %v1543
  %v1548 = vrsqrt.pop %v1544
  %v1549 = vrsqrt.pop %v1545
  %v1550 = vmul.f32 %v1518, %v1546
  %v1551 = vmul.f32 %v1519, %v1547
  %v1552 = vmul.f32 %v1520, %v1548
  %v1553 = vmul.f32 %v1521, %v1549
  %v1554 = vlaneseq
  %v1555 = vshrl.u32 %v1554, 7
  %v1556 = vsub.s32 0, %v1555
  %v1557 = vrot.slane %v1501, %v1556
  %v1558 = vmul.f32 %v1550, %v1557
  %v1559 = vmul.f32 %v1551, %v1557
  %v1560 = vmul.f32 %v1552, %v1557
  %v1561 = vmul.f32 %v1553, %v1557
  %v1562 = vlaneseq
  %v1563 = vshrl.u32 %v1562, 7
  %v1564 = vsub.s32 1, %v1563
  %v1565 = vrot.slane %v1501, %v1564
  %v1566 = vadd.f32 %v1558, %v1565
  %v1567 = vadd.f32 %v1559, %v1565
  %v1568 = vadd.f32 %v1560, %v1565
  %v1569 = vadd.f32 %v1561, %v1565
  %v1570 = vlaneseq
  %v1571 = vshrl.u32 %v1570, 7
  %v1572 = vsub.s32 6, %v1571
  %v1573 = vrot.slane %v1501, %v1572
  %v1575 = vsel %vm209, %v1566, 0
  %v1578 = vsel %vm209, %v1567, 0
  %v1581 = vsel %vm209, %v1568, 0
  %v1584 = vsel %vm209, %v1569, 0
  %1586 = vmatprep.subr.mxu0 0.0
  %1587 = vmatpush1.msra.mxu0 %v1475
  %1588 = vmatprep.subr.mxu0 0.0
  %1589 = vmatpush1.msra.mxu0 %v1477
  %1590 = vmatprep.subr.mxu0 0.0
  %1591 = vmatpush1.msra.mxu0 %v1479
  %1592 = vmatprep.subr.mxu0 0.0
  %1593 = vmatpush1.msra.mxu0 %v1481
  %1594 = vmatprep.subr.mxu0 0.0
  %1595 = vmatpush1.msra.mxu0 0.0
  %1596 = vmatprep.subr.mxu0 0.0
  %1597 = vmatpush1.msra.mxu0 0.0
  %1598 = vmatprep.subr.mxu0 0.0
  %1599 = vmatpush1.msra.mxu0 0.0
  %1600 = vmatprep.subr.mxu0 0.0
  %1601 = vmatpush1.msra.mxu0 0.0
  %1602 = vmatprep.subr.mxu0 0.0
  %1603 = vmatpush1.msra.mxu0 0.0
  %1604 = vmatprep.subr.mxu0 0.0
  %1605 = vmatpush1.msra.mxu0 0.0
  %1606 = vmatprep.subr.mxu0 0.0
  %1607 = vmatpush1.msra.mxu0 0.0
  %1608 = vmatprep.subr.mxu0 0.0
  %1609 = vmatpush1.msra.mxu0 0.0
  %1610 = vmatprep.subr.mxu0 0.0
  %1611 = vmatpush1.msra.mxu0 0.0
  %1612 = vmatprep.subr.mxu0 0.0
  %1613 = vmatpush1.msra.mxu0 0.0
  %1614 = vmatprep.subr.mxu0 0.0
  %1615 = vmatpush1.msra.mxu0 0.0
  %1616 = vmatprep.subr.mxu0 0.0
  %1617 = vmatpush1.msra.mxu0 0.0
  %1618 = vmatprep.subr.mxu0 0.0
  %1619 = vmatpush1.msra.mxu0 0.0
  %1620 = vmatprep.subr.mxu0 0.0
  %1621 = vmatpush1.msra.mxu0 0.0
  %1622 = vmatprep.subr.mxu0 0.0
  %1623 = vmatpush1.msra.mxu0 0.0
  %1624 = vmatprep.subr.mxu0 0.0
  %1625 = vmatpush1.msra.mxu0 0.0
  %1626 = vmatprep.subr.mxu0 0.0
  %1627 = vmatpush1.msra.mxu0 0.0
  %1628 = vmatprep.subr.mxu0 0.0
  %1629 = vmatpush1.msra.mxu0 0.0
  %1630 = vmatprep.subr.mxu0 0.0
  %1631 = vmatpush1.msra.mxu0 0.0
  %1632 = vmatprep.subr.mxu0 0.0
  %1633 = vmatpush1.msra.mxu0 0.0
  %1634 = vmatprep.subr.mxu0 0.0
  %1635 = vmatpush1.msra.mxu0 0.0
  %1636 = vmatprep.subr.mxu0 0.0
  %1637 = vmatpush1.msra.mxu0 0.0
  %1638 = vmatprep.subr.mxu0 0.0
  %1639 = vmatpush1.msra.mxu0 0.0
  %1640 = vmatprep.subr.mxu0 0.0
  %1641 = vmatpush1.msra.mxu0 0.0
  %1642 = vmatprep.subr.mxu0 0.0
  %1643 = vmatpush1.msra.mxu0 0.0
  %1644 = vmatprep.subr.mxu0 0.0
  %1645 = vmatpush1.msra.mxu0 0.0
  %1646 = vmatprep.subr.mxu0 0.0
  %1647 = vmatpush1.msra.mxu0 0.0
  %1648 = vmatprep.subr.mxu0 0.0
  %1649 = vmatpush1.msra.mxu0 0.0
  %1650 = vmatprep.mubr.f32.mxu0 0.0
  %1651 = vmatmul.mubr.f32.gmra.mrb[0].mxu0 %v1575
  %v1652 = vpop.f32.mrb[0].mxu0
  %v1653 = vadd.f32 %v1573, %v1652
  %v1654 = vpop.f32.mrb[0].mxu0
  %1655 = vmatprep.mubr.f32.mxu0 0.0
  %1656 = vmatmul.mubr.f32.gmra.mrb[0].mxu0 %v1578
  %v1657 = vpop.f32.mrb[0].mxu0
  %v1658 = vadd.f32 %v1573, %v1657
  %v1659 = vpop.f32.mrb[0].mxu0
  %1660 = vmatprep.mubr.f32.mxu0 0.0
  %1661 = vmatmul.mubr.f32.gmra.mrb[0].mxu0 %v1581
  %v1662 = vpop.f32.mrb[0].mxu0
  %v1663 = vadd.f32 %v1573, %v1662
  %v1664 = vpop.f32.mrb[0].mxu0
  %1665 = vmatprep.mubr.f32.mxu0 0.0
  %1666 = vmatmul.mubr.f32.gmra.mrb[0].mxu0 %v1584
  %v1667 = vpop.f32.mrb[0].mxu0
  %v1668 = vadd.f32 %v1573, %v1667
  %v1669 = vpop.f32.mrb[0].mxu0
  %1670 = vdwg.mxu0
  %v1671 = vmul.f32 %v1653, %v397
  %v1672 = vmul.f32 %v1658, %v399
  %v1673 = vmul.f32 %v1663, %v401
  %v1674 = vmul.f32 %v1668, %v403
  %v1675 = vmul.f32 %v1653, %v405
  %v1676 = vmul.f32 %v1658, %v407
  %v1677 = vmul.f32 %v1663, %v409
  %v1678 = vmul.f32 %v1668, %v411
  %v1679 = vmul.f32 %v1653, %v413
  %v1680 = vmul.f32 %v1658, %v415
  %v1681 = vmul.f32 %v1663, %v417
  %v1682 = vmul.f32 %v1668, %v419
  %v1683 = vmul.f32 %v1653, %v421
  %v1684 = vmul.f32 %v1658, %v423
  %v1685 = vmul.f32 %v1663, %v425
  %v1686 = vmul.f32 %v1668, %v427
  %v1687 = vmul.f32 %v1653, %v461
  %v1688 = vmul.f32 %v1658, %v463
  %v1689 = vmul.f32 %v1663, %v465
  %v1690 = vmul.f32 %v1668, %v467
  %v1691 = vmul.f32 %v1653, %v469
  %v1692 = vmul.f32 %v1658, %v471
  %v1693 = vmul.f32 %v1663, %v473
  %v1694 = vmul.f32 %v1668, %v475
  %v1695 = vmul.f32 %v1653, %v477
  %v1696 = vmul.f32 %v1658, %v479
  %v1697 = vmul.f32 %v1663, %v481
  %v1698 = vmul.f32 %v1668, %v483
  %v1699 = vmul.f32 %v1653, %v485
  %v1700 = vmul.f32 %v1658, %v487
  %v1701 = vmul.f32 %v1663, %v489
  %v1702 = vmul.f32 %v1668, %v491
  %1719 = vrot.lane.b32.xlu0 %v1671, 96
  %v1720 = vpop.permute.xlu0 %1719
  %1721 = vrot.lane.b32.xlu0 %v1672, 96
  %v1722 = vpop.permute.xlu0 %1721
  %1723 = vrot.lane.b32.xlu0 %v1673, 96
  %v1724 = vpop.permute.xlu0 %1723
  %1725 = vrot.lane.b32.xlu0 %v1674, 96
  %v1726 = vpop.permute.xlu0 %1725
  %1727 = vrot.lane.b32.xlu0 %v1675, 96
  %v1728 = vpop.permute.xlu0 %1727
  %1729 = vrot.lane.b32.xlu0 %v1676, 96
  %v1730 = vpop.permute.xlu0 %1729
  %1731 = vrot.lane.b32.xlu0 %v1677, 96
  %v1732 = vpop.permute.xlu0 %1731
  %1733 = vrot.lane.b32.xlu0 %v1678, 96
  %v1734 = vpop.permute.xlu0 %1733
  %1735 = vrot.lane.b32.xlu0 %v1679, 96
  %v1736 = vpop.permute.xlu0 %1735
  %1737 = vrot.lane.b32.xlu0 %v1680, 96
  %v1738 = vpop.permute.xlu0 %1737
  %1739 = vrot.lane.b32.xlu0 %v1681, 96
  %v1740 = vpop.permute.xlu0 %1739
  %1741 = vrot.lane.b32.xlu0 %v1682, 96
  %v1742 = vpop.permute.xlu0 %1741
  %1743 = vrot.lane.b32.xlu0 %v1683, 96
  %v1744 = vpop.permute.xlu0 %1743
  %1745 = vrot.lane.b32.xlu0 %v1684, 96
  %v1746 = vpop.permute.xlu0 %1745
  %1747 = vrot.lane.b32.xlu0 %v1685, 96
  %v1748 = vpop.permute.xlu0 %1747
  %1749 = vrot.lane.b32.xlu0 %v1686, 96
  %v1750 = vpop.permute.xlu0 %1749
  %v1752 = vsel %vm209, %v1653, 0
  %v1755 = vsel %vm209, %v1658, 0
  %v1758 = vsel %vm209, %v1663, 0
  %v1761 = vsel %vm209, %v1668, 0
  %v1763 = vsel %vm209, %v1720, 0
  %v1765 = vsel %vm209, %v1722, 0
  %v1767 = vsel %vm209, %v1724, 0
  %v1769 = vsel %vm209, %v1726, 0
  %v1771 = vsel %vm209, %v1728, 0
  %v1773 = vsel %vm209, %v1730, 0
  %v1775 = vsel %vm209, %v1732, 0
  %v1777 = vsel %vm209, %v1734, 0
  %v1779 = vsel %vm209, %v1736, 0
  %v1781 = vsel %vm209, %v1738, 0
  %v1783 = vsel %vm209, %v1740, 0
  %v1785 = vsel %vm209, %v1742, 0
  %v1787 = vsel %vm209, %v1744, 0
  %v1789 = vsel %vm209, %v1746, 0
  %v1791 = vsel %vm209, %v1748, 0
  %v1793 = vsel %vm209, %v1750, 0
  %1795 = vmatprep.subr.mxu0 0.0
  %1796 = vmatpush1.xpose.msra.mxu0 %v1763
  %1797 = vmatprep.subr.mxu0 0.0
  %1798 = vmatpush1.xpose.msra.mxu0 %v1765
  %1799 = vmatprep.subr.mxu0 0.0
  %1800 = vmatpush1.xpose.msra.mxu0 %v1767
  %1801 = vmatprep.subr.mxu0 0.0
  %1802 = vmatpush1.xpose.msra.mxu0 %v1769
  %1803 = vmatprep.subr.mxu0 0.0
  %1804 = vmatpush1.xpose.msra.mxu0 %v1771
  %1805 = vmatprep.subr.mxu0 0.0
  %1806 = vmatpush1.xpose.msra.mxu0 %v1773
  %1807 = vmatprep.subr.mxu0 0.0
  %1808 = vmatpush1.xpose.msra.mxu0 %v1775
  %1809 = vmatprep.subr.mxu0 0.0
  %1810 = vmatpush1.xpose.msra.mxu0 %v1777
  %1811 = vmatprep.subr.mxu0 0.0
  %1812 = vmatpush1.xpose.msra.mxu0 %v1779
  %1813 = vmatprep.subr.mxu0 0.0
  %1814 = vmatpush1.xpose.msra.mxu0 %v1781
  %1815 = vmatprep.subr.mxu0 0.0
  %1816 = vmatpush1.xpose.msra.mxu0 %v1783
  %1817 = vmatprep.subr.mxu0 0.0
  %1818 = vmatpush1.xpose.msra.mxu0 %v1785
  %1819 = vmatprep.subr.mxu0 0.0
  %1820 = vmatpush1.xpose.msra.mxu0 %v1787
  %1821 = vmatprep.subr.mxu0 0.0
  %1822 = vmatpush1.xpose.msra.mxu0 %v1789
  %1823 = vmatprep.subr.mxu0 0.0
  %1824 = vmatpush1.xpose.msra.mxu0 %v1791
  %1825 = vmatprep.subr.mxu0 0.0
  %1826 = vmatpush1.xpose.msra.mxu0 %v1793
  %1827 = vmatprep.subr.mxu0 0.0
  %1828 = vmatpush1.xpose.msra.mxu0 0.0
  %1829 = vmatprep.subr.mxu0 0.0
  %1830 = vmatpush1.xpose.msra.mxu0 0.0
  %1831 = vmatprep.subr.mxu0 0.0
  %1832 = vmatpush1.xpose.msra.mxu0 0.0
  %1833 = vmatprep.subr.mxu0 0.0
  %1834 = vmatpush1.xpose.msra.mxu0 0.0
  %1835 = vmatprep.subr.mxu0 0.0
  %1836 = vmatpush1.xpose.msra.mxu0 0.0
  %1837 = vmatprep.subr.mxu0 0.0
  %1838 = vmatpush1.xpose.msra.mxu0 0.0
  %1839 = vmatprep.subr.mxu0 0.0
  %1840 = vmatpush1.xpose.msra.mxu0 0.0
  %1841 = vmatprep.subr.mxu0 0.0
  %1842 = vmatpush1.xpose.msra.mxu0 0.0
  %1843 = vmatprep.subr.mxu0 0.0
  %1844 = vmatpush1.xpose.msra.mxu0 0.0
  %1845 = vmatprep.subr.mxu0 0.0
  %1846 = vmatpush1.xpose.msra.mxu0 0.0
  %1847 = vmatprep.subr.mxu0 0.0
  %1848 = vmatpush1.xpose.msra.mxu0 0.0
  %1849 = vmatprep.subr.mxu0 0.0
  %1850 = vmatpush1.xpose.msra.mxu0 0.0
  %1851 = vmatprep.subr.mxu0 0.0
  %1852 = vmatpush1.xpose.msra.mxu0 0.0
  %1853 = vmatprep.subr.mxu0 0.0
  %1854 = vmatpush1.xpose.msra.mxu0 0.0
  %1855 = vmatprep.subr.mxu0 0.0
  %1856 = vmatpush1.xpose.msra.mxu0 0.0
  %1857 = vmatprep.subr.mxu0 0.0
  %1858 = vmatpush1.xpose.msra.mxu0 0.0
  %1859 = vmatprep.mubr.f32.mxu0 0.0
  %1860 = vmatmul.mubr.f32.gmra.mrb[0].mxu0 %v1752
  %v1861 = vpop.f32.mrb[0].mxu0
  %v1862 = vadd.f32 0.0, %v1861
  %v1863 = vpop.f32.mrb[0].mxu0
  %1864 = vmatprep.mubr.f32.mxu0 0.0
  %1865 = vmatmul.mubr.f32.gmra.mrb[0].mxu0 %v1755
  %v1866 = vpop.f32.mrb[0].mxu0
  %v1867 = vadd.f32 0.0, %v1866
  %v1868 = vpop.f32.mrb[0].mxu0
  %1869 = vmatprep.mubr.f32.mxu0 0.0
  %1870 = vmatmul.mubr.f32.gmra.mrb[0].mxu0 %v1758
  %v1871 = vpop.f32.mrb[0].mxu0
  %v1872 = vadd.f32 0.0, %v1871
  %v1873 = vpop.f32.mrb[0].mxu0
  %1874 = vmatprep.mubr.f32.mxu0 0.0
  %1875 = vmatmul.mubr.f32.gmra.mrb[0].mxu0 %v1761
  %v1876 = vpop.f32.mrb[0].mxu0
  %v1877 = vadd.f32 0.0, %v1876
  %v1878 = vpop.f32.mrb[0].mxu0
  %1879 = vdwg.mxu0
  %v1880 = vmul.f32 %v1862, 0.35355338
  %v1881 = vmul.f32 %v1867, 0.35355338
  %v1882 = vmul.f32 %v1872, 0.35355338
  %v1883 = vmul.f32 %v1877, 0.35355338
  %v1884 = vadd.f32 %v1880, %v148
  %v1885 = vadd.f32 %v1881, %v149
  %v1886 = vadd.f32 %v1882, %v150
  %v1887 = vadd.f32 %v1883, %v151
  %1888 = vmax.xlane.f32.xlu0 %v1884
  %v1889 = vpop.xlane.xlu0 %1888
  %1890 = vmax.xlane.f32.xlu0 %v1885
  %v1891 = vpop.xlane.xlu0 %1890
  %1892 = vmax.xlane.f32.xlu0 %v1886
  %v1893 = vpop.xlane.xlu0 %1892
  %1894 = vmax.xlane.f32.xlu0 %v1887
  %v1895 = vpop.xlane.xlu0 %1894
  %v1896 = vsub.f32 %v1884, %v1889
  %v1897 = vsub.f32 %v1885, %v1891
  %v1898 = vsub.f32 %v1886, %v1893
  %v1899 = vsub.f32 %v1887, %v1895
  %v1900 = vmul.f32 %v1896, 1.442695
  %v1901 = vpow.pop %v1900
  %v1902 = vmul.f32 %v1897, 1.442695
  %v1903 = vpow.pop %v1902
  %v1904 = vmul.f32 %v1898, 1.442695
  %v1905 = vpow.pop %v1904
  %v1906 = vmul.f32 %v1899, 1.442695
  %v1907 = vpow.pop %v1906
  %1908 = vmatprep.subr.mxu0 0.0
  %1909 = vmatpush1.msra.mxu0 %v168
  %1910 = vmatprep.subr.mxu0 0.0
  %1911 = vmatpush1.msra.mxu0 %v169
  %1912 = vmatprep.subr.mxu0 0.0
  %1913 = vmatpush1.msra.mxu0 %v170
  %1914 = vmatprep.subr.mxu0 0.0
  %1915 = vmatpush1.msra.mxu0 %v171
  %1916 = vmatprep.subr.mxu0 0.0
  %1917 = vmatpush1.msra.mxu0 %v172
  %1918 = vmatprep.subr.mxu0 0.0
  %1919 = vmatpush1.msra.mxu0 %v173
  %1920 = vmatprep.subr.mxu0 0.0
  %1921 = vmatpush1.msra.mxu0 %v174
  %1922 = vmatprep.subr.mxu0 0.0
  %1923 = vmatpush1.msra.mxu0 %v175
  %1924 = vmatprep.subr.mxu0 0.0
  %1925 = vmatpush1.msra.mxu0 %v176
  %1926 = vmatprep.subr.mxu0 0.0
  %1927 = vmatpush1.msra.mxu0 %v177
  %1928 = vmatprep.subr.mxu0 0.0
  %1929 = vmatpush1.msra.mxu0 %v178
  %1930 = vmatprep.subr.mxu0 0.0
  %1931 = vmatpush1.msra.mxu0 %v179
  %1932 = vmatprep.subr.mxu0 0.0
  %1933 = vmatpush1.msra.mxu0 %v180
  %1934 = vmatprep.subr.mxu0 0.0
  %1935 = vmatpush1.msra.mxu0 %v181
  %1936 = vmatprep.subr.mxu0 0.0
  %1937 = vmatpush1.msra.mxu0 %v182
  %1938 = vmatprep.subr.mxu0 0.0
  %1939 = vmatpush1.msra.mxu0 %v183
  %1940 = vmatprep.subr.mxu0 0.0
  %1941 = vmatpush1.msra.mxu0 0.0
  %1942 = vmatprep.subr.mxu0 0.0
  %1943 = vmatpush1.msra.mxu0 0.0
  %1944 = vmatprep.subr.mxu0 0.0
  %1945 = vmatpush1.msra.mxu0 0.0
  %1946 = vmatprep.subr.mxu0 0.0
  %1947 = vmatpush1.msra.mxu0 0.0
  %1948 = vmatprep.subr.mxu0 0.0
  %1949 = vmatpush1.msra.mxu0 0.0
  %1950 = vmatprep.subr.mxu0 0.0
  %1951 = vmatpush1.msra.mxu0 0.0
  %1952 = vmatprep.subr.mxu0 0.0
  %1953 = vmatpush1.msra.mxu0 0.0
  %1954 = vmatprep.subr.mxu0 0.0
  %1955 = vmatpush1.msra.mxu0 0.0
  %1956 = vmatprep.subr.mxu0 0.0
  %1957 = vmatpush1.msra.mxu0 0.0
  %1958 = vmatprep.subr.mxu0 0.0
  %1959 = vmatpush1.msra.mxu0 0.0
  %1960 = vmatprep.subr.mxu0 0.0
  %1961 = vmatpush1.msra.mxu0 0.0
  %1962 = vmatprep.subr.mxu0 0.0
  %1963 = vmatpush1.msra.mxu0 0.0
  %1964 = vmatprep.subr.mxu0 0.0
  %1965 = vmatpush1.msra.mxu0 0.0
  %1966 = vmatprep.subr.mxu0 0.0
  %1967 = vmatpush1.msra.mxu0 0.0
  %1968 = vmatprep.subr.mxu0 0.0
  %1969 = vmatpush1.msra.mxu0 0.0
  %1970 = vmatprep.subr.mxu0 0.0
  %1971 = vmatpush1.msra.mxu0 0.0
  %1972 = vmatprep.mubr.f32.mxu0 0.0
  %1973 = vmatmul.mubr.f32.gmra.mrb[0].mxu0 %v1901
  %v1974 = vpop.f32.mrb[0].mxu0
  %v1975 = vadd.f32 0.0, %v1974
  %v1976 = vpop.f32.mrb[0].mxu0
  %1977 = vmatprep.mubr.f32.mxu0 0.0
  %1978 = vmatmul.mubr.f32.gmra.mrb[0].mxu0 %v1903
  %v1979 = vpop.f32.mrb[0].mxu0
  %v1980 = vadd.f32 0.0, %v1979
  %v1981 = vpop.f32.mrb[0].mxu0
  %1982 = vmatprep.mubr.f32.mxu0 0.0
  %1983 = vmatmul.mubr.f32.gmra.mrb[0].mxu0 %v1905
  %v1984 = vpop.f32.mrb[0].mxu0
  %v1985 = vadd.f32 0.0, %v1984
  %v1986 = vpop.f32.mrb[0].mxu0
  %1987 = vmatprep.mubr.f32.mxu0 0.0
  %1988 = vmatmul.mubr.f32.gmra.mrb[0].mxu0 %v1907
  %v1989 = vpop.f32.mrb[0].mxu0
  %v1990 = vadd.f32 0.0, %v1989
  %v1991 = vpop.f32.mrb[0].mxu0
  %1992 = vdwg.mxu0
  %v1993 = vrcp.pop %v1975
  %v1994 = vrcp.pop %v1980
  %v1995 = vrcp.pop %v1985
  %v1996 = vrcp.pop %v1990
  %v1997 = vmul.f32 %v1901, %v1993
  %v1998 = vmul.f32 %v1903, %v1994
  %v1999 = vmul.f32 %v1905, %v1995
  %v2000 = vmul.f32 %v1907, %v1996
  %s2001 = scalar_lea.vmem %s11, 32
  %2002 = vst [vmem:[%s2001] sm:$0xff] %v1997
  %2003 = vst [vmem:[%s2001 + $0x8] sm:$0xff] %v1998
  %2004 = vst [vmem:[%s2001 + $0x10] sm:$0xff] %v1999
  %2005 = vst [vmem:[%s2001 + $0x18] sm:$0xff] %v2000
  %2022 = vrot.lane.b32.xlu0 %v1687, 64
  %v2023 = vpop.permute.xlu0 %2022
  %2024 = vrot.lane.b32.xlu0 %v1688, 64
  %v2025 = vpop.permute.xlu0 %2024
  %2026 = vrot.lane.b32.xlu0 %v1689, 64
  %v2027 = vpop.permute.xlu0 %2026
  %2028 = vrot.lane.b32.xlu0 %v1690, 64
  %v2029 = vpop.permute.xlu0 %2028
  %2030 = vrot.lane.b32.xlu0 %v1691, 64
  %v2031 = vpop.permute.xlu0 %2030
  %2032 = vrot.lane.b32.xlu0 %v1692, 64
  %v2033 = vpop.permute.xlu0 %2032
  %2034 = vrot.lane.b32.xlu0 %v1693, 64
  %v2035 = vpop.permute.xlu0 %2034
  %2036 = vrot.lane.b32.xlu0 %v1694, 64
  %v2037 = vpop.permute.xlu0 %2036
  %2038 = vrot.lane.b32.xlu0 %v1695, 64
  %v2039 = vpop.permute.xlu0 %2038
  %2040 = vrot.lane.b32.xlu0 %v1696, 64
  %v2041 = vpop.permute.xlu0 %2040
  %2042 = vrot.lane.b32.xlu0 %v1697, 64
  %v2043 = vpop.permute.xlu0 %2042
  %2044 = vrot.lane.b32.xlu0 %v1698, 64
  %v2045 = vpop.permute.xlu0 %2044
  %2046 = vrot.lane.b32.xlu0 %v1699, 64
  %v2047 = vpop.permute.xlu0 %2046
  %2048 = vrot.lane.b32.xlu0 %v1700, 64
  %v2049 = vpop.permute.xlu0 %2048
  %2050 = vrot.lane.b32.xlu0 %v1701, 64
  %v2051 = vpop.permute.xlu0 %2050
  %2052 = vrot.lane.b32.xlu0 %v1702, 64
  %v2053 = vpop.permute.xlu0 %2052
  %2070 = vmatprep.subr.mxu0 0.0
  %2071 = vmatpush1.msra.mxu0 %v2023
  %2072 = vmatprep.subr.mxu0 0.0
  %2073 = vmatpush1.msra.mxu0 %v2025
  %2074 = vmatprep.subr.mxu0 0.0
  %2075 = vmatpush1.msra.mxu0 %v2027
  %2076 = vmatprep.subr.mxu0 0.0
  %2077 = vmatpush1.msra.mxu0 %v2029
  %2078 = vmatprep.subr.mxu0 0.0
  %2079 = vmatpush1.msra.mxu0 %v2031
  %2080 = vmatprep.subr.mxu0 0.0
  %2081 = vmatpush1.msra.mxu0 %v2033
  %2082 = vmatprep.subr.mxu0 0.0
  %2083 = vmatpush1.msra.mxu0 %v2035
  %2084 = vmatprep.subr.mxu0 0.0
  %2085 = vmatpush1.msra.mxu0 %v2037
  %2086 = vmatprep.subr.mxu0 0.0
  %2087 = vmatpush1.msra.mxu0 %v2039
  %2088 = vmatprep.subr.mxu0 0.0
  %2089 = vmatpush1.msra.mxu0 %v2041
  %2090 = vmatprep.subr.mxu0 0.0
  %2091 = vmatpush1.msra.mxu0 %v2043
  %2092 = vmatprep.subr.mxu0 0.0
  %2093 = vmatpush1.msra.mxu0 %v2045
  %2094 = vmatprep.subr.mxu0 0.0
  %2095 = vmatpush1.msra.mxu0 %v2047
  %2096 = vmatprep.subr.mxu0 0.0
  %2097 = vmatpush1.msra.mxu0 %v2049
  %2098 = vmatprep.subr.mxu0 0.0
  %2099 = vmatpush1.msra.mxu0 %v2051
  %2100 = vmatprep.subr.mxu0 0.0
  %2101 = vmatpush1.msra.mxu0 %v2053
  %2102 = vmatprep.subr.mxu0 0.0
  %2103 = vmatpush1.msra.mxu0 0.0
  %2104 = vmatprep.subr.mxu0 0.0
  %2105 = vmatpush1.msra.mxu0 0.0
  %2106 = vmatprep.subr.mxu0 0.0
  %2107 = vmatpush1.msra.mxu0 0.0
  %2108 = vmatprep.subr.mxu0 0.0
  %2109 = vmatpush1.msra.mxu0 0.0
  %2110 = vmatprep.subr.mxu0 0.0
  %2111 = vmatpush1.msra.mxu0 0.0
  %2112 = vmatprep.subr.mxu0 0.0
  %2113 = vmatpush1.msra.mxu0 0.0
  %2114 = vmatprep.subr.mxu0 0.0
  %2115 = vmatpush1.msra.mxu0 0.0
  %2116 = vmatprep.subr.mxu0 0.0
  %2117 = vmatpush1.msra.mxu0 0.0
  %2118 = vmatprep.subr.mxu0 0.0
  %2119 = vmatpush1.msra.mxu0 0.0
  %2120 = vmatprep.subr.mxu0 0.0
  %2121 = vmatpush1.msra.mxu0 0.0
  %2122 = vmatprep.subr.mxu0 0.0
  %2123 = vmatpush1.msra.mxu0 0.0
  %2124 = vmatprep.subr.mxu0 0.0
  %2125 = vmatpush1.msra.mxu0 0.0
  %2126 = vmatprep.subr.mxu0 0.0
  %2127 = vmatpush1.msra.mxu0 0.0
  %2128 = vmatprep.subr.mxu0 0.0
  %2129 = vmatpush1.msra.mxu0 0.0
  %2130 = vmatprep.subr.mxu0 0.0
  %2131 = vmatpush1.msra.mxu0 0.0
  %2132 = vmatprep.subr.mxu0 0.0
  %2133 = vmatpush1.msra.mxu0 0.0
  %2134 = vmatprep.mubr.f32.mxu0 0.0
  %2135 = vmatmul.mubr.f32.gmra.mrb[0].mxu0 %v1997
  %v2136 = vpop.f32.mrb[0].mxu0
  %v2137 = vadd.f32 0.0, %v2136
  %v2138 = vpop.f32.mrb[0].mxu0
  %2139 = vmatprep.mubr.f32.mxu0 0.0
  %2140 = vmatmul.mubr.f32.gmra.mrb[0].mxu0 %v1998
  %v2141 = vpop.f32.mrb[0].mxu0
  %v2142 = vadd.f32 0.0, %v2141
  %v2143 = vpop.f32.mrb[0].mxu0
  %2144 = vmatprep.mubr.f32.mxu0 0.0
  %2145 = vmatmul.mubr.f32.gmra.mrb[0].mxu0 %v1999
  %v2146 = vpop.f32.mrb[0].mxu0
  %v2147 = vadd.f32 0.0, %v2146
  %v2148 = vpop.f32.mrb[0].mxu0
  %2149 = vmatprep.mubr.f32.mxu0 0.0
  %2150 = vmatmul.mubr.f32.gmra.mrb[0].mxu0 %v2000
  %v2151 = vpop.f32.mrb[0].mxu0
  %v2152 = vadd.f32 0.0, %v2151
  %v2153 = vpop.f32.mrb[0].mxu0
  %2154 = vdwg.mxu0
  %2159 = vrot.lane.b32.xlu0 %v1475, 32
  %v2160 = vpop.permute.xlu0 %2159
  %2161 = vrot.lane.b32.xlu0 %v1477, 32
  %v2162 = vpop.permute.xlu0 %2161
  %2163 = vrot.lane.b32.xlu0 %v1479, 32
  %v2164 = vpop.permute.xlu0 %2163
  %2165 = vrot.lane.b32.xlu0 %v1481, 32
  %v2166 = vpop.permute.xlu0 %2165
  %v2172 = vsel %vm209, %v2137, 0
  %v2175 = vsel %vm209, %v2142, 0
  %v2178 = vsel %vm209, %v2147, 0
  %v2181 = vsel %vm209, %v2152, 0
  %2183 = vmatprep.subr.mxu0 0.0
  %2184 = vmatpush1.msra.mxu0 %v2160
  %2185 = vmatprep.subr.mxu0 0.0
  %2186 = vmatpush1.msra.mxu0 %v2162
  %2187 = vmatprep.subr.mxu0 0.0
  %2188 = vmatpush1.msra.mxu0 %v2164
  %2189 = vmatprep.subr.mxu0 0.0
  %2190 = vmatpush1.msra.mxu0 %v2166
  %2191 = vmatprep.subr.mxu0 0.0
  %2192 = vmatpush1.msra.mxu0 0.0
  %2193 = vmatprep.subr.mxu0 0.0
  %2194 = vmatpush1.msra.mxu0 0.0
  %2195 = vmatprep.subr.mxu0 0.0
  %2196 = vmatpush1.msra.mxu0 0.0
  %2197 = vmatprep.subr.mxu0 0.0
  %2198 = vmatpush1.msra.mxu0 0.0
  %2199 = vmatprep.subr.mxu0 0.0
  %2200 = vmatpush1.msra.mxu0 0.0
  %2201 = vmatprep.subr.mxu0 0.0
  %2202 = vmatpush1.msra.mxu0 0.0
  %2203 = vmatprep.subr.mxu0 0.0
  %2204 = vmatpush1.msra.mxu0 0.0
  %2205 = vmatprep.subr.mxu0 0.0
  %2206 = vmatpush1.msra.mxu0 0.0
  %2207 = vmatprep.subr.mxu0 0.0
  %2208 = vmatpush1.msra.mxu0 0.0
  %2209 = vmatprep.subr.mxu0 0.0
  %2210 = vmatpush1.msra.mxu0 0.0
  %2211 = vmatprep.subr.mxu0 0.0
  %2212 = vmatpush1.msra.mxu0 0.0
  %2213 = vmatprep.subr.mxu0 0.0
  %2214 = vmatpush1.msra.mxu0 0.0
  %2215 = vmatprep.subr.mxu0 0.0
  %2216 = vmatpush1.msra.mxu0 0.0
  %2217 = vmatprep.subr.mxu0 0.0
  %2218 = vmatpush1.msra.mxu0 0.0
  %2219 = vmatprep.subr.mxu0 0.0
  %2220 = vmatpush1.msra.mxu0 0.0
  %2221 = vmatprep.subr.mxu0 0.0
  %2222 = vmatpush1.msra.mxu0 0.0
  %2223 = vmatprep.subr.mxu0 0.0
  %2224 = vmatpush1.msra.mxu0 0.0
  %2225 = vmatprep.subr.mxu0 0.0
  %2226 = vmatpush1.msra.mxu0 0.0
  %2227 = vmatprep.subr.mxu0 0.0
  %2228 = vmatpush1.msra.mxu0 0.0
  %2229 = vmatprep.subr.mxu0 0.0
  %2230 = vmatpush1.msra.mxu0 0.0
  %2231 = vmatprep.subr.mxu0 0.0
  %2232 = vmatpush1.msra.mxu0 0.0
  %2233 = vmatprep.subr.mxu0 0.0
  %2234 = vmatpush1.msra.mxu0 0.0
  %2235 = vmatprep.subr.mxu0 0.0
  %2236 = vmatpush1.msra.mxu0 0.0
  %2237 = vmatprep.subr.mxu0 0.0
  %2238 = vmatpush1.msra.mxu0 0.0
  %2239 = vmatprep.subr.mxu0 0.0
  %2240 = vmatpush1.msra.mxu0 0.0
  %2241 = vmatprep.subr.mxu0 0.0
  %2242 = vmatpush1.msra.mxu0 0.0
  %2243 = vmatprep.subr.mxu0 0.0
  %2244 = vmatpush1.msra.mxu0 0.0
  %2245 = vmatprep.subr.mxu0 0.0
  %2246 = vmatpush1.msra.mxu0 0.0
  %2247 = vmatprep.mubr.f32.mxu0 0.0
  %2248 = vmatmul.mubr.f32.gmra.mrb[0].mxu0 %v2172
  %v2249 = vpop.f32.mrb[0].mxu0
  %v2250 = vadd.f32 0.0, %v2249
  %v2251 = vpop.f32.mrb[0].mxu0
  %2252 = vmatprep.mubr.f32.mxu0 0.0
  %2253 = vmatmul.mubr.f32.gmra.mrb[0].mxu0 %v2175
  %v2254 = vpop.f32.mrb[0].mxu0
  %v2255 = vadd.f32 0.0, %v2254
  %v2256 = vpop.f32.mrb[0].mxu0
  %2257 = vmatprep.mubr.f32.mxu0 0.0
  %2258 = vmatmul.mubr.f32.gmra.mrb[0].mxu0 %v2178
  %v2259 = vpop.f32.mrb[0].mxu0
  %v2260 = vadd.f32 0.0, %v2259
  %v2261 = vpop.f32.mrb[0].mxu0
  %2262 = vmatprep.mubr.f32.mxu0 0.0
  %2263 = vmatmul.mubr.f32.gmra.mrb[0].mxu0 %v2181
  %v2264 = vpop.f32.mrb[0].mxu0
  %v2265 = vadd.f32 0.0, %v2264
  %v2266 = vpop.f32.mrb[0].mxu0
  %2267 = vdwg.mxu0
  %v2268 = vadd.f32 %v1470, %v2250
  %v2269 = vadd.f32 %v1471, %v2255
  %v2270 = vadd.f32 %v1472, %v2260
  %v2271 = vadd.f32 %v1473, %v2265
  %v2272 = vlaneseq
  %v2273 = vshrl.u32 %v2272, 7
  %v2274 = vsub.s32 4, %v2273
  %v2275 = vrot.slane %v1501, %v2274
  %v2276 = vadd.f32 %v2268, %v2275
  %v2277 = vadd.f32 %v2269, %v2275
  %v2278 = vadd.f32 %v2270, %v2275
  %v2279 = vadd.f32 %v2271, %v2275
  %v2280 = vsel %vm209, %v2276, 0.0
  %2281 = vadd.xlane.f32.xlu0 %v2280
  %v2282 = vpop.xlane.xlu0 %2281
  %v2283 = vsel %vm209, %v2277, 0.0
  %2284 = vadd.xlane.f32.xlu0 %v2283
  %v2285 = vpop.xlane.xlu0 %2284
  %v2286 = vsel %vm209, %v2278, 0.0
  %2287 = vadd.xlane.f32.xlu0 %v2286
  %v2288 = vpop.xlane.xlu0 %2287
  %v2289 = vsel %vm209, %v2279, 0.0
  %2290 = vadd.xlane.f32.xlu0 %v2289
  %v2291 = vpop.xlane.xlu0 %2290
  %v2292 = vmul.f32 %v2282, %v222
  %v2293 = vmul.f32 %v2285, %v222
  %v2294 = vmul.f32 %v2288, %v222
  %v2295 = vmul.f32 %v2291, %v222
  %v2296 = vsub.f32 %v2276, %v2292
  %v2297 = vsub.f32 %v2277, %v2293
  %v2298 = vsub.f32 %v2278, %v2294
  %v2299 = vsub.f32 %v2279, %v2295
  %v2300 = vmul.f32 %v2296, %v2296
  %v2301 = vmul.f32 %v2297, %v2297
  %v2302 = vmul.f32 %v2298, %v2298
  %v2303 = vmul.f32 %v2299, %v2299
  %v2304 = vsel %vm209, %v2300, 0.0
  %2305 = vadd.xlane.f32.xlu0 %v2304
  %v2306 = vpop.xlane.xlu0 %2305
  %v2307 = vsel %vm209, %v2301, 0.0
  %2308 = vadd.xlane.f32.xlu0 %v2307
  %v2309 = vpop.xlane.xlu0 %2308
  %v2310 = vsel %vm209, %v2302, 0.0
  %2311 = vadd.xlane.f32.xlu0 %v2310
  %v2312 = vpop.xlane.xlu0 %2311
  %v2313 = vsel %vm209, %v2303, 0.0
  %2314 = vadd.xlane.f32.xlu0 %v2313
  %v2315 = vpop.xlane.xlu0 %2314
  %v2316 = vmul.f32 %v2306, %v222
  %v2317 = vmul.f32 %v2309, %v222
  %v2318 = vmul.f32 %v2312, %v222
  %v2319 = vmul.f32 %v2315, %v222
  %v2320 = vadd.f32 %v2316, 1e-05
  %v2321 = vadd.f32 %v2317, 1e-05
  %v2322 = vadd.f32 %v2318, 1e-05
  %v2323 = vadd.f32 %v2319, 1e-05
  %v2324 = vrsqrt.pop %v2320
  %v2325 = vrsqrt.pop %v2321
  %v2326 = vrsqrt.pop %v2322
  %v2327 = vrsqrt.pop %v2323
  %v2328 = vmul.f32 %v2296, %v2324
  %v2329 = vmul.f32 %v2297, %v2325
  %v2330 = vmul.f32 %v2298, %v2326
  %v2331 = vmul.f32 %v2299, %v2327
  %v2332 = vlaneseq
  %v2333 = vshrl.u32 %v2332, 7
  %v2334 = vsub.s32 2, %v2333
  %v2335 = vrot.slane %v1501, %v2334
  %v2336 = vmul.f32 %v2328, %v2335
  %v2337 = vmul.f32 %v2329, %v2335
  %v2338 = vmul.f32 %v2330, %v2335
  %v2339 = vmul.f32 %v2331, %v2335
  %v2340 = vlaneseq
  %v2341 = vshrl.u32 %v2340, 7
  %v2342 = vsub.s32 3, %v2341
  %v2343 = vrot.slane %v1501, %v2342
  %v2344 = vadd.f32 %v2336, %v2343
  %v2345 = vadd.f32 %v2337, %v2343
  %v2346 = vadd.f32 %v2338, %v2343
  %v2347 = vadd.f32 %v2339, %v2343
  %v2348 = vlaneseq
  %v2349 = vshrl.u32 %v2348, 7
  %v2350 = vsub.s32 7, %v2349
  %v2351 = vrot.slane %v1501, %v2350
  %v2353 = vsel %vm209, %v2344, 0
  %v2356 = vsel %vm209, %v2345, 0
  %v2359 = vsel %vm209, %v2346, 0
  %v2362 = vsel %vm209, %v2347, 0
  %2364 = vmatprep.subr.mxu0 0.0
  %2365 = vmatpush1.msra.mxu0 %v1476
  %2366 = vmatprep.subr.mxu0 0.0
  %2367 = vmatpush1.msra.mxu0 %v1478
  %2368 = vmatprep.subr.mxu0 0.0
  %2369 = vmatpush1.msra.mxu0 %v1480
  %2370 = vmatprep.subr.mxu0 0.0
  %2371 = vmatpush1.msra.mxu0 %v1482
  %2372 = vmatprep.subr.mxu0 0.0
  %2373 = vmatpush1.msra.mxu0 0.0
  %2374 = vmatprep.subr.mxu0 0.0
  %2375 = vmatpush1.msra.mxu0 0.0
  %2376 = vmatprep.subr.mxu0 0.0
  %2377 = vmatpush1.msra.mxu0 0.0
  %2378 = vmatprep.subr.mxu0 0.0
  %2379 = vmatpush1.msra.mxu0 0.0
  %2380 = vmatprep.subr.mxu0 0.0
  %2381 = vmatpush1.msra.mxu0 0.0
  %2382 = vmatprep.subr.mxu0 0.0
  %2383 = vmatpush1.msra.mxu0 0.0
  %2384 = vmatprep.subr.mxu0 0.0
  %2385 = vmatpush1.msra.mxu0 0.0
  %2386 = vmatprep.subr.mxu0 0.0
  %2387 = vmatpush1.msra.mxu0 0.0
  %2388 = vmatprep.subr.mxu0 0.0
  %2389 = vmatpush1.msra.mxu0 0.0
  %2390 = vmatprep.subr.mxu0 0.0
  %2391 = vmatpush1.msra.mxu0 0.0
  %2392 = vmatprep.subr.mxu0 0.0
  %2393 = vmatpush1.msra.mxu0 0.0
  %2394 = vmatprep.subr.mxu0 0.0
  %2395 = vmatpush1.msra.mxu0 0.0
  %2396 = vmatprep.subr.mxu0 0.0
  %2397 = vmatpush1.msra.mxu0 0.0
  %2398 = vmatprep.subr.mxu0 0.0
  %2399 = vmatpush1.msra.mxu0 0.0
  %2400 = vmatprep.subr.mxu0 0.0
  %2401 = vmatpush1.msra.mxu0 0.0
  %2402 = vmatprep.subr.mxu0 0.0
  %2403 = vmatpush1.msra.mxu0 0.0
  %2404 = vmatprep.subr.mxu0 0.0
  %2405 = vmatpush1.msra.mxu0 0.0
  %2406 = vmatprep.subr.mxu0 0.0
  %2407 = vmatpush1.msra.mxu0 0.0
  %2408 = vmatprep.subr.mxu0 0.0
  %2409 = vmatpush1.msra.mxu0 0.0
  %2410 = vmatprep.subr.mxu0 0.0
  %2411 = vmatpush1.msra.mxu0 0.0
  %2412 = vmatprep.subr.mxu0 0.0
  %2413 = vmatpush1.msra.mxu0 0.0
  %2414 = vmatprep.subr.mxu0 0.0
  %2415 = vmatpush1.msra.mxu0 0.0
  %2416 = vmatprep.subr.mxu0 0.0
  %2417 = vmatpush1.msra.mxu0 0.0
  %2418 = vmatprep.subr.mxu0 0.0
  %2419 = vmatpush1.msra.mxu0 0.0
  %2420 = vmatprep.subr.mxu0 0.0
  %2421 = vmatpush1.msra.mxu0 0.0
  %2422 = vmatprep.subr.mxu0 0.0
  %2423 = vmatpush1.msra.mxu0 0.0
  %2424 = vmatprep.subr.mxu0 0.0
  %2425 = vmatpush1.msra.mxu0 0.0
  %2426 = vmatprep.subr.mxu0 0.0
  %2427 = vmatpush1.msra.mxu0 0.0
  %2428 = vmatprep.mubr.f32.mxu0 0.0
  %2429 = vmatmul.mubr.f32.gmra.mrb[0].mxu0 %v2353
  %v2430 = vpop.f32.mrb[0].mxu0
  %v2431 = vadd.f32 %v2351, %v2430
  %v2432 = vpop.f32.mrb[0].mxu0
  %2433 = vmatprep.mubr.f32.mxu0 0.0
  %2434 = vmatmul.mubr.f32.gmra.mrb[0].mxu0 %v2356
  %v2435 = vpop.f32.mrb[0].mxu0
  %v2436 = vadd.f32 %v2351, %v2435
  %v2437 = vpop.f32.mrb[0].mxu0
  %2438 = vmatprep.mubr.f32.mxu0 0.0
  %2439 = vmatmul.mubr.f32.gmra.mrb[0].mxu0 %v2359
  %v2440 = vpop.f32.mrb[0].mxu0
  %v2441 = vadd.f32 %v2351, %v2440
  %v2442 = vpop.f32.mrb[0].mxu0
  %2443 = vmatprep.mubr.f32.mxu0 0.0
  %2444 = vmatmul.mubr.f32.gmra.mrb[0].mxu0 %v2362
  %v2445 = vpop.f32.mrb[0].mxu0
  %v2446 = vadd.f32 %v2351, %v2445
  %v2447 = vpop.f32.mrb[0].mxu0
  %2448 = vdwg.mxu0
  %v2449 = vmul.f32 %v2431, 0.5
  %v2450 = vmul.f32 %v2436, 0.5
  %v2451 = vmul.f32 %v2441, 0.5
  %v2452 = vmul.f32 %v2446, 0.5
  %v2453 = vmul.f32 %v2431, 0.70710677
  %v2454 = vmul.f32 %v2436, 0.70710677
  %v2455 = vmul.f32 %v2441, 0.70710677
  %v2456 = vmul.f32 %v2446, 0.70710677
  %vm2457 = vcmp.ge.f32.partialorder %v2453, 0.0
  %vm2458 = vcmp.ge.f32.partialorder %v2454, 0.0
  %vm2459 = vcmp.ge.f32.partialorder %v2455, 0.0
  %vm2460 = vcmp.ge.f32.partialorder %v2456, 0.0
  %v2461 = vsel %vm2457, 1.0, -1.0
  %v2462 = vsel %vm2458, 1.0, -1.0
  %v2463 = vsel %vm2459, 1.0, -1.0
  %v2464 = vsel %vm2460, 1.0, -1.0
  %v2465 = vand.u32 2147483647, %v2453
  %v2466 = vand.u32 2147483647, %v2454
  %v2467 = vand.u32 2147483647, %v2455
  %v2468 = vand.u32 2147483647, %v2456
  %v2469 = vmul.f32 %v2465, 0.3275911
  %v2470 = vmul.f32 %v2466, 0.3275911
  %v2471 = vmul.f32 %v2467, 0.3275911
  %v2472 = vmul.f32 %v2468, 0.3275911
  %v2473 = vadd.f32 %v2469, 1.0
  %v2474 = vadd.f32 %v2470, 1.0
  %v2475 = vadd.f32 %v2471, 1.0
  %v2476 = vadd.f32 %v2472, 1.0
  %v2477 = vrcp.pop %v2473
  %v2478 = vmul.f32 1.0, %v2477
  %v2479 = vrcp.pop %v2474
  %v2480 = vmul.f32 1.0, %v2479
  %v2481 = vrcp.pop %v2475
  %v2482 = vmul.f32 1.0, %v2481
  %v2483 = vrcp.pop %v2476
  %v2484 = vmul.f32 1.0, %v2483
  %v2485 = vmul.f32 %v2478, 1.0614054
  %v2486 = vmul.f32 %v2480, 1.0614054
  %v2487 = vmul.f32 %v2482, 1.0614054
  %v2488 = vmul.f32 %v2484, 1.0614054
  %v2489 = vadd.f32 %v2485, -1.4531521
  %v2490 = vadd.f32 %v2486, -1.4531521
  %v2491 = vadd.f32 %v2487, -1.4531521
  %v2492 = vadd.f32 %v2488, -1.4531521
  %v2493 = vmul.f32 %v2489, %v2478
  %v2494 = vmul.f32 %v2490, %v2480
  %v2495 = vmul.f32 %v2491, %v2482
  %v2496 = vmul.f32 %v2492, %v2484
  %v2497 = vadd.f32 %v2493, 1.4214138
  %v2498 = vadd.f32 %v2494, 1.4214138
  %v2499 = vadd.f32 %v2495, 1.4214138
  %v2500 = vadd.f32 %v2496, 1.4214138
  %v2501 = vmul.f32 %v2497, %v2478
  %v2502 = vmul.f32 %v2498, %v2480
  %v2503 = vmul.f32 %v2499, %v2482
  %v2504 = vmul.f32 %v2500, %v2484
  %v2505 = vadd.f32 %v2501, -0.28449672
  %v2506 = vadd.f32 %v2502, -0.28449672
  %v2507 = vadd.f32 %v2503, -0.28449672
  %v2508 = vadd.f32 %v2504, -0.28449672
  %v2509 = vmul.f32 %v2505, %v2478
  %v2510 = vmul.f32 %v2506, %v2480
  %v2511 = vmul.f32 %v2507, %v2482
  %v2512 = vmul.f32 %v2508, %v2484
  %v2513 = vadd.f32 %v2509, 0.2548296
  %v2514 = vadd.f32 %v2510, 0.2548296
  %v2515 = vadd.f32 %v2511, 0.2548296
  %v2516 = vadd.f32 %v2512, 0.2548296
  %v2517 = vmul.f32 %v2513, %v2478
  %v2518 = vmul.f32 %v2514, %v2480
  %v2519 = vmul.f32 %v2515, %v2482
  %v2520 = vmul.f32 %v2516, %v2484
  %v2521 = vsub.f32 0.0, %v2465
  %v2522 = vsub.f32 0.0, %v2466
  %v2523 = vsub.f32 0.0, %v2467
  %v2524 = vsub.f32 0.0, %v2468
  %v2525 = vmul.f32 %v2521, %v2465
  %v2526 = vmul.f32 %v2522, %v2466
  %v2527 = vmul.f32 %v2523, %v2467
  %v2528 = vmul.f32 %v2524, %v2468
  %v2529 = vmul.f32 %v2525, 1.442695
  %v2530 = vpow.pop %v2529
  %v2531 = vmul.f32 %v2526, 1.442695
  %v2532 = vpow.pop %v2531
  %v2533 = vmul.f32 %v2527, 1.442695
  %v2534 = vpow.pop %v2533
  %v2535 = vmul.f32 %v2528, 1.442695
  %v2536 = vpow.pop %v2535
  %v2537 = vmul.f32 %v2517, %v2530
  %v2538 = vmul.f32 %v2518, %v2532
  %v2539 = vmul.f32 %v2519, %v2534
  %v2540 = vmul.f32 %v2520, %v2536
  %v2541 = vsub.f32 1.0, %v2537
  %v2542 = vsub.f32 1.0, %v2538
  %v2543 = vsub.f32 1.0, %v2539
  %v2544 = vsub.f32 1.0, %v2540
  %v2545 = vmul.f32 %v2461, %v2541
  %v2546 = vmul.f32 %v2462, %v2542
  %v2547 = vmul.f32 %v2463, %v2543
  %v2548 = vmul.f32 %v2464, %v2544
  %v2549 = vadd.f32 %v2545, 1.0
  %v2550 = vadd.f32 %v2546, 1.0
  %v2551 = vadd.f32 %v2547, 1.0
  %v2552 = vadd.f32 %v2548, 1.0
  %v2553 = vmul.f32 %v2449, %v2549
  %v2554 = vmul.f32 %v2450, %v2550
  %v2555 = vmul.f32 %v2451, %v2551
  %v2556 = vmul.f32 %v2452, %v2552
  %2557 = vmatprep.subr.mxu0 0.0
  %2558 = vmatpush1.msra.mxu0 %v1484
  %2559 = vmatprep.subr.mxu0 0.0
  %2560 = vmatpush1.msra.mxu0 %v1485
  %2561 = vmatprep.subr.mxu0 0.0
  %2562 = vmatpush1.msra.mxu0 %v1486
  %2563 = vmatprep.subr.mxu0 0.0
  %2564 = vmatpush1.msra.mxu0 %v1487
  %2565 = vmatprep.subr.mxu0 0.0
  %2566 = vmatpush1.msra.mxu0 %v1488
  %2567 = vmatprep.subr.mxu0 0.0
  %2568 = vmatpush1.msra.mxu0 %v1489
  %2569 = vmatprep.subr.mxu0 0.0
  %2570 = vmatpush1.msra.mxu0 %v1490
  %2571 = vmatprep.subr.mxu0 0.0
  %2572 = vmatpush1.msra.mxu0 %v1491
  %2573 = vmatprep.subr.mxu0 0.0
  %2574 = vmatpush1.msra.mxu0 %v1492
  %2575 = vmatprep.subr.mxu0 0.0
  %2576 = vmatpush1.msra.mxu0 %v1493
  %2577 = vmatprep.subr.mxu0 0.0
  %2578 = vmatpush1.msra.mxu0 %v1494
  %2579 = vmatprep.subr.mxu0 0.0
  %2580 = vmatpush1.msra.mxu0 %v1495
  %2581 = vmatprep.subr.mxu0 0.0
  %2582 = vmatpush1.msra.mxu0 %v1496
  %2583 = vmatprep.subr.mxu0 0.0
  %2584 = vmatpush1.msra.mxu0 %v1497
  %2585 = vmatprep.subr.mxu0 0.0
  %2586 = vmatpush1.msra.mxu0 %v1498
  %2587 = vmatprep.subr.mxu0 0.0
  %2588 = vmatpush1.msra.mxu0 %v1499
  %2589 = vmatprep.subr.mxu0 0.0
  %2590 = vmatpush1.msra.mxu0 0.0
  %2591 = vmatprep.subr.mxu0 0.0
  %2592 = vmatpush1.msra.mxu0 0.0
  %2593 = vmatprep.subr.mxu0 0.0
  %2594 = vmatpush1.msra.mxu0 0.0
  %2595 = vmatprep.subr.mxu0 0.0
  %2596 = vmatpush1.msra.mxu0 0.0
  %2597 = vmatprep.subr.mxu0 0.0
  %2598 = vmatpush1.msra.mxu0 0.0
  %2599 = vmatprep.subr.mxu0 0.0
  %2600 = vmatpush1.msra.mxu0 0.0
  %2601 = vmatprep.subr.mxu0 0.0
  %2602 = vmatpush1.msra.mxu0 0.0
  %2603 = vmatprep.subr.mxu0 0.0
  %2604 = vmatpush1.msra.mxu0 0.0
  %2605 = vmatprep.subr.mxu0 0.0
  %2606 = vmatpush1.msra.mxu0 0.0
  %2607 = vmatprep.subr.mxu0 0.0
  %2608 = vmatpush1.msra.mxu0 0.0
  %2609 = vmatprep.subr.mxu0 0.0
  %2610 = vmatpush1.msra.mxu0 0.0
  %2611 = vmatprep.subr.mxu0 0.0
  %2612 = vmatpush1.msra.mxu0 0.0
  %2613 = vmatprep.subr.mxu0 0.0
  %2614 = vmatpush1.msra.mxu0 0.0
  %2615 = vmatprep.subr.mxu0 0.0
  %2616 = vmatpush1.msra.mxu0 0.0
  %2617 = vmatprep.subr.mxu0 0.0
  %2618 = vmatpush1.msra.mxu0 0.0
  %2619 = vmatprep.subr.mxu0 0.0
  %2620 = vmatpush1.msra.mxu0 0.0
  %2621 = vmatprep.mubr.f32.mxu0 0.0
  %2622 = vmatmul.mubr.f32.gmra.mrb[0].mxu0 %v2553
  %v2623 = vpop.f32.mrb[0].mxu0
  %v2624 = vadd.f32 0.0, %v2623
  %v2625 = vpop.f32.mrb[0].mxu0
  %2626 = vmatprep.mubr.f32.mxu0 0.0
  %2627 = vmatmul.mubr.f32.gmra.mrb[0].mxu0 %v2554
  %v2628 = vpop.f32.mrb[0].mxu0
  %v2629 = vadd.f32 0.0, %v2628
  %v2630 = vpop.f32.mrb[0].mxu0
  %2631 = vmatprep.mubr.f32.mxu0 0.0
  %2632 = vmatmul.mubr.f32.gmra.mrb[0].mxu0 %v2555
  %v2633 = vpop.f32.mrb[0].mxu0
  %v2634 = vadd.f32 0.0, %v2633
  %v2635 = vpop.f32.mrb[0].mxu0
  %2636 = vmatprep.mubr.f32.mxu0 0.0
  %2637 = vmatmul.mubr.f32.gmra.mrb[0].mxu0 %v2556
  %v2638 = vpop.f32.mrb[0].mxu0
  %v2639 = vadd.f32 0.0, %v2638
  %v2640 = vpop.f32.mrb[0].mxu0
  %2641 = vdwg.mxu0
  %v2642 = vadd.f32 %v2276, %v2624
  %v2643 = vadd.f32 %v2277, %v2629
  %v2644 = vadd.f32 %v2278, %v2634
  %v2645 = vadd.f32 %v2279, %v2639
  %v2646 = vlaneseq
  %v2647 = vshrl.u32 %v2646, 7
  %v2648 = vsub.s32 5, %v2647
  %v2649 = vrot.slane %v1501, %v2648
  %v2650 = vadd.f32 %v2642, %v2649
  %v2651 = vadd.f32 %v2643, %v2649
  %v2652 = vadd.f32 %v2644, %v2649
  %v2653 = vadd.f32 %v2645, %v2649
  %v2654 = vld [vmem:[%s3] sm:$0xff]
  %v2655 = vld [vmem:[%s3 + $0x8] sm:$0xff]
  %v2656 = vld [vmem:[%s3 + $0x10] sm:$0xff]
  %v2657 = vld [vmem:[%s3 + $0x18] sm:$0xff]
  %v2658 = vld [vmem:[%s3 + $0x20] sm:$0x3]
  %v2659 = vsel %vm209, %v2650, 0.0
  %2660 = vadd.xlane.f32.xlu0 %v2659
  %v2661 = vpop.xlane.xlu0 %2660
  %v2662 = vsel %vm209, %v2651, 0.0
  %2663 = vadd.xlane.f32.xlu0 %v2662
  %v2664 = vpop.xlane.xlu0 %2663
  %v2665 = vsel %vm209, %v2652, 0.0
  %2666 = vadd.xlane.f32.xlu0 %v2665
  %v2667 = vpop.xlane.xlu0 %2666
  %v2668 = vsel %vm209, %v2653, 0.0
  %2669 = vadd.xlane.f32.xlu0 %v2668
  %v2670 = vpop.xlane.xlu0 %2669
  %v2671 = vmul.f32 %v2661, %v222
  %v2672 = vmul.f32 %v2664, %v222
  %v2673 = vmul.f32 %v2667, %v222
  %v2674 = vmul.f32 %v2670, %v222
  %v2675 = vsub.f32 %v2650, %v2671
  %v2676 = vsub.f32 %v2651, %v2672
  %v2677 = vsub.f32 %v2652, %v2673
  %v2678 = vsub.f32 %v2653, %v2674
  %v2679 = vmul.f32 %v2675, %v2675
  %v2680 = vmul.f32 %v2676, %v2676
  %v2681 = vmul.f32 %v2677, %v2677
  %v2682 = vmul.f32 %v2678, %v2678
  %v2683 = vsel %vm209, %v2679, 0.0
  %2684 = vadd.xlane.f32.xlu0 %v2683
  %v2685 = vpop.xlane.xlu0 %2684
  %v2686 = vsel %vm209, %v2680, 0.0
  %2687 = vadd.xlane.f32.xlu0 %v2686
  %v2688 = vpop.xlane.xlu0 %2687
  %v2689 = vsel %vm209, %v2681, 0.0
  %2690 = vadd.xlane.f32.xlu0 %v2689
  %v2691 = vpop.xlane.xlu0 %2690
  %v2692 = vsel %vm209, %v2682, 0.0
  %2693 = vadd.xlane.f32.xlu0 %v2692
  %v2694 = vpop.xlane.xlu0 %2693
  %v2695 = vmul.f32 %v2685, %v222
  %v2696 = vmul.f32 %v2688, %v222
  %v2697 = vmul.f32 %v2691, %v222
  %v2698 = vmul.f32 %v2694, %v222
  %v2699 = vadd.f32 %v2695, 1e-05
  %v2700 = vadd.f32 %v2696, 1e-05
  %v2701 = vadd.f32 %v2697, 1e-05
  %v2702 = vadd.f32 %v2698, 1e-05
  %v2703 = vrsqrt.pop %v2699
  %v2704 = vrsqrt.pop %v2700
  %v2705 = vrsqrt.pop %v2701
  %v2706 = vrsqrt.pop %v2702
  %v2707 = vmul.f32 %v2675, %v2703
  %v2708 = vmul.f32 %v2676, %v2704
  %v2709 = vmul.f32 %v2677, %v2705
  %v2710 = vmul.f32 %v2678, %v2706
  %v2711 = vlaneseq
  %v2712 = vshrl.u32 %v2711, 7
  %v2713 = vsub.s32 0, %v2712
  %v2714 = vrot.slane %v2658, %v2713
  %v2715 = vmul.f32 %v2707, %v2714
  %v2716 = vmul.f32 %v2708, %v2714
  %v2717 = vmul.f32 %v2709, %v2714
  %v2718 = vmul.f32 %v2710, %v2714
  %v2719 = vlaneseq
  %v2720 = vshrl.u32 %v2719, 7
  %v2721 = vsub.s32 1, %v2720
  %v2722 = vrot.slane %v2658, %v2721
  %v2723 = vadd.f32 %v2715, %v2722
  %v2724 = vadd.f32 %v2716, %v2722
  %v2725 = vadd.f32 %v2717, %v2722
  %v2726 = vadd.f32 %v2718, %v2722
  %v2728 = vsel %vm209, %v2723, 0
  %v2731 = vsel %vm209, %v2724, 0
  %v2734 = vsel %vm209, %v2725, 0
  %v2737 = vsel %vm209, %v2726, 0
  %2739 = vmatprep.subr.mxu0 0.0
  %2740 = vmatpush1.msra.mxu0 %v2654
  %2741 = vmatprep.subr.mxu0 0.0
  %2742 = vmatpush1.msra.mxu0 %v2655
  %2743 = vmatprep.subr.mxu0 0.0
  %2744 = vmatpush1.msra.mxu0 %v2656
  %2745 = vmatprep.subr.mxu0 0.0
  %2746 = vmatpush1.msra.mxu0 %v2657
  %2747 = vmatprep.subr.mxu0 0.0
  %2748 = vmatpush1.msra.mxu0 0.0
  %2749 = vmatprep.subr.mxu0 0.0
  %2750 = vmatpush1.msra.mxu0 0.0
  %2751 = vmatprep.subr.mxu0 0.0
  %2752 = vmatpush1.msra.mxu0 0.0
  %2753 = vmatprep.subr.mxu0 0.0
  %2754 = vmatpush1.msra.mxu0 0.0
  %2755 = vmatprep.subr.mxu0 0.0
  %2756 = vmatpush1.msra.mxu0 0.0
  %2757 = vmatprep.subr.mxu0 0.0
  %2758 = vmatpush1.msra.mxu0 0.0
  %2759 = vmatprep.subr.mxu0 0.0
  %2760 = vmatpush1.msra.mxu0 0.0
  %2761 = vmatprep.subr.mxu0 0.0
  %2762 = vmatpush1.msra.mxu0 0.0
  %2763 = vmatprep.subr.mxu0 0.0
  %2764 = vmatpush1.msra.mxu0 0.0
  %2765 = vmatprep.subr.mxu0 0.0
  %2766 = vmatpush1.msra.mxu0 0.0
  %2767 = vmatprep.subr.mxu0 0.0
  %2768 = vmatpush1.msra.mxu0 0.0
  %2769 = vmatprep.subr.mxu0 0.0
  %2770 = vmatpush1.msra.mxu0 0.0
  %2771 = vmatprep.subr.mxu0 0.0
  %2772 = vmatpush1.msra.mxu0 0.0
  %2773 = vmatprep.subr.mxu0 0.0
  %2774 = vmatpush1.msra.mxu0 0.0
  %2775 = vmatprep.subr.mxu0 0.0
  %2776 = vmatpush1.msra.mxu0 0.0
  %2777 = vmatprep.subr.mxu0 0.0
  %2778 = vmatpush1.msra.mxu0 0.0
  %2779 = vmatprep.subr.mxu0 0.0
  %2780 = vmatpush1.msra.mxu0 0.0
  %2781 = vmatprep.subr.mxu0 0.0
  %2782 = vmatpush1.msra.mxu0 0.0
  %2783 = vmatprep.subr.mxu0 0.0
  %2784 = vmatpush1.msra.mxu0 0.0
  %2785 = vmatprep.subr.mxu0 0.0
  %2786 = vmatpush1.msra.mxu0 0.0
  %2787 = vmatprep.subr.mxu0 0.0
  %2788 = vmatpush1.msra.mxu0 0.0
  %2789 = vmatprep.subr.mxu0 0.0
  %2790 = vmatpush1.msra.mxu0 0.0
  %2791 = vmatprep.subr.mxu0 0.0
  %2792 = vmatpush1.msra.mxu0 0.0
  %2793 = vmatprep.subr.mxu0 0.0
  %2794 = vmatpush1.msra.mxu0 0.0
  %2795 = vmatprep.subr.mxu0 0.0
  %2796 = vmatpush1.msra.mxu0 0.0
  %2797 = vmatprep.subr.mxu0 0.0
  %2798 = vmatpush1.msra.mxu0 0.0
  %2799 = vmatprep.subr.mxu0 0.0
  %2800 = vmatpush1.msra.mxu0 0.0
  %2801 = vmatprep.subr.mxu0 0.0
  %2802 = vmatpush1.msra.mxu0 0.0
  %2803 = vmatprep.mubr.f32.mxu0 0.0
  %2804 = vmatmul.mubr.f32.gmra.mrb[0].mxu0 %v2728
  %v2805 = vpop.f32.mrb[0].mxu0
  %v2806 = vadd.f32 0.0, %v2805
  %v2807 = vpop.f32.mrb[0].mxu0
  %2808 = vmatprep.mubr.f32.mxu0 0.0
  %2809 = vmatmul.mubr.f32.gmra.mrb[0].mxu0 %v2731
  %v2810 = vpop.f32.mrb[0].mxu0
  %v2811 = vadd.f32 0.0, %v2810
  %v2812 = vpop.f32.mrb[0].mxu0
  %2813 = vmatprep.mubr.f32.mxu0 0.0
  %2814 = vmatmul.mubr.f32.gmra.mrb[0].mxu0 %v2734
  %v2815 = vpop.f32.mrb[0].mxu0
  %v2816 = vadd.f32 0.0, %v2815
  %v2817 = vpop.f32.mrb[0].mxu0
  %2818 = vmatprep.mubr.f32.mxu0 0.0
  %2819 = vmatmul.mubr.f32.gmra.mrb[0].mxu0 %v2737
  %v2820 = vpop.f32.mrb[0].mxu0
  %v2821 = vadd.f32 0.0, %v2820
  %v2822 = vpop.f32.mrb[0].mxu0
  %2823 = vdwg.mxu0
  %2824 = vst.msk [vmem:[%s10] sm:$0xff] %vm209, %v2806
  %2825 = vst.msk [vmem:[%s10 + $0x8] sm:$0xff] %vm209, %v2811
  %2826 = vst.msk [vmem:[%s10 + $0x10] sm:$0xff] %vm209, %v2816
  %2827 = vst.msk [vmem:[%s10 + $0x18] sm:$0xff] %vm209, %v2821
  // Predicated region
  $region42: #{gpt_forward.1} parent=0 // pred_check
    _
  $region43: #{gpt_forward.1} parent=0 // pred_check_branch
    %2829 = sbr.rel (0) target = $region45
  $region44: #{gpt_forward.1} parent=0 // pred_region
    _
  $region45: #{gpt_forward.1} parent=0 // pred_fallthru
    _
  // Predicated region
  $region46: #{gpt_forward.1} parent=0 // pred_check
    _
  $region47: #{gpt_forward.1} parent=0 // pred_check_branch
    %2831 = sbr.rel (0) target = $region49
  $region48: #{gpt_forward.1} parent=0 // pred_region
    _
  $region49: #{gpt_forward.1} parent=0 // pred_fallthru
    _
  // Predicated region
  $region50: #{gpt_forward.1} parent=0 // pred_check
    _
  $region51: #{gpt_forward.1} parent=0 // pred_check_branch
    %2833 = sbr.rel (0) target = $region53
  $region52: #{gpt_forward.1} parent=0 // pred_region
    _
  $region53: #{gpt_forward.1} parent=0 // pred_fallthru
    _
  // Predicated region
  $region54: #{gpt_forward.1} parent=0 // pred_check
    _
  $region55: #{gpt_forward.1} parent=0 // pred_check_branch
    %2835 = sbr.rel (0) target = $region57
  $region56: #{gpt_forward.1} parent=0 // pred_region
    _
  $region57: #{gpt_forward.1} parent=0 // pred_fallthru
    _

</llo_original>
